<compile_context>
chip_gen: v7x
topology: tpu7x:2x2x1
jax: 0.10.0
libtpu: 0.0.40
codegen_flags: <defaults>
</compile_context>

<pallas_src>
import functools

import jax
import jax.numpy as jnp
from jax import lax
from jax.experimental import pallas as pl
from jax.experimental.pallas import tpu as pltpu


def _round_up(x, m):
    return (x + m - 1) // m * m


# ----------------------------- Pallas kernels ------------------------------

def _mm_bias_act_kernel(a_ref, b_ref, c_ref, o_ref, *, relu):
    """(tm, K)@(K, tn) on the MXU (bf16 in, f32 accumulate) + bias + ReLU."""
    acc = jnp.dot(a_ref[...], b_ref[...], preferred_element_type=jnp.float32)
    y = acc + c_ref[...]
    if relu:
        y = jnp.maximum(y, 0.0)
    o_ref[...] = y.astype(o_ref.dtype)


@functools.partial(jax.jit, static_argnames=("relu", "out_dtype"))
def fused_matmul(A, B, bias, relu=True, out_dtype=jnp.bfloat16):
    """out = maybe_relu(A @ B + bias).

    A: (M, K) any float dtype (cast to bf16), B: (K, Npad) bf16 with N padded
    to a lane-friendly width at parameter-prep time, bias: (1, Npad) f32.
    K is kept as a single block (always fits VMEM for this network), M uses a
    cdiv grid with a partial (masked) last block, so no runtime padding of the
    large activation matrix is needed.
    """
    M, K = A.shape
    _, Npad = B.shape

    # Pad only the degenerate tiny-M case (final linear, M = batch) to 8 rows.
    if M < 8:
        A = jnp.pad(A, ((0, 8 - M), (0, 0)))
        Mp = 8
    else:
        Mp = M

    # M tile: bigger tiles when K is small (amortize per-step overhead), never
    # larger than the array itself (last block may still be partial).
    if K <= 512:
        tm_rule = 2048
    elif K <= 1024:
        tm_rule = 1024
    else:
        tm_rule = 512
    tm = min(tm_rule, (Mp // 8) * 8)

    # N tile: full width when small (block == full dim is always legal),
    # otherwise 256 (v6e/v7x MXU width) when it divides, else 128.
    if Npad <= 256:
        tn = Npad
    else:
        tn = 256 if Npad % 256 == 0 else 128

    grid = (pl.cdiv(Mp, tm), Npad // tn)

    out = pl.pallas_call(
        functools.partial(_mm_bias_act_kernel, relu=relu),
        out_shape=jax.ShapeDtypeStruct((Mp, Npad), out_dtype),
        grid_spec=pltpu.PrefetchScalarGridSpec(
            num_scalar_prefetch=0,
            grid=grid,
            in_specs=[
                pl.BlockSpec((tm, K), lambda i, j: (i, 0)),
                pl.BlockSpec((K, tn), lambda i, j: (0, j)),
                pl.BlockSpec((1, tn), lambda i, j: (0, j)),
            ],
            out_specs=pl.BlockSpec((tm, tn), lambda i, j: (i, j)),
        ),
        compiler_params=pltpu.CompilerParams(
            dimension_semantics=("parallel", "parallel"),
            vmem_limit_bytes=32 * 1024 * 1024),
    )(A.astype(jnp.bfloat16), B.astype(jnp.bfloat16), bias.astype(jnp.float32))
    return out[:M] if Mp != M else out


def _softmax_kernel(x_ref, o_ref):
    x = x_ref[...]
    m = jnp.max(x, axis=-1, keepdims=True)
    e = jnp.exp(x - m)
    o_ref[...] = e / jnp.sum(e, axis=-1, keepdims=True)


@jax.jit
def softmax_rows(x):
    return pl.pallas_call(
        _softmax_kernel,
        out_shape=jax.ShapeDtypeStruct(x.shape, x.dtype),
    )(x)


# --------------------------- parameter preparation --------------------------
# One-time fold of BN (eps=1e-3, gamma=1) into the conv weights, reshape to
# (K, Cout), pad N to a lane-friendly width, cast to bf16.  Parallel 1x1
# branch heads are concatenated along N so each Inception block reads its
# input activation once.

def _fold_conv(p):
    cout, cin, kh, kw = p["w"].shape
    scale = 1.0 / jnp.sqrt(p["var"] + 1e-3)
    w = jnp.transpose(p["w"], (2, 3, 1, 0)).reshape(kh * kw * cin, cout)
    wm = w * scale[None, :]                       # fold BN scale into weights
    b = (p["beta"] - p["mean"] * scale)[None, :]  # remaining shift
    return wm, b, kh, kw, int(cout)


def _pad_n(wm, b):
    _, n = wm.shape
    npad = n if n <= 256 else _round_up(n, 128)
    if npad != n:
        wm = jnp.pad(wm, ((0, 0), (0, npad - n)))
        b = jnp.pad(b, ((0, 0), (0, npad - n)))
    return wm.astype(jnp.bfloat16), b.astype(jnp.float32)


def prep_single(p):
    wm, b, kh, kw, cout = _fold_conv(p)
    wm, b = _pad_n(wm, b)
    return {"wm": wm, "b": b, "kh": kh, "kw": kw, "cout": cout}


def prep_fused_1x1(ps):
    parts = [_fold_conv(p) for p in ps]
    wm = jnp.concatenate([t[0] for t in parts], axis=1)
    b = jnp.concatenate([t[1] for t in parts], axis=1)
    wm, b = _pad_n(wm, b)
    return {"wm": wm, "b": b, "couts": tuple(t[4] for t in parts)}


def prepare_params(raw):
    P = {}
    for name in ("conv", "conv_1", "conv_2", "conv_3", "conv_4"):
        P[name] = prep_single(raw[name])

    def prep_a(p):
        return {
            "head": prep_fused_1x1([p["conv"], p["tower"]["conv"],
                                    p["tower_1"]["conv"]]),
            "t_conv_1": prep_single(p["tower"]["conv_1"]),
            "t1_conv_1": prep_single(p["tower_1"]["conv_1"]),
            "t1_conv_2": prep_single(p["tower_1"]["conv_2"]),
            "t2_conv": prep_single(p["tower_2"]["conv"]),
        }

    def prep_b(p):
        return {
            "conv": prep_single(p["conv"]),
            "t_conv": prep_single(p["tower"]["conv"]),
            "t_conv_1": prep_single(p["tower"]["conv_1"]),
            "t_conv_2": prep_single(p["tower"]["conv_2"]),
        }

    def prep_c(p):
        return {
            "head": prep_fused_1x1([p["conv"], p["tower"]["conv"],
                                    p["tower_1"]["conv"]]),
            "t_conv_1": prep_single(p["tower"]["conv_1"]),
            "t_conv_2": prep_single(p["tower"]["conv_2"]),
            "t1_conv_1": prep_single(p["tower_1"]["conv_1"]),
            "t1_conv_2": prep_single(p["tower_1"]["conv_2"]),
            "t1_conv_3": prep_single(p["tower_1"]["conv_3"]),
            "t1_conv_4": prep_single(p["tower_1"]["conv_4"]),
            "t2_conv": prep_single(p["tower_2"]["conv"]),
        }

    def prep_d(p):
        return {
            "head": prep_fused_1x1([p["tower"]["conv"], p["tower_1"]["conv"]]),
            "t_conv_1": prep_single(p["tower"]["conv_1"]),
            "t1_conv_1": prep_single(p["tower_1"]["conv_1"]),
            "t1_conv_2": prep_single(p["tower_1"]["conv_2"]),
            "t1_conv_3": prep_single(p["tower_1"]["conv_3"]),
        }

    def prep_e(p):
        return {
            "head": prep_fused_1x1([p["conv"], p["tower_conv"],
                                    p["tower_1_conv"]]),
            "t_mixed_conv": prep_single(p["tower_mixed_conv"]),
            "t_mixed_conv_1": prep_single(p["tower_mixed_conv_1"]),
            "t1_conv_1": prep_single(p["tower_1_conv_1"]),
            "t1_mixed_conv": prep_single(p["tower_1_mixed_conv"]),
            "t1_mixed_conv_1": prep_single(p["tower_1_mixed_conv_1"]),
            "t2_conv": prep_single(p["tower_2_conv"]),
        }

    P["mixed"] = prep_a(raw["mixed"])
    P["mixed_1"] = prep_a(raw["mixed_1"])
    P["mixed_2"] = prep_a(raw["mixed_2"])
    P["mixed_3"] = prep_b(raw["mixed_3"])
    for i in (4, 5, 6, 7):
        P[f"mixed_{i}"] = prep_c(raw[f"mixed_{i}"])
    P["mixed_8"] = prep_d(raw["mixed_8"])
    P["mixed_9"] = prep_e(raw["mixed_9"])
    P["mixed_10"] = prep_e(raw["mixed_10"])

    w = jnp.transpose(raw["output"]["w"])          # (2048, 1008)
    n = w.shape[1]
    npad = _round_up(n, 128)
    P["output"] = {
        "wm": jnp.pad(w, ((0, 0), (0, npad - n))).astype(jnp.bfloat16),
        "b": jnp.pad(raw["output"]["b"][None, :],
                     ((0, 0), (0, npad - n))).astype(jnp.float32),
        "n": n,
    }
    return P


# ------------------------- Conv2dLayer (im2col + Pallas) -------------------

def _im2col(x, kh, kw, stride, ph, pw):
    n, H, W, C = x.shape
    xp = jnp.pad(x, ((0, 0), (ph, ph), (pw, pw), (0, 0)))
    Ho = (H + 2 * ph - kh) // stride + 1
    Wo = (W + 2 * pw - kw) // stride + 1
    cols = []
    for dy in range(kh):
        for dx in range(kw):
            cols.append(xp[:, dy:dy + stride * (Ho - 1) + 1:stride,
                           dx:dx + stride * (Wo - 1) + 1:stride, :])
    patches = cols[0] if len(cols) == 1 else jnp.concatenate(cols, axis=-1)
    return patches.reshape(n * Ho * Wo, kh * kw * C), Ho, Wo


def conv_bn_relu(x, cp, stride=1, padding=0):
    """conv2d + folded batch_norm + ReLU on NHWC bf16 activations."""
    if isinstance(padding, (tuple, list)):
        ph, pw = padding
    else:
        ph = pw = padding
    n, H, W, C = x.shape
    kh, kw, cout = cp["kh"], cp["kw"], cp["cout"]
    if kh == 1 and kw == 1 and stride == 1 and ph == 0 and pw == 0:
        A, Ho, Wo = x.reshape(n * H * W, C), H, W      # zero-copy
    else:
        A, Ho, Wo = _im2col(x, kh, kw, stride, ph, pw)
    out = fused_matmul(A, cp["wm"], cp["b"], relu=True)
    if cp["wm"].shape[1] != cout:
        out = out[:, :cout]
    return out.reshape(n, Ho, Wo, cout)


def conv1x1_fused(x, fp):
    """Several 1x1 conv+BN+ReLU branches sharing the same input as ONE matmul."""
    n, H, W, C = x.shape
    out = fused_matmul(x.reshape(n * H * W, C), fp["wm"], fp["b"], relu=True)
    outs, off = [], 0
    for c in fp["couts"]:
        outs.append(out[:, off:off + c].reshape(n, H, W, c))
        off += c
    return outs


# ----------------------------- Pooling (plain JAX) -------------------------

def max_pool_3x3_s2(x):
    return lax.reduce_window(x, jnp.array(-jnp.inf, x.dtype), lax.max,
                             (1, 3, 3, 1), (1, 2, 2, 1), "VALID")


def max_pool_3x3_s1_p1(x):
    return lax.reduce_window(x, jnp.array(-jnp.inf, x.dtype), lax.max,
                             (1, 3, 3, 1), (1, 1, 1, 1),
                             ((0, 0), (1, 1), (1, 1), (0, 0)))


_INV_CNT_CACHE = {}


def _avg_pool_inv_count(H, W):
    key = (H, W)
    if key not in _INV_CNT_CACHE:
        ones = jnp.ones((1, H, W, 1), jnp.float32)
        cnt = lax.reduce_window(ones, jnp.float32(0.0), lax.add,
                                (1, 3, 3, 1), (1, 1, 1, 1),
                                ((0, 0), (1, 1), (1, 1), (0, 0)))
        _INV_CNT_CACHE[key] = 1.0 / cnt
    return _INV_CNT_CACHE[key]


def avg_pool_3x3_s1_p1(x):
    """AvgPool2d(3, stride=1, padding=1, count_include_pad=False)."""
    _, H, W, _ = x.shape
    s = lax.reduce_window(x.astype(jnp.float32), jnp.float32(0.0), lax.add,
                          (1, 3, 3, 1), (1, 1, 1, 1),
                          ((0, 0), (1, 1), (1, 1), (0, 0)))
    return (s * _avg_pool_inv_count(H, W)).astype(x.dtype)


# ------------------- grid_sample bilinear resize (plain JAX) ---------------

def grid_sample_resize(x, H_out, W_out):
    """affine_grid(identity + 1/in - 1/out shift) + grid_sample(bilinear,
    border padding, align_corners=False).  x is NHWC f32."""
    _, H, W, _ = x.shape
    tx = 1.0 / W - 1.0 / W_out
    ty = 1.0 / H - 1.0 / H_out
    xs = (2.0 * jnp.arange(W_out, dtype=jnp.float32) + 1.0) / W_out - 1.0 + tx
    ys = (2.0 * jnp.arange(H_out, dtype=jnp.float32) + 1.0) / H_out - 1.0 + ty
    ix = jnp.clip(((xs + 1.0) * W - 1.0) / 2.0, 0.0, W - 1)
    iy = jnp.clip(((ys + 1.0) * H - 1.0) / 2.0, 0.0, H - 1)
    ix0 = jnp.floor(ix).astype(jnp.int32)
    iy0 = jnp.floor(iy).astype(jnp.int32)
    ix1 = jnp.minimum(ix0 + 1, W - 1)
    iy1 = jnp.minimum(iy0 + 1, H - 1)
    wx = (ix - ix0.astype(jnp.float32))[None, None, :, None]
    wy = (iy - iy0.astype(jnp.float32))[None, :, None, None]
    xr = x[:, iy0, :, :] * (1.0 - wy) + x[:, iy1, :, :] * wy
    out = xr[:, :, ix0, :] * (1.0 - wx) + xr[:, :, ix1, :] * wx
    return out


# ----------------------------- parameter init ------------------------------

def init_conv(key, cin, cout, kh, kw):
    k1, k2, k3, k4 = jax.random.split(key, 4)
    fan_in = cin * kh * kw
    return dict(
        w=jax.random.normal(k1, (cout, cin, kh, kw), jnp.float32)
        * jnp.sqrt(2.0 / fan_in),
        beta=jax.random.normal(k2, (cout,), jnp.float32) * 0.1,
        mean=jax.random.normal(k3, (cout,), jnp.float32) * 0.1,
        var=jax.random.uniform(k4, (cout,), jnp.float32, 0.8, 1.2),
    )


def init_inception_a(key, cin, tmp):
    ks = jax.random.split(key, 7)
    return {
        "conv": init_conv(ks[0], cin, 64, 1, 1),
        "tower": {"conv": init_conv(ks[1], cin, 48, 1, 1),
                  "conv_1": init_conv(ks[2], 48, 64, 5, 5)},
        "tower_1": {"conv": init_conv(ks[3], cin, 64, 1, 1),
                    "conv_1": init_conv(ks[4], 64, 96, 3, 3),
                    "conv_2": init_conv(ks[5], 96, 96, 3, 3)},
        "tower_2": {"conv": init_conv(ks[6], cin, tmp, 1, 1)},
    }


def init_inception_b(key, cin):
    ks = jax.random.split(key, 4)
    return {
        "conv": init_conv(ks[0], cin, 384, 3, 3),
        "tower": {"conv": init_conv(ks[1], cin, 64, 1, 1),
                  "conv_1": init_conv(ks[2], 64, 96, 3, 3),
                  "conv_2": init_conv(ks[3], 96, 96, 3, 3)},
    }


def init_inception_c(key, cin, tmp):
    ks = jax.random.split(key, 10)
    return {
        "conv": init_conv(ks[0], cin, 192, 1, 1),
        "tower": {"conv": init_conv(ks[1], cin, tmp, 1, 1),
                  "conv_1": init_conv(ks[2], tmp, tmp, 1, 7),
                  "conv_2": init_conv(ks[3], tmp, 192, 7, 1)},
        "tower_1": {"conv": init_conv(ks[4], cin, tmp, 1, 1),
                    "conv_1": init_conv(ks[5], tmp, tmp, 7, 1),
                    "conv_2": init_conv(ks[6], tmp, tmp, 1, 7),
                    "conv_3": init_conv(ks[7], tmp, tmp, 7, 1),
                    "conv_4": init_conv(ks[8], tmp, 192, 1, 7)},
        "tower_2": {"conv": init_conv(ks[9], cin, 192, 1, 1)},
    }


def init_inception_d(key, cin):
    ks = jax.random.split(key, 6)
    return {
        "tower": {"conv": init_conv(ks[0], cin, 192, 1, 1),
                  "conv_1": init_conv(ks[1], 192, 320, 3, 3)},
        "tower_1": {"conv": init_conv(ks[2], cin, 192, 1, 1),
                    "conv_1": init_conv(ks[3], 192, 192, 1, 7),
                    "conv_2": init_conv(ks[4], 192, 192, 7, 1),
                    "conv_3": init_conv(ks[5], 192, 192, 3, 3)},
    }


def init_inception_e(key, cin):
    ks = jax.random.split(key, 9)
    return {
        "conv": init_conv(ks[0], cin, 320, 1, 1),
        "tower_conv": init_conv(ks[1], cin, 384, 1, 1),
        "tower_mixed_conv": init_conv(ks[2], 384, 384, 1, 3),
        "tower_mixed_conv_1": init_conv(ks[3], 384, 384, 3, 1),
        "tower_1_conv": init_conv(ks[4], cin, 448, 1, 1),
        "tower_1_conv_1": init_conv(ks[5], 448, 384, 3, 3),
        "tower_1_mixed_conv": init_conv(ks[6], 384, 384, 1, 3),
        "tower_1_mixed_conv_1": init_conv(ks[7], 384, 384, 3, 1),
        "tower_2_conv": init_conv(ks[8], cin, 192, 1, 1),
    }


def init_inception_v3(key):
    ks = jax.random.split(key, 20)
    ko1, ko2 = jax.random.split(ks[19])
    return {
        "conv": init_conv(ks[0], 3, 32, 3, 3),
        "conv_1": init_conv(ks[1], 32, 32, 3, 3),
        "conv_2": init_conv(ks[2], 32, 64, 3, 3),
        "conv_3": init_conv(ks[3], 64, 80, 1, 1),
        "conv_4": init_conv(ks[4], 80, 192, 3, 3),
        "mixed": init_inception_a(ks[5], 192, 32),
        "mixed_1": init_inception_a(ks[6], 256, 64),
        "mixed_2": init_inception_a(ks[7], 288, 64),
        "mixed_3": init_inception_b(ks[8], 288),
        "mixed_4": init_inception_c(ks[9], 768, 128),
        "mixed_5": init_inception_c(ks[10], 768, 160),
        "mixed_6": init_inception_c(ks[11], 768, 160),
        "mixed_7": init_inception_c(ks[12], 768, 192),
        "mixed_8": init_inception_d(ks[13], 768),
        "mixed_9": init_inception_e(ks[14], 1280),
        "mixed_10": init_inception_e(ks[15], 2048),
        "output": {
            "w": jax.random.normal(ko1, (1008, 2048), jnp.float32)
            * jnp.sqrt(1.0 / 2048.0),
            "b": jax.random.normal(ko2, (1008,), jnp.float32) * 0.01,
        },
    }


# ----------------------------- inception blocks ----------------------------

def inception_a(x, p):
    b0, t, t1 = conv1x1_fused(x, p["head"])
    b1 = conv_bn_relu(t, p["t_conv_1"], padding=2)
    b2 = conv_bn_relu(t1, p["t1_conv_1"], padding=1)
    b2 = conv_bn_relu(b2, p["t1_conv_2"], padding=1)
    b3 = conv_bn_relu(avg_pool_3x3_s1_p1(x), p["t2_conv"])
    return jnp.concatenate([b0, b1, b2, b3], axis=-1)


def inception_b(x, p):
    b0 = conv_bn_relu(x, p["conv"], stride=2)
    b1 = conv_bn_relu(x, p["t_conv"])
    b1 = conv_bn_relu(b1, p["t_conv_1"], padding=1)
    b1 = conv_bn_relu(b1, p["t_conv_2"], stride=2)
    b2 = max_pool_3x3_s2(x)
    return jnp.concatenate([b0, b1, b2], axis=-1)


def inception_c(x, p):
    b0, t, t1 = conv1x1_fused(x, p["head"])
    b1 = conv_bn_relu(t, p["t_conv_1"], padding=(0, 3))
    b1 = conv_bn_relu(b1, p["t_conv_2"], padding=(3, 0))
    b2 = conv_bn_relu(t1, p["t1_conv_1"], padding=(3, 0))
    b2 = conv_bn_relu(b2, p["t1_conv_2"], padding=(0, 3))
    b2 = conv_bn_relu(b2, p["t1_conv_3"], padding=(3, 0))
    b2 = conv_bn_relu(b2, p["t1_conv_4"], padding=(0, 3))
    b3 = conv_bn_relu(avg_pool_3x3_s1_p1(x), p["t2_conv"])
    return jnp.concatenate([b0, b1, b2, b3], axis=-1)


def inception_d(x, p):
    t, t1 = conv1x1_fused(x, p["head"])
    b0 = conv_bn_relu(t, p["t_conv_1"], stride=2)
    b1 = conv_bn_relu(t1, p["t1_conv_1"], padding=(0, 3))
    b1 = conv_bn_relu(b1, p["t1_conv_2"], padding=(3, 0))
    b1 = conv_bn_relu(b1, p["t1_conv_3"], stride=2)
    b2 = max_pool_3x3_s2(x)
    return jnp.concatenate([b0, b1, b2], axis=-1)


def inception_e(x, p, use_avg_pool):
    b0, a, b = conv1x1_fused(x, p["head"])
    a1 = conv_bn_relu(a, p["t_mixed_conv"], padding=(0, 1))
    a2 = conv_bn_relu(a, p["t_mixed_conv_1"], padding=(1, 0))
    b = conv_bn_relu(b, p["t1_conv_1"], padding=1)
    b1 = conv_bn_relu(b, p["t1_mixed_conv"], padding=(0, 1))
    b2 = conv_bn_relu(b, p["t1_mixed_conv_1"], padding=(1, 0))
    pooled = avg_pool_3x3_s1_p1(x) if use_avg_pool else max_pool_3x3_s1_p1(x)
    c = conv_bn_relu(pooled, p["t2_conv"])
    return jnp.concatenate([b0, a1, a2, b1, b2, c], axis=-1)


# ------------------------------- full forward ------------------------------

def inception_v3_forward(params, img, return_features=False,
                         no_output_bias=False):
    """img: NCHW float array with 3 channels (any spatial size).
    `params` must come from prepare_params(init_inception_v3(key))."""
    n, c, _, _ = img.shape
    assert c == 3
    x = jnp.transpose(img.astype(jnp.float32), (0, 2, 3, 1))   # NCHW -> NHWC
    x = grid_sample_resize(x, 299, 299)          # affine_grid + grid_sample
    x = ((x - 128.0) / 128.0).astype(jnp.bfloat16)

    x = conv_bn_relu(x, params["conv"], stride=2)        # 149
    x = conv_bn_relu(x, params["conv_1"])                # 147
    x = conv_bn_relu(x, params["conv_2"], padding=1)     # 147
    x = max_pool_3x3_s2(x)                               # 73
    x = conv_bn_relu(x, params["conv_3"])                # 73
    x = conv_bn_relu(x, params["conv_4"])                # 71
    x = max_pool_3x3_s2(x)                               # 35
    x = inception_a(x, params["mixed"])                  # 256
    x = inception_a(x, params["mixed_1"])                # 288
    x = inception_a(x, params["mixed_2"])                # 288
    x = inception_b(x, params["mixed_3"])                # 17, 768
    x = inception_c(x, params["mixed_4"])
    x = inception_c(x, params["mixed_5"])
    x = inception_c(x, params["mixed_6"])
    x = inception_c(x, params["mixed_7"])
    x = inception_d(x, params["mixed_8"])                # 8, 1280
    x = inception_e(x, params["mixed_9"], use_avg_pool=True)    # 2048
    x = inception_e(x, params["mixed_10"], use_avg_pool=False)  # 2048
    x = jnp.mean(x.astype(jnp.float32), axis=(1, 2))     # AvgPool2d(8)

    features = x.reshape(-1, 2048)
    if return_features:
        return features
    op = params["output"]
    bias = jnp.zeros_like(op["b"]) if no_output_bias else op["b"]
    logits = fused_matmul(features, op["wm"], bias,
                          relu=False, out_dtype=jnp.float32)[:, :op["n"]]
    return softmax_rows(logits)


# ----------------------------------- main -----------------------------------

if __name__ == "__main__":
    key = jax.random.PRNGKey(0)
    pkey, xkey = jax.random.split(key)
    raw_params = init_inception_v3(pkey)
    params = prepare_params(raw_params)   # one-time BN-fold / pad / bf16 cast
    # Small input image; forward resizes it to 299x299 internally (as in torch).
    img = jax.random.uniform(xkey, (2, 3, 16, 16), jnp.float32, 0.0, 255.0)
    probs = inception_v3_forward(params, img)
    probs = jax.block_until_ready(probs)
    assert probs.shape == (2, 1008)
    assert bool(jnp.all(jnp.isfinite(probs)))
    print("KERNEL_OK")
</pallas_src>

<mosaic_0001>
module attributes {stable_mosaic.version = 11 : i64} {
  func.func @_mm_bias_act_kernel(%arg0: i32, %arg1: i32, %arg2: memref<2048x27xbf16, #tpu.memory_space<vmem>>, %arg3: memref<27x32xbf16, #tpu.memory_space<vmem>>, %arg4: memref<1x32xf32, #tpu.memory_space<vmem>>, %arg5: memref<2048x32xbf16, #tpu.memory_space<vmem>>) attributes {dimension_semantics = [#tpu.dimension_semantics<parallel>, #tpu.dimension_semantics<parallel>], iteration_bounds = array<i64: 22, 1>, scalar_prefetch = 0 : i64, scratch_operands = 0 : i64, tpu.core_type = #tpu.core_type<tc>, window_params = [{transform_indices = @transform_0, window_bounds = array<i64: 2048, 27>}, {transform_indices = @transform_1, window_bounds = array<i64: 27, 32>}, {transform_indices = @transform_2, window_bounds = array<i64: 1, 32>}, {transform_indices = @transform_3, window_bounds = array<i64: 2048, 32>}]} {
    %c0 = arith.constant 0 : index
    %c0_0 = arith.constant 0 : index
    %0 = vector.load %arg2[%c0, %c0_0] : memref<2048x27xbf16, #tpu.memory_space<vmem>>, vector<2048x27xbf16>
    %c0_1 = arith.constant 0 : index
    %c0_2 = arith.constant 0 : index
    %1 = vector.load %arg3[%c0_1, %c0_2] : memref<27x32xbf16, #tpu.memory_space<vmem>>, vector<27x32xbf16>
    %cst = arith.constant dense<0.000000e+00> : vector<2048x32xf32>
    %2 = tpu.matmul %0, %1, %cst {dimension_numbers = #tpu.dot_dimension_numbers<[1], [0], [0], [1], [0, 0, 1, 1], [], []>} : vector<2048x27xbf16>, vector<27x32xbf16>, vector<2048x32xf32> -> vector<2048x32xf32>
    %c0_3 = arith.constant 0 : index
    %c0_4 = arith.constant 0 : index
    %3 = vector.load %arg4[%c0_3, %c0_4] : memref<1x32xf32, #tpu.memory_space<vmem>>, vector<1x32xf32>
    %4 = vector.broadcast %3 : vector<1x32xf32> to vector<2048x32xf32>
    %5 = arith.addf %2, %4 : vector<2048x32xf32>
    %cst_5 = arith.constant 0.000000e+00 : f32
    %6 = vector.broadcast %cst_5 : f32 to vector<2048x32xf32>
    %7 = arith.maximumf %5, %6 : vector<2048x32xf32>
    %8 = arith.truncf %7 : vector<2048x32xf32> to vector<2048x32xbf16>
    %c0_6 = arith.constant 0 : index
    %c0_7 = arith.constant 0 : index
    %9 = vector.load %arg5[%c0_6, %c0_7] : memref<2048x32xbf16, #tpu.memory_space<vmem>>, vector<2048x32xbf16>
    tpu.vector_store %arg5[%c0_6, %c0_7], %8 {strides = array<i32>} : memref<2048x32xbf16, #tpu.memory_space<vmem>>, vector<2048x32xbf16>,
    return
  }
  func.func @transform_0(%arg0: i32, %arg1: i32) -> (i32, i32) {
    %c0_i32 = arith.constant 0 : i32
    %c0_i32_0 = arith.constant 0 : i32
    return %arg0, %c0_i32 : i32, i32
  }
  func.func @transform_1(%arg0: i32, %arg1: i32) -> (i32, i32) {
    %c0_i32 = arith.constant 0 : i32
    %c0_i32_0 = arith.constant 0 : i32
    return %c0_i32, %arg1 : i32, i32
  }
  func.func @transform_2(%arg0: i32, %arg1: i32) -> (i32, i32) {
    %c0_i32 = arith.constant 0 : i32
    %c0_i32_0 = arith.constant 0 : i32
    return %c0_i32, %arg1 : i32, i32
  }
  func.func @transform_3(%arg0: i32, %arg1: i32) -> (i32, i32) {
    %c0_i32 = arith.constant 0 : i32
    return %arg0, %arg1 : i32, i32
  }
}

</mosaic_0001>

<llo_original>
// kernel: fused_matmul.1
$region0: #{fused_matmul.1}
  #allocation0 [shape = 'u32[]', space=smem, size = 0x4, offset = 0x4, fixed_abs, tag = 'smem constant byte address 0x4 - core index']
  #allocation1 [shape = 'u32[144,128]{1,0:T(1,128)}', space=vmem, size = 0x12000, scoped, tag = 'internal scratch']
  %s0 = inlined_call_operand.vmem [shape: bf16[44402,27], index: 0, kind: input, shape index: {}]
  %s1 = inlined_call_operand.vmem [shape: bf16[27,32], index: 1, kind: input, shape index: {}]
  %s2 = inlined_call_operand.vmem [shape: f32[1,32], index: 2, kind: input, shape index: {}]
  %s3 = inlined_call_operand.vmem [shape: bf16[44402,32], index: 3, kind: output, shape index: {}]
  %s4 = sld [smem:[#allocation0]]
  $region89: #{fused_matmul.1} parent=0
    _
  %s6 = ssub.s32 1, %s4
  %s7 = scalar_select 0, %s6, %s4
  $region1: #{fused_matmul.1} parent=0
    #allocation2 [shape = 'u8[1048576]{0}', space=vmem, size = 0x100000, scoped, tag = 'output window, operand 0']
    loop: start=0, step=1, limit=24
    $region2: #{fused_matmul.1} parent=1 // loop_pre_header
      _
    $region3: #{fused_matmul.1} parent=1 // loop_header
      %s9 = sphi 0, %s13
      %p10 = scmp.ge.s32.totalorder %s9, 24
      %s16 = sphi 0, %s28
      %s17 = sphi 0, %s24
      %s18 = sphi 0, %s16
      %s19 = sphi 0, %s17
      %s20 = sphi 0, %s18
      %s21 = sphi 0, %s19
      %s31 = sphi 0, %s33
      %s34 = sphi 0, %s31
      %s35 = sphi 0, %s34
      %s51 = sphi 0, %s35
      %s57 = sphi 0, %s59
      %s60 = sphi 0, %s57
      %s61 = sphi 0, %s60
      %s77 = sphi 0, %s61
      %s83 = sphi 0, %s85
      %s86 = sphi 0, %s83
      %s87 = sphi 0, %s86
      %s103 = sphi 0, %s87
      %s111 = sphi 0, %s113
      %s114 = sphi 0, %s111
      %s115 = sphi 0, %s114
      %s131 = sphi 0, %s115
    $region4: #{fused_matmul.1} parent=1 // loop_header_branch
      %12 = sbr.rel (%p10) target = $region8
    $region5: #{fused_matmul.1} parent=1 // loop_body
      %s14 = ssub.s32 %s9, 1
      %s15 = ssub.s32 %s9, 2
      %s22 = sadd.s32 1, %s17
      %p23 = scmp.ge.s32.totalorder %s22, 1
      %s24 = scalar_select %p23, 0, %s22
      %s25 = sadd.s32 1, %s16
      %s26 = scalar_select %p23, %s25, %s16
      %p27 = scmp.ge.s32.totalorder %s26, 22
      %s28 = scalar_select %p27, 0, %s26
      %s29 = ssub.s32 %s16, %s28
      %p30 = scmp.eq.s32.totalorder %s29, 0
      %s32 = sadd.s32 %s31, 1
      %s33 = scalar_select %p30, %s31, %s32
      %p36 = pneg %p30
      %p37 = scmp.eq.s32.totalorder %s9, 21
      %p38 = por %p36, %p37
      %p39 = scmp.ne.s32.totalorder %s31, %s34
      %p40 = scmp.eq.s32.totalorder %s9, 0
      %p41 = por %p39, %p40
      %p42 = scmp.ne.s32.totalorder %s31, %s34
      %p43 = scmp.eq.s32.totalorder %s14, 21
      %p44 = por %p42, %p43
      %p45 = scmp.ne.s32.totalorder %s34, %s35
      %p46 = scmp.eq.s32.totalorder %s14, 0
      %p47 = por %p45, %p46
      %p48 = scmp.ne.s32.totalorder %s34, %s35
      %p49 = scmp.eq.s32.totalorder %s15, 21
      %p50 = por %p48, %p49
      %p52 = scmp.ne.s32.totalorder %s35, %s51
      %p53 = scmp.eq.s32.totalorder %s15, 0
      %p54 = por %p52, %p53
      %s55 = ssub.s32 %s17, %s24
      %p56 = scmp.eq.s32.totalorder %s55, 0
      %s58 = sadd.s32 %s57, 1
      %s59 = scalar_select %p56, %s57, %s58
      %p62 = pneg %p56
      %p63 = scmp.eq.s32.totalorder %s9, 21
      %p64 = por %p62, %p63
      %p65 = scmp.ne.s32.totalorder %s57, %s60
      %p66 = scmp.eq.s32.totalorder %s9, 0
      %p67 = por %p65, %p66
      %p68 = scmp.ne.s32.totalorder %s57, %s60
      %p69 = scmp.eq.s32.totalorder %s14, 21
      %p70 = por %p68, %p69
      %p71 = scmp.ne.s32.totalorder %s60, %s61
      %p72 = scmp.eq.s32.totalorder %s14, 0
      %p73 = por %p71, %p72
      %p74 = scmp.ne.s32.totalorder %s60, %s61
      %p75 = scmp.eq.s32.totalorder %s15, 21
      %p76 = por %p74, %p75
      %p78 = scmp.ne.s32.totalorder %s61, %s77
      %p79 = scmp.eq.s32.totalorder %s15, 0
      %p80 = por %p78, %p79
      %s81 = ssub.s32 %s17, %s24
      %p82 = scmp.eq.s32.totalorder %s81, 0
      %s84 = sadd.s32 %s83, 1
      %s85 = scalar_select %p82, %s83, %s84
      %p88 = pneg %p82
      %p89 = scmp.eq.s32.totalorder %s9, 21
      %p90 = por %p88, %p89
      %p91 = scmp.ne.s32.totalorder %s83, %s86
      %p92 = scmp.eq.s32.totalorder %s9, 0
      %p93 = por %p91, %p92
      %p94 = scmp.ne.s32.totalorder %s83, %s86
      %p95 = scmp.eq.s32.totalorder %s14, 21
      %p96 = por %p94, %p95
      %p97 = scmp.ne.s32.totalorder %s86, %s87
      %p98 = scmp.eq.s32.totalorder %s14, 0
      %p99 = por %p97, %p98
      %p100 = scmp.ne.s32.totalorder %s86, %s87
      %p101 = scmp.eq.s32.totalorder %s15, 21
      %p102 = por %p100, %p101
      %p104 = scmp.ne.s32.totalorder %s87, %s103
      %p105 = scmp.eq.s32.totalorder %s15, 0
      %p106 = por %p104, %p105
      %s107 = ssub.s32 %s16, %s28
      %s108 = ssub.s32 %s17, %s24
      %s109 = sor.u32 %s107, %s108
      %p110 = scmp.eq.s32.totalorder %s109, 0
      %s112 = sadd.s32 %s111, 1
      %s113 = scalar_select %p110, %s111, %s112
      %p116 = pneg %p110
      %p117 = scmp.eq.s32.totalorder %s9, 21
      %p118 = por %p116, %p117
      %p119 = scmp.ne.s32.totalorder %s111, %s114
      %p120 = scmp.eq.s32.totalorder %s9, 0
      %p121 = por %p119, %p120
      %p122 = scmp.ne.s32.totalorder %s111, %s114
      %p123 = scmp.eq.s32.totalorder %s14, 21
      %p124 = por %p122, %p123
      %p125 = scmp.ne.s32.totalorder %s114, %s115
      %p126 = scmp.eq.s32.totalorder %s14, 0
      %p127 = por %p125, %p126
      %p128 = scmp.ne.s32.totalorder %s114, %s115
      %p129 = scmp.eq.s32.totalorder %s15, 21
      %p130 = por %p128, %p129
      %p132 = scmp.ne.s32.totalorder %s115, %s131
      %p133 = scmp.eq.s32.totalorder %s15, 0
      %p134 = por %p132, %p133
      %p135 = scmp.le.s32.totalorder 1, %s9
      %p136 = scmp.lt.s32.totalorder %s9, 23
      %p137 = pnand %p135, %p136
      %p138 = pneg %p137
      // Predicated region
      $region9: #{fused_matmul.1} parent=5 // pred_check
        _
      $region10: #{fused_matmul.1} parent=5 // pred_check_branch
        %140 = sbr.rel (%p137) target = $region12
      $region11: #{fused_matmul.1} parent=5 // pred_region
        %s141 = ssub.s32 %s9, 1
        // Predicated region
        $region13: #{fused_matmul.1} parent=11 // pred_check
          %p142 = pneg %p73
        $region14: #{fused_matmul.1} parent=11 // pred_check_branch
          %144 = sbr.rel (%p142) target = $region16
        $region15: #{fused_matmul.1} parent=11 // pred_region
          %p145 = scmp.lt.s32.totalorder %s19, 0
          %s146 = scalar_select %p145, %s19, 0
          %s147 = smul.addr %s146, 4
          %s148 = scalar_lea.vmem %s1, %s147
        $region16: #{fused_matmul.1} parent=11 // pred_fallthru
          _
        // Predicated region
        $region17: #{fused_matmul.1} parent=11 // pred_check
          %p149 = pneg %p99
        $region18: #{fused_matmul.1} parent=11 // pred_check_branch
          %151 = sbr.rel (%p149) target = $region20
        $region19: #{fused_matmul.1} parent=11 // pred_region
          %p152 = scmp.lt.s32.totalorder %s19, 0
          %s153 = scalar_select %p152, %s19, 0
          %s154 = scalar_lea.vmem %s2, %s153
        $region20: #{fused_matmul.1} parent=11 // pred_fallthru
          _
      $region12: #{fused_matmul.1} parent=5 // pred_fallthru
        _
      %p155 = scmp.lt.s32.totalorder %s9, 22
      // Predicated region
      $region21: #{fused_matmul.1} parent=5 // pred_check
        %p156 = pneg %p155
      $region22: #{fused_matmul.1} parent=5 // pred_check_branch
        %158 = sbr.rel (%p156) target = $region24
      $region23: #{fused_matmul.1} parent=5 // pred_region
        // Predicated region
        $region25: #{fused_matmul.1} parent=23 // pred_check
          %p159 = pneg %p41
        $region26: #{fused_matmul.1} parent=23 // pred_check_branch
          %161 = sbr.rel (%p159) target = $region28
        $region27: #{fused_matmul.1} parent=23 // pred_region
          %s162 = smul.u32 256, %s16
          %s163 = ssub.s32 5551, %s162
          %p164 = scmp.lt.s32.totalorder %s163, 256
          %s165 = scalar_select %p164, %s163, 256
          %s166 = smul.u32 64, %s165
          %p167 = scmp.lt.s32.totalorder %s162, 5550
          %s168 = scalar_select %p167, %s162, 5550
          %s169 = smul.addr %s168, 4
          %s170 = scalar_lea.vmem %s0, %s169
          %s171 = smul.u32 256, %s16
          %s172 = ssub.s32 5551, %s171
          %p173 = scmp.lt.s32.totalorder %s172, 256
          %s174 = scalar_select %p173, %s172, 256
          %s175 = smul.u32 64, %s174
        $region28: #{fused_matmul.1} parent=23 // pred_fallthru
          _
      $region24: #{fused_matmul.1} parent=5 // pred_fallthru
        _
      %p176 = scmp.le.s32.totalorder 1, %s9
      %p177 = scmp.lt.s32.totalorder %s9, 23
      %p178 = pnand %p176, %p177
      %p179 = pneg %p178
      // Predicated region
      $region29: #{fused_matmul.1} parent=5 // pred_check
        _
      $region30: #{fused_matmul.1} parent=5 // pred_check_branch
        %181 = sbr.rel (%p178) target = $region32
      $region31: #{fused_matmul.1} parent=5 // pred_region
        %s182 = ssub.s32 %s9, 1
        %s183 = smul.u32 256, %s18
        %s184 = ssub.s32 5551, %s183
        %p185 = scmp.lt.s32.totalorder %s184, 256
        %s186 = scalar_select %p185, %s184, 256
        %s187 = smul.u32 64, %s186
        %p188 = scmp.lt.s32.totalorder %s183, 5550
        %s189 = scalar_select %p188, %s183, 5550
        %s190 = smul.addr %s189, 4
        %s191 = scalar_lea.vmem %s0, %s190
        %p192 = pneg %p47
        %p193 = pneg %p44
        %p194 = scmp.lt.s32.totalorder %s19, 0
        %s195 = scalar_select %p194, %s19, 0
        %s196 = smul.addr %s195, 4
        %s197 = scalar_lea.vmem %s1, %s196
        %p198 = pneg %p73
        %p199 = pneg %p70
        %p200 = scmp.lt.s32.totalorder %s19, 0
        %s201 = scalar_select %p200, %s19, 0
        %s202 = scalar_lea.vmem %s2, %s201
        %p203 = pneg %p99
        %p204 = pneg %p96
        %p205 = pneg %p127
        %p206 = pneg %p124
        %s207 = sand.u32 %s114, 1
        %s208 = sand.u32 %s114, 1
        %s209 = smul.addr %s208, 1024
        %s210 = scalar_lea.vmem [#allocation2], %s209
        %s211 = smul.u32 256, %s18
        %s212 = ssub.s32 5551, %s211
        %p213 = scmp.lt.s32.totalorder %s212, 256
        %s214 = scalar_select %p213, %s212, 256
        %s215 = smul.u32 64, %s214
        %p216 = scmp.lt.s32.totalorder %s211, 5550
        %s217 = scalar_select %p216, %s211, 5550
        %s218 = smul.addr %s217, 4
        %s219 = scalar_lea.vmem %s0, %s218
        %s220 = smul.u32 256, %s18
        %s221 = ssub.s32 5551, %s220
        %p222 = scmp.lt.s32.totalorder %s221, 256
        %s223 = scalar_select %p222, %s221, 256
        %s224 = smul.u32 64, %s223
        %p225 = scmp.lt.s32.totalorder %s19, 0
        %s226 = scalar_select %p225, %s19, 0
        %s227 = smul.addr %s226, 4
        %s228 = scalar_lea.vmem %s1, %s227
        %p229 = scmp.lt.s32.totalorder %s19, 0
        %s230 = scalar_select %p229, %s19, 0
        %s231 = scalar_lea.vmem %s2, %s230
        %s232 = smul.u32 256, %s18
        %s233 = ssub.s32 5551, %s232
        %p234 = scmp.lt.s32.totalorder %s233, 256
        %s235 = scalar_select %p234, %s233, 256
        %s236 = smul.u32 64, %s235
        %v238 = vld [vmem:[%s219] sm:$0xf]
        %v239 = vld [vmem:[%s219 + $0x4] sm:$0xf]
        %v240 = vld [vmem:[%s219 + $0x8] sm:$0xf]
        %v241 = vld [vmem:[%s219 + $0xc] sm:$0xf]
        %v242 = vld [vmem:[%s219 + $0x10] sm:$0xf]
        %v243 = vld [vmem:[%s219 + $0x14] sm:$0xf]
        %v244 = vld [vmem:[%s219 + $0x18] sm:$0xf]
        %v245 = vld [vmem:[%s219 + $0x1c] sm:$0xf]
        %v246 = vld [vmem:[%s219 + $0x20] sm:$0xf]
        %v247 = vld [vmem:[%s219 + $0x24] sm:$0xf]
        %v248 = vld [vmem:[%s219 + $0x28] sm:$0xf]
        %v249 = vld [vmem:[%s219 + $0x2c] sm:$0xf]
        %v250 = vld [vmem:[%s219 + $0x30] sm:$0xf]
        %v251 = vld [vmem:[%s219 + $0x34] sm:$0xf]
        %v252 = vld [vmem:[%s219 + $0x38] sm:$0xf]
        %v253 = vld [vmem:[%s219 + $0x3c] sm:$0xf]
        %v254 = vld [vmem:[%s219 + $0x40] sm:$0xf]
        %v255 = vld [vmem:[%s219 + $0x44] sm:$0xf]
        %v256 = vld [vmem:[%s219 + $0x48] sm:$0xf]
        %v257 = vld [vmem:[%s219 + $0x4c] sm:$0xf]
        %v258 = vld [vmem:[%s219 + $0x50] sm:$0xf]
        %v259 = vld [vmem:[%s219 + $0x54] sm:$0xf]
        %v260 = vld [vmem:[%s219 + $0x58] sm:$0xf]
        %v261 = vld [vmem:[%s219 + $0x5c] sm:$0xf]
        %v262 = vld [vmem:[%s219 + $0x60] sm:$0xf]
        %v263 = vld [vmem:[%s219 + $0x64] sm:$0xf]
        %v264 = vld [vmem:[%s219 + $0x68] sm:$0xf]
        %v265 = vld [vmem:[%s219 + $0x6c] sm:$0xf]
        %v266 = vld [vmem:[%s219 + $0x70] sm:$0xf]
        %v267 = vld [vmem:[%s219 + $0x74] sm:$0xf]
        %v268 = vld [vmem:[%s219 + $0x78] sm:$0xf]
        %v269 = vld [vmem:[%s219 + $0x7c] sm:$0xf]
        %v270 = vld [vmem:[%s219 + $0x80] sm:$0xf]
        %v271 = vld [vmem:[%s219 + $0x84] sm:$0xf]
        %v272 = vld [vmem:[%s219 + $0x88] sm:$0xf]
        %v273 = vld [vmem:[%s219 + $0x8c] sm:$0xf]
        %v274 = vld [vmem:[%s219 + $0x90] sm:$0xf]
        %v275 = vld [vmem:[%s219 + $0x94] sm:$0xf]
        %v276 = vld [vmem:[%s219 + $0x98] sm:$0xf]
        %v277 = vld [vmem:[%s219 + $0x9c] sm:$0xf]
        %v278 = vld [vmem:[%s219 + $0xa0] sm:$0xf]
        %v279 = vld [vmem:[%s219 + $0xa4] sm:$0xf]
        %v280 = vld [vmem:[%s219 + $0xa8] sm:$0xf]
        %v281 = vld [vmem:[%s219 + $0xac] sm:$0xf]
        %v282 = vld [vmem:[%s219 + $0xb0] sm:$0xf]
        %v283 = vld [vmem:[%s219 + $0xb4] sm:$0xf]
        %v284 = vld [vmem:[%s219 + $0xb8] sm:$0xf]
        %v285 = vld [vmem:[%s219 + $0xbc] sm:$0xf]
        %v286 = vld [vmem:[%s219 + $0xc0] sm:$0xf]
        %v287 = vld [vmem:[%s219 + $0xc4] sm:$0xf]
        %v288 = vld [vmem:[%s219 + $0xc8] sm:$0xf]
        %v289 = vld [vmem:[%s219 + $0xcc] sm:$0xf]
        %v290 = vld [vmem:[%s219 + $0xd0] sm:$0xf]
        %v291 = vld [vmem:[%s219 + $0xd4] sm:$0xf]
        %v292 = vld [vmem:[%s219 + $0xd8] sm:$0xf]
        %v293 = vld [vmem:[%s219 + $0xdc] sm:$0xf]
        %v294 = vld [vmem:[%s219 + $0xe0] sm:$0xf]
        %v295 = vld [vmem:[%s219 + $0xe4] sm:$0xf]
        %v296 = vld [vmem:[%s219 + $0xe8] sm:$0xf]
        %v297 = vld [vmem:[%s219 + $0xec] sm:$0xf]
        %v298 = vld [vmem:[%s219 + $0xf0] sm:$0xf]
        %v299 = vld [vmem:[%s219 + $0xf4] sm:$0xf]
        %v300 = vld [vmem:[%s219 + $0xf8] sm:$0xf]
        %v301 = vld [vmem:[%s219 + $0xfc] sm:$0xf]
        %v302 = vld [vmem:[%s219 + $0x100] sm:$0xf]
        %v303 = vld [vmem:[%s219 + $0x104] sm:$0xf]
        %v304 = vld [vmem:[%s219 + $0x108] sm:$0xf]
        %v305 = vld [vmem:[%s219 + $0x10c] sm:$0xf]
        %v306 = vld [vmem:[%s219 + $0x110] sm:$0xf]
        %v307 = vld [vmem:[%s219 + $0x114] sm:$0xf]
        %v308 = vld [vmem:[%s219 + $0x118] sm:$0xf]
        %v309 = vld [vmem:[%s219 + $0x11c] sm:$0xf]
        %v310 = vld [vmem:[%s219 + $0x120] sm:$0xf]
        %v311 = vld [vmem:[%s219 + $0x124] sm:$0xf]
        %v312 = vld [vmem:[%s219 + $0x128] sm:$0xf]
        %v313 = vld [vmem:[%s219 + $0x12c] sm:$0xf]
        %v314 = vld [vmem:[%s219 + $0x130] sm:$0xf]
        %v315 = vld [vmem:[%s219 + $0x134] sm:$0xf]
        %v316 = vld [vmem:[%s219 + $0x138] sm:$0xf]
        %v317 = vld [vmem:[%s219 + $0x13c] sm:$0xf]
        %v318 = vld [vmem:[%s219 + $0x140] sm:$0xf]
        %v319 = vld [vmem:[%s219 + $0x144] sm:$0xf]
        %v320 = vld [vmem:[%s219 + $0x148] sm:$0xf]
        %v321 = vld [vmem:[%s219 + $0x14c] sm:$0xf]
        %v322 = vld [vmem:[%s219 + $0x150] sm:$0xf]
        %v323 = vld [vmem:[%s219 + $0x154] sm:$0xf]
        %v324 = vld [vmem:[%s219 + $0x158] sm:$0xf]
        %v325 = vld [vmem:[%s219 + $0x15c] sm:$0xf]
        %v326 = vld [vmem:[%s219 + $0x160] sm:$0xf]
        %v327 = vld [vmem:[%s219 + $0x164] sm:$0xf]
        %v328 = vld [vmem:[%s219 + $0x168] sm:$0xf]
        %v329 = vld [vmem:[%s219 + $0x16c] sm:$0xf]
        %v330 = vld [vmem:[%s219 + $0x170] sm:$0xf]
        %v331 = vld [vmem:[%s219 + $0x174] sm:$0xf]
        %v332 = vld [vmem:[%s219 + $0x178] sm:$0xf]
        %v333 = vld [vmem:[%s219 + $0x17c] sm:$0xf]
        %v334 = vld [vmem:[%s219 + $0x180] sm:$0xf]
        %v335 = vld [vmem:[%s219 + $0x184] sm:$0xf]
        %v336 = vld [vmem:[%s219 + $0x188] sm:$0xf]
        %v337 = vld [vmem:[%s219 + $0x18c] sm:$0xf]
        %v338 = vld [vmem:[%s219 + $0x190] sm:$0xf]
        %v339 = vld [vmem:[%s219 + $0x194] sm:$0xf]
        %v340 = vld [vmem:[%s219 + $0x198] sm:$0xf]
        %v341 = vld [vmem:[%s219 + $0x19c] sm:$0xf]
        %v342 = vld [vmem:[%s219 + $0x1a0] sm:$0xf]
        %v343 = vld [vmem:[%s219 + $0x1a4] sm:$0xf]
        %v344 = vld [vmem:[%s219 + $0x1a8] sm:$0xf]
        %v345 = vld [vmem:[%s219 + $0x1ac] sm:$0xf]
        %v346 = vld [vmem:[%s219 + $0x1b0] sm:$0xf]
        %v347 = vld [vmem:[%s219 + $0x1b4] sm:$0xf]
        %v348 = vld [vmem:[%s219 + $0x1b8] sm:$0xf]
        %v349 = vld [vmem:[%s219 + $0x1bc] sm:$0xf]
        %v350 = vld [vmem:[%s219 + $0x1c0] sm:$0xf]
        %v351 = vld [vmem:[%s219 + $0x1c4] sm:$0xf]
        %v352 = vld [vmem:[%s219 + $0x1c8] sm:$0xf]
        %v353 = vld [vmem:[%s219 + $0x1cc] sm:$0xf]
        %v354 = vld [vmem:[%s219 + $0x1d0] sm:$0xf]
        %v355 = vld [vmem:[%s219 + $0x1d4] sm:$0xf]
        %v356 = vld [vmem:[%s219 + $0x1d8] sm:$0xf]
        %v357 = vld [vmem:[%s219 + $0x1dc] sm:$0xf]
        %v358 = vld [vmem:[%s219 + $0x1e0] sm:$0xf]
        %v359 = vld [vmem:[%s219 + $0x1e4] sm:$0xf]
        %v360 = vld [vmem:[%s219 + $0x1e8] sm:$0xf]
        %v361 = vld [vmem:[%s219 + $0x1ec] sm:$0xf]
        %v362 = vld [vmem:[%s219 + $0x1f0] sm:$0xf]
        %v363 = vld [vmem:[%s219 + $0x1f4] sm:$0xf]
        %v364 = vld [vmem:[%s219 + $0x1f8] sm:$0xf]
        %v365 = vld [vmem:[%s219 + $0x1fc] sm:$0xf]
        %v366 = vld [vmem:[%s219 + $0x200] sm:$0xf]
        %v367 = vld [vmem:[%s219 + $0x204] sm:$0xf]
        %v368 = vld [vmem:[%s219 + $0x208] sm:$0xf]
        %v369 = vld [vmem:[%s219 + $0x20c] sm:$0xf]
        %v370 = vld [vmem:[%s219 + $0x210] sm:$0xf]
        %v371 = vld [vmem:[%s219 + $0x214] sm:$0xf]
        %v372 = vld [vmem:[%s219 + $0x218] sm:$0xf]
        %v373 = vld [vmem:[%s219 + $0x21c] sm:$0xf]
        %v374 = vld [vmem:[%s219 + $0x220] sm:$0xf]
        %v375 = vld [vmem:[%s219 + $0x224] sm:$0xf]
        %v376 = vld [vmem:[%s219 + $0x228] sm:$0xf]
        %v377 = vld [vmem:[%s219 + $0x22c] sm:$0xf]
        %v378 = vld [vmem:[%s219 + $0x230] sm:$0xf]
        %v379 = vld [vmem:[%s219 + $0x234] sm:$0xf]
        %v380 = vld [vmem:[%s219 + $0x238] sm:$0xf]
        %v381 = vld [vmem:[%s219 + $0x23c] sm:$0xf]
        %v382 = vld [vmem:[%s219 + $0x240] sm:$0xf]
        %v383 = vld [vmem:[%s219 + $0x244] sm:$0xf]
        %v384 = vld [vmem:[%s219 + $0x248] sm:$0xf]
        %v385 = vld [vmem:[%s219 + $0x24c] sm:$0xf]
        %v386 = vld [vmem:[%s219 + $0x250] sm:$0xf]
        %v387 = vld [vmem:[%s219 + $0x254] sm:$0xf]
        %v388 = vld [vmem:[%s219 + $0x258] sm:$0xf]
        %v389 = vld [vmem:[%s219 + $0x25c] sm:$0xf]
        %v390 = vld [vmem:[%s219 + $0x260] sm:$0xf]
        %v391 = vld [vmem:[%s219 + $0x264] sm:$0xf]
        %v392 = vld [vmem:[%s219 + $0x268] sm:$0xf]
        %v393 = vld [vmem:[%s219 + $0x26c] sm:$0xf]
        %v394 = vld [vmem:[%s219 + $0x270] sm:$0xf]
        %v395 = vld [vmem:[%s219 + $0x274] sm:$0xf]
        %v396 = vld [vmem:[%s219 + $0x278] sm:$0xf]
        %v397 = vld [vmem:[%s219 + $0x27c] sm:$0xf]
        %v398 = vld [vmem:[%s219 + $0x280] sm:$0xf]
        %v399 = vld [vmem:[%s219 + $0x284] sm:$0xf]
        %v400 = vld [vmem:[%s219 + $0x288] sm:$0xf]
        %v401 = vld [vmem:[%s219 + $0x28c] sm:$0xf]
        %v402 = vld [vmem:[%s219 + $0x290] sm:$0xf]
        %v403 = vld [vmem:[%s219 + $0x294] sm:$0xf]
        %v404 = vld [vmem:[%s219 + $0x298] sm:$0xf]
        %v405 = vld [vmem:[%s219 + $0x29c] sm:$0xf]
        %v406 = vld [vmem:[%s219 + $0x2a0] sm:$0xf]
        %v407 = vld [vmem:[%s219 + $0x2a4] sm:$0xf]
        %v408 = vld [vmem:[%s219 + $0x2a8] sm:$0xf]
        %v409 = vld [vmem:[%s219 + $0x2ac] sm:$0xf]
        %v410 = vld [vmem:[%s219 + $0x2b0] sm:$0xf]
        %v411 = vld [vmem:[%s219 + $0x2b4] sm:$0xf]
        %v412 = vld [vmem:[%s219 + $0x2b8] sm:$0xf]
        %v413 = vld [vmem:[%s219 + $0x2bc] sm:$0xf]
        %v414 = vld [vmem:[%s219 + $0x2c0] sm:$0xf]
        %v415 = vld [vmem:[%s219 + $0x2c4] sm:$0xf]
        %v416 = vld [vmem:[%s219 + $0x2c8] sm:$0xf]
        %v417 = vld [vmem:[%s219 + $0x2cc] sm:$0xf]
        %v418 = vld [vmem:[%s219 + $0x2d0] sm:$0xf]
        %v419 = vld [vmem:[%s219 + $0x2d4] sm:$0xf]
        %v420 = vld [vmem:[%s219 + $0x2d8] sm:$0xf]
        %v421 = vld [vmem:[%s219 + $0x2dc] sm:$0xf]
        %v422 = vld [vmem:[%s219 + $0x2e0] sm:$0xf]
        %v423 = vld [vmem:[%s219 + $0x2e4] sm:$0xf]
        %v424 = vld [vmem:[%s219 + $0x2e8] sm:$0xf]
        %v425 = vld [vmem:[%s219 + $0x2ec] sm:$0xf]
        %v426 = vld [vmem:[%s219 + $0x2f0] sm:$0xf]
        %v427 = vld [vmem:[%s219 + $0x2f4] sm:$0xf]
        %v428 = vld [vmem:[%s219 + $0x2f8] sm:$0xf]
        %v429 = vld [vmem:[%s219 + $0x2fc] sm:$0xf]
        %v430 = vld [vmem:[%s219 + $0x300] sm:$0xf]
        %v431 = vld [vmem:[%s219 + $0x304] sm:$0xf]
        %v432 = vld [vmem:[%s219 + $0x308] sm:$0xf]
        %v433 = vld [vmem:[%s219 + $0x30c] sm:$0xf]
        %v434 = vld [vmem:[%s219 + $0x310] sm:$0xf]
        %v435 = vld [vmem:[%s219 + $0x314] sm:$0xf]
        %v436 = vld [vmem:[%s219 + $0x318] sm:$0xf]
        %v437 = vld [vmem:[%s219 + $0x31c] sm:$0xf]
        %v438 = vld [vmem:[%s219 + $0x320] sm:$0xf]
        %v439 = vld [vmem:[%s219 + $0x324] sm:$0xf]
        %v440 = vld [vmem:[%s219 + $0x328] sm:$0xf]
        %v441 = vld [vmem:[%s219 + $0x32c] sm:$0xf]
        %v442 = vld [vmem:[%s219 + $0x330] sm:$0xf]
        %v443 = vld [vmem:[%s219 + $0x334] sm:$0xf]
        %v444 = vld [vmem:[%s219 + $0x338] sm:$0xf]
        %v445 = vld [vmem:[%s219 + $0x33c] sm:$0xf]
        %v446 = vld [vmem:[%s219 + $0x340] sm:$0xf]
        %v447 = vld [vmem:[%s219 + $0x344] sm:$0xf]
        %v448 = vld [vmem:[%s219 + $0x348] sm:$0xf]
        %v449 = vld [vmem:[%s219 + $0x34c] sm:$0xf]
        %v450 = vld [vmem:[%s219 + $0x350] sm:$0xf]
        %v451 = vld [vmem:[%s219 + $0x354] sm:$0xf]
        %v452 = vld [vmem:[%s219 + $0x358] sm:$0xf]
        %v453 = vld [vmem:[%s219 + $0x35c] sm:$0xf]
        %v454 = vld [vmem:[%s219 + $0x360] sm:$0xf]
        %v455 = vld [vmem:[%s219 + $0x364] sm:$0xf]
        %v456 = vld [vmem:[%s219 + $0x368] sm:$0xf]
        %v457 = vld [vmem:[%s219 + $0x36c] sm:$0xf]
        %v458 = vld [vmem:[%s219 + $0x370] sm:$0xf]
        %v459 = vld [vmem:[%s219 + $0x374] sm:$0xf]
        %v460 = vld [vmem:[%s219 + $0x378] sm:$0xf]
        %v461 = vld [vmem:[%s219 + $0x37c] sm:$0xf]
        %v462 = vld [vmem:[%s219 + $0x380] sm:$0xf]
        %v463 = vld [vmem:[%s219 + $0x384] sm:$0xf]
        %v464 = vld [vmem:[%s219 + $0x388] sm:$0xf]
        %v465 = vld [vmem:[%s219 + $0x38c] sm:$0xf]
        %v466 = vld [vmem:[%s219 + $0x390] sm:$0xf]
        %v467 = vld [vmem:[%s219 + $0x394] sm:$0xf]
        %v468 = vld [vmem:[%s219 + $0x398] sm:$0xf]
        %v469 = vld [vmem:[%s219 + $0x39c] sm:$0xf]
        %v470 = vld [vmem:[%s219 + $0x3a0] sm:$0xf]
        %v471 = vld [vmem:[%s219 + $0x3a4] sm:$0xf]
        %v472 = vld [vmem:[%s219 + $0x3a8] sm:$0xf]
        %v473 = vld [vmem:[%s219 + $0x3ac] sm:$0xf]
        %v474 = vld [vmem:[%s219 + $0x3b0] sm:$0xf]
        %v475 = vld [vmem:[%s219 + $0x3b4] sm:$0xf]
        %v476 = vld [vmem:[%s219 + $0x3b8] sm:$0xf]
        %v477 = vld [vmem:[%s219 + $0x3bc] sm:$0xf]
        %v478 = vld [vmem:[%s219 + $0x3c0] sm:$0xf]
        %v479 = vld [vmem:[%s219 + $0x3c4] sm:$0xf]
        %v480 = vld [vmem:[%s219 + $0x3c8] sm:$0xf]
        %v481 = vld [vmem:[%s219 + $0x3cc] sm:$0xf]
        %v482 = vld [vmem:[%s219 + $0x3d0] sm:$0xf]
        %v483 = vld [vmem:[%s219 + $0x3d4] sm:$0xf]
        %v484 = vld [vmem:[%s219 + $0x3d8] sm:$0xf]
        %v485 = vld [vmem:[%s219 + $0x3dc] sm:$0xf]
        %v486 = vld [vmem:[%s219 + $0x3e0] sm:$0xf]
        %v487 = vld [vmem:[%s219 + $0x3e4] sm:$0xf]
        %v488 = vld [vmem:[%s219 + $0x3e8] sm:$0xf]
        %v489 = vld [vmem:[%s219 + $0x3ec] sm:$0xf]
        %v490 = vld [vmem:[%s219 + $0x3f0] sm:$0xf]
        %v491 = vld [vmem:[%s219 + $0x3f4] sm:$0xf]
        %v492 = vld [vmem:[%s219 + $0x3f8] sm:$0xf]
        %v493 = vld [vmem:[%s219 + $0x3fc] sm:$0xf]
        %v494 = vld [vmem:[%s228] sm:$0xf]
        %v495 = vld [vmem:[%s228 + $0x4] sm:$0xf]
        %v496 = vld [vmem:[%s228 + $0x8] sm:$0xf]
        %v497 = vld [vmem:[%s228 + $0xc] sm:$0x3]
        %v498 = vld [vmem:[%s231] sm:$0x1]
        %v500 = vlaneseq
        %v501 = vshrl.u32 %v500, 7
        %v502 = vsub.s32 0, %v501
        %v503 = vrot.slane %v498, %v502
        %v761 = vunpack.c.l.b16 %v238
        %v762 = vunpack.c.l.b16 %v239
        %v763 = vunpack.c.l.b16 %v240
        %v764 = vunpack.c.l.b16 %v241
        %v765 = vunpack.c.l.b16 %v242
        %v766 = vunpack.c.l.b16 %v243
        %v767 = vunpack.c.l.b16 %v244
        %v768 = vunpack.c.l.b16 %v245
        %v769 = vunpack.c.l.b16 %v246
        %v770 = vunpack.c.l.b16 %v247
        %v771 = vunpack.c.l.b16 %v248
        %v772 = vunpack.c.l.b16 %v249
        %v773 = vunpack.c.l.b16 %v250
        %v774 = vunpack.c.l.b16 %v251
        %v775 = vunpack.c.l.b16 %v252
        %v776 = vunpack.c.l.b16 %v253
        %v777 = vunpack.c.l.b16 %v254
        %v778 = vunpack.c.l.b16 %v255
        %v779 = vunpack.c.l.b16 %v256
        %v780 = vunpack.c.l.b16 %v257
        %v781 = vunpack.c.l.b16 %v258
        %v782 = vunpack.c.l.b16 %v259
        %v783 = vunpack.c.l.b16 %v260
        %v784 = vunpack.c.l.b16 %v261
        %v785 = vunpack.c.l.b16 %v262
        %v786 = vunpack.c.l.b16 %v263
        %v787 = vunpack.c.l.b16 %v264
        %v788 = vunpack.c.l.b16 %v265
        %v789 = vunpack.c.l.b16 %v266
        %v790 = vunpack.c.l.b16 %v267
        %v791 = vunpack.c.l.b16 %v268
        %v792 = vunpack.c.l.b16 %v269
        %v793 = vunpack.c.l.b16 %v270
        %v794 = vunpack.c.l.b16 %v271
        %v795 = vunpack.c.l.b16 %v272
        %v796 = vunpack.c.l.b16 %v273
        %v797 = vunpack.c.l.b16 %v274
        %v798 = vunpack.c.l.b16 %v275
        %v799 = vunpack.c.l.b16 %v276
        %v800 = vunpack.c.l.b16 %v277
        %v801 = vunpack.c.l.b16 %v278
        %v802 = vunpack.c.l.b16 %v279
        %v803 = vunpack.c.l.b16 %v280
        %v804 = vunpack.c.l.b16 %v281
        %v805 = vunpack.c.l.b16 %v282
        %v806 = vunpack.c.l.b16 %v283
        %v807 = vunpack.c.l.b16 %v284
        %v808 = vunpack.c.l.b16 %v285
        %v809 = vunpack.c.l.b16 %v286
        %v810 = vunpack.c.l.b16 %v287
        %v811 = vunpack.c.l.b16 %v288
        %v812 = vunpack.c.l.b16 %v289
        %v813 = vunpack.c.l.b16 %v290
        %v814 = vunpack.c.l.b16 %v291
        %v815 = vunpack.c.l.b16 %v292
        %v816 = vunpack.c.l.b16 %v293
        %v817 = vunpack.c.l.b16 %v294
        %v818 = vunpack.c.l.b16 %v295
        %v819 = vunpack.c.l.b16 %v296
        %v820 = vunpack.c.l.b16 %v297
        %v821 = vunpack.c.l.b16 %v298
        %v822 = vunpack.c.l.b16 %v299
        %v823 = vunpack.c.l.b16 %v300
        %v824 = vunpack.c.l.b16 %v301
        %v825 = vunpack.c.l.b16 %v302
        %v826 = vunpack.c.l.b16 %v303
        %v827 = vunpack.c.l.b16 %v304
        %v828 = vunpack.c.l.b16 %v305
        %v829 = vunpack.c.l.b16 %v306
        %v830 = vunpack.c.l.b16 %v307
        %v831 = vunpack.c.l.b16 %v308
        %v832 = vunpack.c.l.b16 %v309
        %v833 = vunpack.c.l.b16 %v310
        %v834 = vunpack.c.l.b16 %v311
        %v835 = vunpack.c.l.b16 %v312
        %v836 = vunpack.c.l.b16 %v313
        %v837 = vunpack.c.l.b16 %v314
        %v838 = vunpack.c.l.b16 %v315
        %v839 = vunpack.c.l.b16 %v316
        %v840 = vunpack.c.l.b16 %v317
        %v841 = vunpack.c.l.b16 %v318
        %v842 = vunpack.c.l.b16 %v319
        %v843 = vunpack.c.l.b16 %v320
        %v844 = vunpack.c.l.b16 %v321
        %v845 = vunpack.c.l.b16 %v322
        %v846 = vunpack.c.l.b16 %v323
        %v847 = vunpack.c.l.b16 %v324
        %v848 = vunpack.c.l.b16 %v325
        %v849 = vunpack.c.l.b16 %v326
        %v850 = vunpack.c.l.b16 %v327
        %v851 = vunpack.c.l.b16 %v328
        %v852 = vunpack.c.l.b16 %v329
        %v853 = vunpack.c.l.b16 %v330
        %v854 = vunpack.c.l.b16 %v331
        %v855 = vunpack.c.l.b16 %v332
        %v856 = vunpack.c.l.b16 %v333
        %v857 = vunpack.c.l.b16 %v334
        %v858 = vunpack.c.l.b16 %v335
        %v859 = vunpack.c.l.b16 %v336
        %v860 = vunpack.c.l.b16 %v337
        %v861 = vunpack.c.l.b16 %v338
        %v862 = vunpack.c.l.b16 %v339
        %v863 = vunpack.c.l.b16 %v340
        %v864 = vunpack.c.l.b16 %v341
        %v865 = vunpack.c.l.b16 %v342
        %v866 = vunpack.c.l.b16 %v343
        %v867 = vunpack.c.l.b16 %v344
        %v868 = vunpack.c.l.b16 %v345
        %v869 = vunpack.c.l.b16 %v346
        %v870 = vunpack.c.l.b16 %v347
        %v871 = vunpack.c.l.b16 %v348
        %v872 = vunpack.c.l.b16 %v349
        %v873 = vunpack.c.l.b16 %v350
        %v874 = vunpack.c.l.b16 %v351
        %v875 = vunpack.c.l.b16 %v352
        %v876 = vunpack.c.l.b16 %v353
        %v877 = vunpack.c.l.b16 %v354
        %v878 = vunpack.c.l.b16 %v355
        %v879 = vunpack.c.l.b16 %v356
        %v880 = vunpack.c.l.b16 %v357
        %v881 = vunpack.c.l.b16 %v358
        %v882 = vunpack.c.l.b16 %v359
        %v883 = vunpack.c.l.b16 %v360
        %v884 = vunpack.c.l.b16 %v361
        %v885 = vunpack.c.l.b16 %v362
        %v886 = vunpack.c.l.b16 %v363
        %v887 = vunpack.c.l.b16 %v364
        %v888 = vunpack.c.l.b16 %v365
        %v889 = vunpack.c.l.b16 %v366
        %v890 = vunpack.c.l.b16 %v367
        %v891 = vunpack.c.l.b16 %v368
        %v892 = vunpack.c.l.b16 %v369
        %v893 = vunpack.c.l.b16 %v370
        %v894 = vunpack.c.l.b16 %v371
        %v895 = vunpack.c.l.b16 %v372
        %v896 = vunpack.c.l.b16 %v373
        %v897 = vunpack.c.l.b16 %v374
        %v898 = vunpack.c.l.b16 %v375
        %v899 = vunpack.c.l.b16 %v376
        %v900 = vunpack.c.l.b16 %v377
        %v901 = vunpack.c.l.b16 %v378
        %v902 = vunpack.c.l.b16 %v379
        %v903 = vunpack.c.l.b16 %v380
        %v904 = vunpack.c.l.b16 %v381
        %v905 = vunpack.c.l.b16 %v382
        %v906 = vunpack.c.l.b16 %v383
        %v907 = vunpack.c.l.b16 %v384
        %v908 = vunpack.c.l.b16 %v385
        %v909 = vunpack.c.l.b16 %v386
        %v910 = vunpack.c.l.b16 %v387
        %v911 = vunpack.c.l.b16 %v388
        %v912 = vunpack.c.l.b16 %v389
        %v913 = vunpack.c.l.b16 %v390
        %v914 = vunpack.c.l.b16 %v391
        %v915 = vunpack.c.l.b16 %v392
        %v916 = vunpack.c.l.b16 %v393
        %v917 = vunpack.c.l.b16 %v394
        %v918 = vunpack.c.l.b16 %v395
        %v919 = vunpack.c.l.b16 %v396
        %v920 = vunpack.c.l.b16 %v397
        %v921 = vunpack.c.l.b16 %v398
        %v922 = vunpack.c.l.b16 %v399
        %v923 = vunpack.c.l.b16 %v400
        %v924 = vunpack.c.l.b16 %v401
        %v925 = vunpack.c.l.b16 %v402
        %v926 = vunpack.c.l.b16 %v403
        %v927 = vunpack.c.l.b16 %v404
        %v928 = vunpack.c.l.b16 %v405
        %v929 = vunpack.c.l.b16 %v406
        %v930 = vunpack.c.l.b16 %v407
        %v931 = vunpack.c.l.b16 %v408
        %v932 = vunpack.c.l.b16 %v409
        %v933 = vunpack.c.l.b16 %v410
        %v934 = vunpack.c.l.b16 %v411
        %v935 = vunpack.c.l.b16 %v412
        %v936 = vunpack.c.l.b16 %v413
        %v937 = vunpack.c.l.b16 %v414
        %v938 = vunpack.c.l.b16 %v415
        %v939 = vunpack.c.l.b16 %v416
        %v940 = vunpack.c.l.b16 %v417
        %v941 = vunpack.c.l.b16 %v418
        %v942 = vunpack.c.l.b16 %v419
        %v943 = vunpack.c.l.b16 %v420
        %v944 = vunpack.c.l.b16 %v421
        %v945 = vunpack.c.l.b16 %v422
        %v946 = vunpack.c.l.b16 %v423
        %v947 = vunpack.c.l.b16 %v424
        %v948 = vunpack.c.l.b16 %v425
        %v949 = vunpack.c.l.b16 %v426
        %v950 = vunpack.c.l.b16 %v427
        %v951 = vunpack.c.l.b16 %v428
        %v952 = vunpack.c.l.b16 %v429
        %v953 = vunpack.c.l.b16 %v430
        %v954 = vunpack.c.l.b16 %v431
        %v955 = vunpack.c.l.b16 %v432
        %v956 = vunpack.c.l.b16 %v433
        %v957 = vunpack.c.l.b16 %v434
        %v958 = vunpack.c.l.b16 %v435
        %v959 = vunpack.c.l.b16 %v436
        %v960 = vunpack.c.l.b16 %v437
        %v961 = vunpack.c.l.b16 %v438
        %v962 = vunpack.c.l.b16 %v439
        %v963 = vunpack.c.l.b16 %v440
        %v964 = vunpack.c.l.b16 %v441
        %v965 = vunpack.c.l.b16 %v442
        %v966 = vunpack.c.l.b16 %v443
        %v967 = vunpack.c.l.b16 %v444
        %v968 = vunpack.c.l.b16 %v445
        %v969 = vunpack.c.l.b16 %v446
        %v970 = vunpack.c.l.b16 %v447
        %v971 = vunpack.c.l.b16 %v448
        %v972 = vunpack.c.l.b16 %v449
        %v973 = vunpack.c.l.b16 %v450
        %v974 = vunpack.c.l.b16 %v451
        %v975 = vunpack.c.l.b16 %v452
        %v976 = vunpack.c.l.b16 %v453
        %v977 = vunpack.c.l.b16 %v454
        %v978 = vunpack.c.l.b16 %v455
        %v979 = vunpack.c.l.b16 %v456
        %v980 = vunpack.c.l.b16 %v457
        %v981 = vunpack.c.l.b16 %v458
        %v982 = vunpack.c.l.b16 %v459
        %v983 = vunpack.c.l.b16 %v460
        %v984 = vunpack.c.l.b16 %v461
        %v985 = vunpack.c.l.b16 %v462
        %v986 = vunpack.c.l.b16 %v463
        %v987 = vunpack.c.l.b16 %v464
        %v988 = vunpack.c.l.b16 %v465
        %v989 = vunpack.c.l.b16 %v466
        %v990 = vunpack.c.l.b16 %v467
        %v991 = vunpack.c.l.b16 %v468
        %v992 = vunpack.c.l.b16 %v469
        %v993 = vunpack.c.l.b16 %v470
        %v994 = vunpack.c.l.b16 %v471
        %v995 = vunpack.c.l.b16 %v472
        %v996 = vunpack.c.l.b16 %v473
        %v997 = vunpack.c.l.b16 %v474
        %v998 = vunpack.c.l.b16 %v475
        %v999 = vunpack.c.l.b16 %v476
        %v1000 = vunpack.c.l.b16 %v477
        %v1001 = vunpack.c.l.b16 %v478
        %v1002 = vunpack.c.l.b16 %v479
        %v1003 = vunpack.c.l.b16 %v480
        %v1004 = vunpack.c.l.b16 %v481
        %v1005 = vunpack.c.l.b16 %v482
        %v1006 = vunpack.c.l.b16 %v483
        %v1007 = vunpack.c.l.b16 %v484
        %v1008 = vunpack.c.l.b16 %v485
        %v1009 = vunpack.c.l.b16 %v486
        %v1010 = vunpack.c.l.b16 %v487
        %v1011 = vunpack.c.l.b16 %v488
        %v1012 = vunpack.c.l.b16 %v489
        %v1013 = vunpack.c.l.b16 %v490
        %v1014 = vunpack.c.l.b16 %v491
        %v1015 = vunpack.c.l.b16 %v492
        %v1016 = vunpack.c.l.b16 %v493
        %v1017 = vpack.c.b16 %v762, %v761
        %v1018 = vpack.c.b16 %v764, %v763
        %v1019 = vpack.c.b16 %v766, %v765
        %v1020 = vpack.c.b16 %v768, %v767
        %v1021 = vpack.c.b16 %v770, %v769
        %v1022 = vpack.c.b16 %v772, %v771
        %v1023 = vpack.c.b16 %v774, %v773
        %v1024 = vpack.c.b16 %v776, %v775
        %v1025 = vpack.c.b16 %v778, %v777
        %v1026 = vpack.c.b16 %v780, %v779
        %v1027 = vpack.c.b16 %v782, %v781
        %v1028 = vpack.c.b16 %v784, %v783
        %v1029 = vpack.c.b16 %v786, %v785
        %v1030 = vpack.c.b16 %v788, %v787
        %v1031 = vpack.c.b16 %v790, %v789
        %v1032 = vpack.c.b16 %v792, %v791
        %v1033 = vpack.c.b16 %v794, %v793
        %v1034 = vpack.c.b16 %v796, %v795
        %v1035 = vpack.c.b16 %v798, %v797
        %v1036 = vpack.c.b16 %v800, %v799
        %v1037 = vpack.c.b16 %v802, %v801
        %v1038 = vpack.c.b16 %v804, %v803
        %v1039 = vpack.c.b16 %v806, %v805
        %v1040 = vpack.c.b16 %v808, %v807
        %v1041 = vpack.c.b16 %v810, %v809
        %v1042 = vpack.c.b16 %v812, %v811
        %v1043 = vpack.c.b16 %v814, %v813
        %v1044 = vpack.c.b16 %v816, %v815
        %v1045 = vpack.c.b16 %v818, %v817
        %v1046 = vpack.c.b16 %v820, %v819
        %v1047 = vpack.c.b16 %v822, %v821
        %v1048 = vpack.c.b16 %v824, %v823
        %v1049 = vpack.c.b16 %v826, %v825
        %v1050 = vpack.c.b16 %v828, %v827
        %v1051 = vpack.c.b16 %v830, %v829
        %v1052 = vpack.c.b16 %v832, %v831
        %v1053 = vpack.c.b16 %v834, %v833
        %v1054 = vpack.c.b16 %v836, %v835
        %v1055 = vpack.c.b16 %v838, %v837
        %v1056 = vpack.c.b16 %v840, %v839
        %v1057 = vpack.c.b16 %v842, %v841
        %v1058 = vpack.c.b16 %v844, %v843
        %v1059 = vpack.c.b16 %v846, %v845
        %v1060 = vpack.c.b16 %v848, %v847
        %v1061 = vpack.c.b16 %v850, %v849
        %v1062 = vpack.c.b16 %v852, %v851
        %v1063 = vpack.c.b16 %v854, %v853
        %v1064 = vpack.c.b16 %v856, %v855
        %v1065 = vpack.c.b16 %v858, %v857
        %v1066 = vpack.c.b16 %v860, %v859
        %v1067 = vpack.c.b16 %v862, %v861
        %v1068 = vpack.c.b16 %v864, %v863
        %v1069 = vpack.c.b16 %v866, %v865
        %v1070 = vpack.c.b16 %v868, %v867
        %v1071 = vpack.c.b16 %v870, %v869
        %v1072 = vpack.c.b16 %v872, %v871
        %v1073 = vpack.c.b16 %v874, %v873
        %v1074 = vpack.c.b16 %v876, %v875
        %v1075 = vpack.c.b16 %v878, %v877
        %v1076 = vpack.c.b16 %v880, %v879
        %v1077 = vpack.c.b16 %v882, %v881
        %v1078 = vpack.c.b16 %v884, %v883
        %v1079 = vpack.c.b16 %v886, %v885
        %v1080 = vpack.c.b16 %v888, %v887
        %v1081 = vpack.c.b16 %v890, %v889
        %v1082 = vpack.c.b16 %v892, %v891
        %v1083 = vpack.c.b16 %v894, %v893
        %v1084 = vpack.c.b16 %v896, %v895
        %v1085 = vpack.c.b16 %v898, %v897
        %v1086 = vpack.c.b16 %v900, %v899
        %v1087 = vpack.c.b16 %v902, %v901
        %v1088 = vpack.c.b16 %v904, %v903
        %v1089 = vpack.c.b16 %v906, %v905
        %v1090 = vpack.c.b16 %v908, %v907
        %v1091 = vpack.c.b16 %v910, %v909
        %v1092 = vpack.c.b16 %v912, %v911
        %v1093 = vpack.c.b16 %v914, %v913
        %v1094 = vpack.c.b16 %v916, %v915
        %v1095 = vpack.c.b16 %v918, %v917
        %v1096 = vpack.c.b16 %v920, %v919
        %v1097 = vpack.c.b16 %v922, %v921
        %v1098 = vpack.c.b16 %v924, %v923
        %v1099 = vpack.c.b16 %v926, %v925
        %v1100 = vpack.c.b16 %v928, %v927
        %v1101 = vpack.c.b16 %v930, %v929
        %v1102 = vpack.c.b16 %v932, %v931
        %v1103 = vpack.c.b16 %v934, %v933
        %v1104 = vpack.c.b16 %v936, %v935
        %v1105 = vpack.c.b16 %v938, %v937
        %v1106 = vpack.c.b16 %v940, %v939
        %v1107 = vpack.c.b16 %v942, %v941
        %v1108 = vpack.c.b16 %v944, %v943
        %v1109 = vpack.c.b16 %v946, %v945
        %v1110 = vpack.c.b16 %v948, %v947
        %v1111 = vpack.c.b16 %v950, %v949
        %v1112 = vpack.c.b16 %v952, %v951
        %v1113 = vpack.c.b16 %v954, %v953
        %v1114 = vpack.c.b16 %v956, %v955
        %v1115 = vpack.c.b16 %v958, %v957
        %v1116 = vpack.c.b16 %v960, %v959
        %v1117 = vpack.c.b16 %v962, %v961
        %v1118 = vpack.c.b16 %v964, %v963
        %v1119 = vpack.c.b16 %v966, %v965
        %v1120 = vpack.c.b16 %v968, %v967
        %v1121 = vpack.c.b16 %v970, %v969
        %v1122 = vpack.c.b16 %v972, %v971
        %v1123 = vpack.c.b16 %v974, %v973
        %v1124 = vpack.c.b16 %v976, %v975
        %v1125 = vpack.c.b16 %v978, %v977
        %v1126 = vpack.c.b16 %v980, %v979
        %v1127 = vpack.c.b16 %v982, %v981
        %v1128 = vpack.c.b16 %v984, %v983
        %v1129 = vpack.c.b16 %v986, %v985
        %v1130 = vpack.c.b16 %v988, %v987
        %v1131 = vpack.c.b16 %v990, %v989
        %v1132 = vpack.c.b16 %v992, %v991
        %v1133 = vpack.c.b16 %v994, %v993
        %v1134 = vpack.c.b16 %v996, %v995
        %v1135 = vpack.c.b16 %v998, %v997
        %v1136 = vpack.c.b16 %v1000, %v999
        %v1137 = vpack.c.b16 %v1002, %v1001
        %v1138 = vpack.c.b16 %v1004, %v1003
        %v1139 = vpack.c.b16 %v1006, %v1005
        %v1140 = vpack.c.b16 %v1008, %v1007
        %v1141 = vpack.c.b16 %v1010, %v1009
        %v1142 = vpack.c.b16 %v1012, %v1011
        %v1143 = vpack.c.b16 %v1014, %v1013
        %v1144 = vpack.c.b16 %v1016, %v1015
        %v1149 = vunpack.c.l.b16 %v494
        %v1150 = vunpack.c.l.b16 %v495
        %v1151 = vunpack.c.l.b16 %v496
        %v1152 = vunpack.c.l.b16 %v497
        %v1153 = vpack.c.b16 %v1150, %v1149
        %v1154 = vpack.c.b16 %v1152, %v1151
        %vm1156 = vcmask 220160
        %v1158 = vsel %vm1156, %v1017, 0
        %v1161 = vsel %vm1156, %v1018, 0
        %v1164 = vsel %vm1156, %v1019, 0
        %v1167 = vsel %vm1156, %v1020, 0
        %v1170 = vsel %vm1156, %v1021, 0
        %v1173 = vsel %vm1156, %v1022, 0
        %v1176 = vsel %vm1156, %v1023, 0
        %v1179 = vsel %vm1156, %v1024, 0
        %v1182 = vsel %vm1156, %v1025, 0
        %v1185 = vsel %vm1156, %v1026, 0
        %v1188 = vsel %vm1156, %v1027, 0
        %v1191 = vsel %vm1156, %v1028, 0
        %v1194 = vsel %vm1156, %v1029, 0
        %v1197 = vsel %vm1156, %v1030, 0
        %v1200 = vsel %vm1156, %v1031, 0
        %v1203 = vsel %vm1156, %v1032, 0
        %v1206 = vsel %vm1156, %v1033, 0
        %v1209 = vsel %vm1156, %v1034, 0
        %v1212 = vsel %vm1156, %v1035, 0
        %v1215 = vsel %vm1156, %v1036, 0
        %v1218 = vsel %vm1156, %v1037, 0
        %v1221 = vsel %vm1156, %v1038, 0
        %v1224 = vsel %vm1156, %v1039, 0
        %v1227 = vsel %vm1156, %v1040, 0
        %v1230 = vsel %vm1156, %v1041, 0
        %v1233 = vsel %vm1156, %v1042, 0
        %v1236 = vsel %vm1156, %v1043, 0
        %v1239 = vsel %vm1156, %v1044, 0
        %v1242 = vsel %vm1156, %v1045, 0
        %v1245 = vsel %vm1156, %v1046, 0
        %v1248 = vsel %vm1156, %v1047, 0
        %v1251 = vsel %vm1156, %v1048, 0
        %v1254 = vsel %vm1156, %v1049, 0
        %v1257 = vsel %vm1156, %v1050, 0
        %v1260 = vsel %vm1156, %v1051, 0
        %v1263 = vsel %vm1156, %v1052, 0
        %v1266 = vsel %vm1156, %v1053, 0
        %v1269 = vsel %vm1156, %v1054, 0
        %v1272 = vsel %vm1156, %v1055, 0
        %v1275 = vsel %vm1156, %v1056, 0
        %v1278 = vsel %vm1156, %v1057, 0
        %v1281 = vsel %vm1156, %v1058, 0
        %v1284 = vsel %vm1156, %v1059, 0
        %v1287 = vsel %vm1156, %v1060, 0
        %v1290 = vsel %vm1156, %v1061, 0
        %v1293 = vsel %vm1156, %v1062, 0
        %v1296 = vsel %vm1156, %v1063, 0
        %v1299 = vsel %vm1156, %v1064, 0
        %v1302 = vsel %vm1156, %v1065, 0
        %v1305 = vsel %vm1156, %v1066, 0
        %v1308 = vsel %vm1156, %v1067, 0
        %v1311 = vsel %vm1156, %v1068, 0
        %v1314 = vsel %vm1156, %v1069, 0
        %v1317 = vsel %vm1156, %v1070, 0
        %v1320 = vsel %vm1156, %v1071, 0
        %v1323 = vsel %vm1156, %v1072, 0
        %v1326 = vsel %vm1156, %v1073, 0
        %v1329 = vsel %vm1156, %v1074, 0
        %v1332 = vsel %vm1156, %v1075, 0
        %v1335 = vsel %vm1156, %v1076, 0
        %v1338 = vsel %vm1156, %v1077, 0
        %v1341 = vsel %vm1156, %v1078, 0
        %v1344 = vsel %vm1156, %v1079, 0
        %v1347 = vsel %vm1156, %v1080, 0
        %v1350 = vsel %vm1156, %v1081, 0
        %v1353 = vsel %vm1156, %v1082, 0
        %v1356 = vsel %vm1156, %v1083, 0
        %v1359 = vsel %vm1156, %v1084, 0
        %v1362 = vsel %vm1156, %v1085, 0
        %v1365 = vsel %vm1156, %v1086, 0
        %v1368 = vsel %vm1156, %v1087, 0
        %v1371 = vsel %vm1156, %v1088, 0
        %v1374 = vsel %vm1156, %v1089, 0
        %v1377 = vsel %vm1156, %v1090, 0
        %v1380 = vsel %vm1156, %v1091, 0
        %v1383 = vsel %vm1156, %v1092, 0
        %v1386 = vsel %vm1156, %v1093, 0
        %v1389 = vsel %vm1156, %v1094, 0
        %v1392 = vsel %vm1156, %v1095, 0
        %v1395 = vsel %vm1156, %v1096, 0
        %v1398 = vsel %vm1156, %v1097, 0
        %v1401 = vsel %vm1156, %v1098, 0
        %v1404 = vsel %vm1156, %v1099, 0
        %v1407 = vsel %vm1156, %v1100, 0
        %v1410 = vsel %vm1156, %v1101, 0
        %v1413 = vsel %vm1156, %v1102, 0
        %v1416 = vsel %vm1156, %v1103, 0
        %v1419 = vsel %vm1156, %v1104, 0
        %v1422 = vsel %vm1156, %v1105, 0
        %v1425 = vsel %vm1156, %v1106, 0
        %v1428 = vsel %vm1156, %v1107, 0
        %v1431 = vsel %vm1156, %v1108, 0
        %v1434 = vsel %vm1156, %v1109, 0
        %v1437 = vsel %vm1156, %v1110, 0
        %v1440 = vsel %vm1156, %v1111, 0
        %v1443 = vsel %vm1156, %v1112, 0
        %v1446 = vsel %vm1156, %v1113, 0
        %v1449 = vsel %vm1156, %v1114, 0
        %v1452 = vsel %vm1156, %v1115, 0
        %v1455 = vsel %vm1156, %v1116, 0
        %v1458 = vsel %vm1156, %v1117, 0
        %v1461 = vsel %vm1156, %v1118, 0
        %v1464 = vsel %vm1156, %v1119, 0
        %v1467 = vsel %vm1156, %v1120, 0
        %v1470 = vsel %vm1156, %v1121, 0
        %v1473 = vsel %vm1156, %v1122, 0
        %v1476 = vsel %vm1156, %v1123, 0
        %v1479 = vsel %vm1156, %v1124, 0
        %v1482 = vsel %vm1156, %v1125, 0
        %v1485 = vsel %vm1156, %v1126, 0
        %v1488 = vsel %vm1156, %v1127, 0
        %v1491 = vsel %vm1156, %v1128, 0
        %v1494 = vsel %vm1156, %v1129, 0
        %v1497 = vsel %vm1156, %v1130, 0
        %v1500 = vsel %vm1156, %v1131, 0
        %v1503 = vsel %vm1156, %v1132, 0
        %v1506 = vsel %vm1156, %v1133, 0
        %v1509 = vsel %vm1156, %v1134, 0
        %v1512 = vsel %vm1156, %v1135, 0
        %v1515 = vsel %vm1156, %v1136, 0
        %v1518 = vsel %vm1156, %v1137, 0
        %v1521 = vsel %vm1156, %v1138, 0
        %v1524 = vsel %vm1156, %v1139, 0
        %v1527 = vsel %vm1156, %v1140, 0
        %v1530 = vsel %vm1156, %v1141, 0
        %v1533 = vsel %vm1156, %v1142, 0
        %v1536 = vsel %vm1156, %v1143, 0
        %v1539 = vsel %vm1156, %v1144, 0
        %vm1541 = vcmask 1044480
        %vm1542 = vcmask 1045504
        %v1543 = vsel %vm1541, 4294967295, 65535
        %v1544 = vsel %vm1542, %v1543, 0
        %v1546 = vand.u32 %v1154, %v1544
        %1548 = vmatprep.subr.bf16.mxu0 0
        %1549 = vmatpush1.bf16.msra.mxu0 %v1153
        %1550 = vmatprep.subr.bf16.mxu0 0
        %1551 = vmatpush1.bf16.msra.mxu0 %v1546
        %1552 = vmatprep.subr.bf16.mxu0 0
        %1553 = vmatpush1.bf16.msra.mxu0 0
        %1554 = vmatprep.subr.bf16.mxu0 0
        %1555 = vmatpush1.bf16.msra.mxu0 0
        %1556 = vmatprep.subr.bf16.mxu0 0
        %1557 = vmatpush1.bf16.msra.mxu0 0
        %1558 = vmatprep.subr.bf16.mxu0 0
        %1559 = vmatpush1.bf16.msra.mxu0 0
        %1560 = vmatprep.subr.bf16.mxu0 0
        %1561 = vmatpush1.bf16.msra.mxu0 0
        %1562 = vmatprep.subr.bf16.mxu0 0
        %1563 = vmatpush1.bf16.msra.mxu0 0
        %1564 = vmatprep.subr.bf16.mxu0 0
        %1565 = vmatpush1.bf16.msra.mxu0 0
        %1566 = vmatprep.subr.bf16.mxu0 0
        %1567 = vmatpush1.bf16.msra.mxu0 0
        %1568 = vmatprep.subr.bf16.mxu0 0
        %1569 = vmatpush1.bf16.msra.mxu0 0
        %1570 = vmatprep.subr.bf16.mxu0 0
        %1571 = vmatpush1.bf16.msra.mxu0 0
        %1572 = vmatprep.subr.bf16.mxu0 0
        %1573 = vmatpush1.bf16.msra.mxu0 0
        %1574 = vmatprep.subr.bf16.mxu0 0
        %1575 = vmatpush1.bf16.msra.mxu0 0
        %1576 = vmatprep.subr.bf16.mxu0 0
        %1577 = vmatpush1.bf16.msra.mxu0 0
        %1578 = vmatprep.subr.bf16.mxu0 0
        %1579 = vmatpush1.bf16.msra.mxu0 0
        %1580 = vmatprep.mubr.bf16.mxu0 0
        %1581 = vmatmul.mubr.bf16.gmra.mrb[0].mxu0 %v1158
        %v1582 = vpop.f32.mrb[0].mxu0
        %v1583 = vadd.f32 %v503, %v1582
        %v1584 = vpop.f32.mrb[0].mxu0
        %v1585 = vpop.f32.mrb[0].mxu0
        %v1586 = vadd.f32 %v503, %v1585
        %v1587 = vpop.f32.mrb[0].mxu0
        %1588 = vmatprep.mubr.bf16.mxu0 0
        %1589 = vmatmul.mubr.bf16.gmra.mrb[0].mxu0 %v1161
        %v1590 = vpop.f32.mrb[0].mxu0
        %v1591 = vadd.f32 %v503, %v1590
        %v1592 = vpop.f32.mrb[0].mxu0
        %v1593 = vpop.f32.mrb[0].mxu0
        %v1594 = vadd.f32 %v503, %v1593
        %v1595 = vpop.f32.mrb[0].mxu0
        %1596 = vmatprep.mubr.bf16.mxu0 0
        %1597 = vmatmul.mubr.bf16.gmra.mrb[0].mxu0 %v1164
        %v1598 = vpop.f32.mrb[0].mxu0
        %v1599 = vadd.f32 %v503, %v1598
        %v1600 = vpop.f32.mrb[0].mxu0
        %v1601 = vpop.f32.mrb[0].mxu0
        %v1602 = vadd.f32 %v503, %v1601
        %v1603 = vpop.f32.mrb[0].mxu0
        %1604 = vmatprep.mubr.bf16.mxu0 0
        %1605 = vmatmul.mubr.bf16.gmra.mrb[0].mxu0 %v1167
        %v1606 = vpop.f32.mrb[0].mxu0
        %v1607 = vadd.f32 %v503, %v1606
        %v1608 = vpop.f32.mrb[0].mxu0
        %v1609 = vpop.f32.mrb[0].mxu0
        %v1610 = vadd.f32 %v503, %v1609
        %v1611 = vpop.f32.mrb[0].mxu0
        %1612 = vmatprep.mubr.bf16.mxu0 0
        %1613 = vmatmul.mubr.bf16.gmra.mrb[0].mxu0 %v1170
        %v1614 = vpop.f32.mrb[0].mxu0
        %v1615 = vadd.f32 %v503, %v1614
        %v1616 = vpop.f32.mrb[0].mxu0
        %v1617 = vpop.f32.mrb[0].mxu0
        %v1618 = vadd.f32 %v503, %v1617
        %v1619 = vpop.f32.mrb[0].mxu0
        %1620 = vmatprep.mubr.bf16.mxu0 0
        %1621 = vmatmul.mubr.bf16.gmra.mrb[0].mxu0 %v1173
        %v1622 = vpop.f32.mrb[0].mxu0
        %v1623 = vadd.f32 %v503, %v1622
        %v1624 = vpop.f32.mrb[0].mxu0
        %v1625 = vpop.f32.mrb[0].mxu0
        %v1626 = vadd.f32 %v503, %v1625
        %v1627 = vpop.f32.mrb[0].mxu0
        %1628 = vmatprep.mubr.bf16.mxu0 0
        %1629 = vmatmul.mubr.bf16.gmra.mrb[0].mxu0 %v1176
        %v1630 = vpop.f32.mrb[0].mxu0
        %v1631 = vadd.f32 %v503, %v1630
        %v1632 = vpop.f32.mrb[0].mxu0
        %v1633 = vpop.f32.mrb[0].mxu0
        %v1634 = vadd.f32 %v503, %v1633
        %v1635 = vpop.f32.mrb[0].mxu0
        %1636 = vmatprep.mubr.bf16.mxu0 0
        %1637 = vmatmul.mubr.bf16.gmra.mrb[0].mxu0 %v1179
        %v1638 = vpop.f32.mrb[0].mxu0
        %v1639 = vadd.f32 %v503, %v1638
        %v1640 = vpop.f32.mrb[0].mxu0
        %v1641 = vpop.f32.mrb[0].mxu0
        %v1642 = vadd.f32 %v503, %v1641
        %v1643 = vpop.f32.mrb[0].mxu0
        %1644 = vmatprep.mubr.bf16.mxu0 0
        %1645 = vmatmul.mubr.bf16.gmra.mrb[0].mxu0 %v1182
        %v1646 = vpop.f32.mrb[0].mxu0
        %v1647 = vadd.f32 %v503, %v1646
        %v1648 = vpop.f32.mrb[0].mxu0
        %v1649 = vpop.f32.mrb[0].mxu0
        %v1650 = vadd.f32 %v503, %v1649
        %v1651 = vpop.f32.mrb[0].mxu0
        %1652 = vmatprep.mubr.bf16.mxu0 0
        %1653 = vmatmul.mubr.bf16.gmra.mrb[0].mxu0 %v1185
        %v1654 = vpop.f32.mrb[0].mxu0
        %v1655 = vadd.f32 %v503, %v1654
        %v1656 = vpop.f32.mrb[0].mxu0
        %v1657 = vpop.f32.mrb[0].mxu0
        %v1658 = vadd.f32 %v503, %v1657
        %v1659 = vpop.f32.mrb[0].mxu0
        %1660 = vmatprep.mubr.bf16.mxu0 0
        %1661 = vmatmul.mubr.bf16.gmra.mrb[0].mxu0 %v1188
        %v1662 = vpop.f32.mrb[0].mxu0
        %v1663 = vadd.f32 %v503, %v1662
        %v1664 = vpop.f32.mrb[0].mxu0
        %v1665 = vpop.f32.mrb[0].mxu0
        %v1666 = vadd.f32 %v503, %v1665
        %v1667 = vpop.f32.mrb[0].mxu0
        %1668 = vmatprep.mubr.bf16.mxu0 0
        %1669 = vmatmul.mubr.bf16.gmra.mrb[0].mxu0 %v1191
        %v1670 = vpop.f32.mrb[0].mxu0
        %v1671 = vadd.f32 %v503, %v1670
        %v1672 = vpop.f32.mrb[0].mxu0
        %v1673 = vpop.f32.mrb[0].mxu0
        %v1674 = vadd.f32 %v503, %v1673
        %v1675 = vpop.f32.mrb[0].mxu0
        %1676 = vmatprep.mubr.bf16.mxu0 0
        %1677 = vmatmul.mubr.bf16.gmra.mrb[0].mxu0 %v1194
        %v1678 = vpop.f32.mrb[0].mxu0
        %v1679 = vadd.f32 %v503, %v1678
        %v1680 = vpop.f32.mrb[0].mxu0
        %v1681 = vpop.f32.mrb[0].mxu0
        %v1682 = vadd.f32 %v503, %v1681
        %v1683 = vpop.f32.mrb[0].mxu0
        %1684 = vmatprep.mubr.bf16.mxu0 0
        %1685 = vmatmul.mubr.bf16.gmra.mrb[0].mxu0 %v1197
        %v1686 = vpop.f32.mrb[0].mxu0
        %v1687 = vadd.f32 %v503, %v1686
        %v1688 = vpop.f32.mrb[0].mxu0
        %v1689 = vpop.f32.mrb[0].mxu0
        %v1690 = vadd.f32 %v503, %v1689
        %v1691 = vpop.f32.mrb[0].mxu0
        %1692 = vmatprep.mubr.bf16.mxu0 0
        %1693 = vmatmul.mubr.bf16.gmra.mrb[0].mxu0 %v1200
        %v1694 = vpop.f32.mrb[0].mxu0
        %v1695 = vadd.f32 %v503, %v1694
        %v1696 = vpop.f32.mrb[0].mxu0
        %v1697 = vpop.f32.mrb[0].mxu0
        %v1698 = vadd.f32 %v503, %v1697
        %v1699 = vpop.f32.mrb[0].mxu0
        %1700 = vmatprep.mubr.bf16.mxu0 0
        %1701 = vmatmul.mubr.bf16.gmra.mrb[0].mxu0 %v1203
        %v1702 = vpop.f32.mrb[0].mxu0
        %v1703 = vadd.f32 %v503, %v1702
        %v1704 = vpop.f32.mrb[0].mxu0
        %v1705 = vpop.f32.mrb[0].mxu0
        %v1706 = vadd.f32 %v503, %v1705
        %v1707 = vpop.f32.mrb[0].mxu0
        %1708 = vmatprep.mubr.bf16.mxu0 0
        %1709 = vmatmul.mubr.bf16.gmra.mrb[0].mxu0 %v1206
        %v1710 = vpop.f32.mrb[0].mxu0
        %v1711 = vadd.f32 %v503, %v1710
        %v1712 = vpop.f32.mrb[0].mxu0
        %v1713 = vpop.f32.mrb[0].mxu0
        %v1714 = vadd.f32 %v503, %v1713
        %v1715 = vpop.f32.mrb[0].mxu0
        %1716 = vmatprep.mubr.bf16.mxu0 0
        %1717 = vmatmul.mubr.bf16.gmra.mrb[0].mxu0 %v1209
        %v1718 = vpop.f32.mrb[0].mxu0
        %v1719 = vadd.f32 %v503, %v1718
        %v1720 = vpop.f32.mrb[0].mxu0
        %v1721 = vpop.f32.mrb[0].mxu0
        %v1722 = vadd.f32 %v503, %v1721
        %v1723 = vpop.f32.mrb[0].mxu0
        %1724 = vmatprep.mubr.bf16.mxu0 0
        %1725 = vmatmul.mubr.bf16.gmra.mrb[0].mxu0 %v1212
        %v1726 = vpop.f32.mrb[0].mxu0
        %v1727 = vadd.f32 %v503, %v1726
        %v1728 = vpop.f32.mrb[0].mxu0
        %v1729 = vpop.f32.mrb[0].mxu0
        %v1730 = vadd.f32 %v503, %v1729
        %v1731 = vpop.f32.mrb[0].mxu0
        %1732 = vmatprep.mubr.bf16.mxu0 0
        %1733 = vmatmul.mubr.bf16.gmra.mrb[0].mxu0 %v1215
        %v1734 = vpop.f32.mrb[0].mxu0
        %v1735 = vadd.f32 %v503, %v1734
        %v1736 = vpop.f32.mrb[0].mxu0
        %v1737 = vpop.f32.mrb[0].mxu0
        %v1738 = vadd.f32 %v503, %v1737
        %v1739 = vpop.f32.mrb[0].mxu0
        %1740 = vmatprep.mubr.bf16.mxu0 0
        %1741 = vmatmul.mubr.bf16.gmra.mrb[0].mxu0 %v1218
        %v1742 = vpop.f32.mrb[0].mxu0
        %v1743 = vadd.f32 %v503, %v1742
        %v1744 = vpop.f32.mrb[0].mxu0
        %v1745 = vpop.f32.mrb[0].mxu0
        %v1746 = vadd.f32 %v503, %v1745
        %v1747 = vpop.f32.mrb[0].mxu0
        %1748 = vmatprep.mubr.bf16.mxu0 0
        %1749 = vmatmul.mubr.bf16.gmra.mrb[0].mxu0 %v1221
        %v1750 = vpop.f32.mrb[0].mxu0
        %v1751 = vadd.f32 %v503, %v1750
        %v1752 = vpop.f32.mrb[0].mxu0
        %v1753 = vpop.f32.mrb[0].mxu0
        %v1754 = vadd.f32 %v503, %v1753
        %v1755 = vpop.f32.mrb[0].mxu0
        %1756 = vmatprep.mubr.bf16.mxu0 0
        %1757 = vmatmul.mubr.bf16.gmra.mrb[0].mxu0 %v1224
        %v1758 = vpop.f32.mrb[0].mxu0
        %v1759 = vadd.f32 %v503, %v1758
        %v1760 = vpop.f32.mrb[0].mxu0
        %v1761 = vpop.f32.mrb[0].mxu0
        %v1762 = vadd.f32 %v503, %v1761
        %v1763 = vpop.f32.mrb[0].mxu0
        %1764 = vmatprep.mubr.bf16.mxu0 0
        %1765 = vmatmul.mubr.bf16.gmra.mrb[0].mxu0 %v1227
        %v1766 = vpop.f32.mrb[0].mxu0
        %v1767 = vadd.f32 %v503, %v1766
        %v1768 = vpop.f32.mrb[0].mxu0
        %v1769 = vpop.f32.mrb[0].mxu0
        %v1770 = vadd.f32 %v503, %v1769
        %v1771 = vpop.f32.mrb[0].mxu0
        %1772 = vmatprep.mubr.bf16.mxu0 0
        %1773 = vmatmul.mubr.bf16.gmra.mrb[0].mxu0 %v1230
        %v1774 = vpop.f32.mrb[0].mxu0
        %v1775 = vadd.f32 %v503, %v1774
        %v1776 = vpop.f32.mrb[0].mxu0
        %v1777 = vpop.f32.mrb[0].mxu0
        %v1778 = vadd.f32 %v503, %v1777
        %v1779 = vpop.f32.mrb[0].mxu0
        %1780 = vmatprep.mubr.bf16.mxu0 0
        %1781 = vmatmul.mubr.bf16.gmra.mrb[0].mxu0 %v1233
        %v1782 = vpop.f32.mrb[0].mxu0
        %v1783 = vadd.f32 %v503, %v1782
        %v1784 = vpop.f32.mrb[0].mxu0
        %v1785 = vpop.f32.mrb[0].mxu0
        %v1786 = vadd.f32 %v503, %v1785
        %v1787 = vpop.f32.mrb[0].mxu0
        %1788 = vmatprep.mubr.bf16.mxu0 0
        %1789 = vmatmul.mubr.bf16.gmra.mrb[0].mxu0 %v1236
        %v1790 = vpop.f32.mrb[0].mxu0
        %v1791 = vadd.f32 %v503, %v1790
        %v1792 = vpop.f32.mrb[0].mxu0
        %v1793 = vpop.f32.mrb[0].mxu0
        %v1794 = vadd.f32 %v503, %v1793
        %v1795 = vpop.f32.mrb[0].mxu0
        %1796 = vmatprep.mubr.bf16.mxu0 0
        %1797 = vmatmul.mubr.bf16.gmra.mrb[0].mxu0 %v1239
        %v1798 = vpop.f32.mrb[0].mxu0
        %v1799 = vadd.f32 %v503, %v1798
        %v1800 = vpop.f32.mrb[0].mxu0
        %v1801 = vpop.f32.mrb[0].mxu0
        %v1802 = vadd.f32 %v503, %v1801
        %v1803 = vpop.f32.mrb[0].mxu0
        %1804 = vmatprep.mubr.bf16.mxu0 0
        %1805 = vmatmul.mubr.bf16.gmra.mrb[0].mxu0 %v1242
        %v1806 = vpop.f32.mrb[0].mxu0
        %v1807 = vadd.f32 %v503, %v1806
        %v1808 = vpop.f32.mrb[0].mxu0
        %v1809 = vpop.f32.mrb[0].mxu0
        %v1810 = vadd.f32 %v503, %v1809
        %v1811 = vpop.f32.mrb[0].mxu0
        %1812 = vmatprep.mubr.bf16.mxu0 0
        %1813 = vmatmul.mubr.bf16.gmra.mrb[0].mxu0 %v1245
        %v1814 = vpop.f32.mrb[0].mxu0
        %v1815 = vadd.f32 %v503, %v1814
        %v1816 = vpop.f32.mrb[0].mxu0
        %v1817 = vpop.f32.mrb[0].mxu0
        %v1818 = vadd.f32 %v503, %v1817
        %v1819 = vpop.f32.mrb[0].mxu0
        %1820 = vmatprep.mubr.bf16.mxu0 0
        %1821 = vmatmul.mubr.bf16.gmra.mrb[0].mxu0 %v1248
        %v1822 = vpop.f32.mrb[0].mxu0
        %v1823 = vadd.f32 %v503, %v1822
        %v1824 = vpop.f32.mrb[0].mxu0
        %v1825 = vpop.f32.mrb[0].mxu0
        %v1826 = vadd.f32 %v503, %v1825
        %v1827 = vpop.f32.mrb[0].mxu0
        %1828 = vmatprep.mubr.bf16.mxu0 0
        %1829 = vmatmul.mubr.bf16.gmra.mrb[0].mxu0 %v1251
        %v1830 = vpop.f32.mrb[0].mxu0
        %v1831 = vadd.f32 %v503, %v1830
        %v1832 = vpop.f32.mrb[0].mxu0
        %v1833 = vpop.f32.mrb[0].mxu0
        %v1834 = vadd.f32 %v503, %v1833
        %v1835 = vpop.f32.mrb[0].mxu0
        %1836 = vmatprep.mubr.bf16.mxu0 0
        %1837 = vmatmul.mubr.bf16.gmra.mrb[0].mxu0 %v1254
        %v1838 = vpop.f32.mrb[0].mxu0
        %v1839 = vadd.f32 %v503, %v1838
        %v1840 = vpop.f32.mrb[0].mxu0
        %v1841 = vpop.f32.mrb[0].mxu0
        %v1842 = vadd.f32 %v503, %v1841
        %v1843 = vpop.f32.mrb[0].mxu0
        %1844 = vmatprep.mubr.bf16.mxu0 0
        %1845 = vmatmul.mubr.bf16.gmra.mrb[0].mxu0 %v1257
        %v1846 = vpop.f32.mrb[0].mxu0
        %v1847 = vadd.f32 %v503, %v1846
        %v1848 = vpop.f32.mrb[0].mxu0
        %v1849 = vpop.f32.mrb[0].mxu0
        %v1850 = vadd.f32 %v503, %v1849
        %v1851 = vpop.f32.mrb[0].mxu0
        %1852 = vmatprep.mubr.bf16.mxu0 0
        %1853 = vmatmul.mubr.bf16.gmra.mrb[0].mxu0 %v1260
        %v1854 = vpop.f32.mrb[0].mxu0
        %v1855 = vadd.f32 %v503, %v1854
        %v1856 = vpop.f32.mrb[0].mxu0
        %v1857 = vpop.f32.mrb[0].mxu0
        %v1858 = vadd.f32 %v503, %v1857
        %v1859 = vpop.f32.mrb[0].mxu0
        %1860 = vmatprep.mubr.bf16.mxu0 0
        %1861 = vmatmul.mubr.bf16.gmra.mrb[0].mxu0 %v1263
        %v1862 = vpop.f32.mrb[0].mxu0
        %v1863 = vadd.f32 %v503, %v1862
        %v1864 = vpop.f32.mrb[0].mxu0
        %v1865 = vpop.f32.mrb[0].mxu0
        %v1866 = vadd.f32 %v503, %v1865
        %v1867 = vpop.f32.mrb[0].mxu0
        %1868 = vmatprep.mubr.bf16.mxu0 0
        %1869 = vmatmul.mubr.bf16.gmra.mrb[0].mxu0 %v1266
        %v1870 = vpop.f32.mrb[0].mxu0
        %v1871 = vadd.f32 %v503, %v1870
        %v1872 = vpop.f32.mrb[0].mxu0
        %v1873 = vpop.f32.mrb[0].mxu0
        %v1874 = vadd.f32 %v503, %v1873
        %v1875 = vpop.f32.mrb[0].mxu0
        %1876 = vmatprep.mubr.bf16.mxu0 0
        %1877 = vmatmul.mubr.bf16.gmra.mrb[0].mxu0 %v1269
        %v1878 = vpop.f32.mrb[0].mxu0
        %v1879 = vadd.f32 %v503, %v1878
        %v1880 = vpop.f32.mrb[0].mxu0
        %v1881 = vpop.f32.mrb[0].mxu0
        %v1882 = vadd.f32 %v503, %v1881
        %v1883 = vpop.f32.mrb[0].mxu0
        %1884 = vmatprep.mubr.bf16.mxu0 0
        %1885 = vmatmul.mubr.bf16.gmra.mrb[0].mxu0 %v1272
        %v1886 = vpop.f32.mrb[0].mxu0
        %v1887 = vadd.f32 %v503, %v1886
        %v1888 = vpop.f32.mrb[0].mxu0
        %v1889 = vpop.f32.mrb[0].mxu0
        %v1890 = vadd.f32 %v503, %v1889
        %v1891 = vpop.f32.mrb[0].mxu0
        %1892 = vmatprep.mubr.bf16.mxu0 0
        %1893 = vmatmul.mubr.bf16.gmra.mrb[0].mxu0 %v1275
        %v1894 = vpop.f32.mrb[0].mxu0
        %v1895 = vadd.f32 %v503, %v1894
        %v1896 = vpop.f32.mrb[0].mxu0
        %v1897 = vpop.f32.mrb[0].mxu0
        %v1898 = vadd.f32 %v503, %v1897
        %v1899 = vpop.f32.mrb[0].mxu0
        %1900 = vmatprep.mubr.bf16.mxu0 0
        %1901 = vmatmul.mubr.bf16.gmra.mrb[0].mxu0 %v1278
        %v1902 = vpop.f32.mrb[0].mxu0
        %v1903 = vadd.f32 %v503, %v1902
        %v1904 = vpop.f32.mrb[0].mxu0
        %v1905 = vpop.f32.mrb[0].mxu0
        %v1906 = vadd.f32 %v503, %v1905
        %v1907 = vpop.f32.mrb[0].mxu0
        %1908 = vmatprep.mubr.bf16.mxu0 0
        %1909 = vmatmul.mubr.bf16.gmra.mrb[0].mxu0 %v1281
        %v1910 = vpop.f32.mrb[0].mxu0
        %v1911 = vadd.f32 %v503, %v1910
        %v1912 = vpop.f32.mrb[0].mxu0
        %v1913 = vpop.f32.mrb[0].mxu0
        %v1914 = vadd.f32 %v503, %v1913
        %v1915 = vpop.f32.mrb[0].mxu0
        %1916 = vmatprep.mubr.bf16.mxu0 0
        %1917 = vmatmul.mubr.bf16.gmra.mrb[0].mxu0 %v1284
        %v1918 = vpop.f32.mrb[0].mxu0
        %v1919 = vadd.f32 %v503, %v1918
        %v1920 = vpop.f32.mrb[0].mxu0
        %v1921 = vpop.f32.mrb[0].mxu0
        %v1922 = vadd.f32 %v503, %v1921
        %v1923 = vpop.f32.mrb[0].mxu0
        %1924 = vmatprep.mubr.bf16.mxu0 0
        %1925 = vmatmul.mubr.bf16.gmra.mrb[0].mxu0 %v1287
        %v1926 = vpop.f32.mrb[0].mxu0
        %v1927 = vadd.f32 %v503, %v1926
        %v1928 = vpop.f32.mrb[0].mxu0
        %v1929 = vpop.f32.mrb[0].mxu0
        %v1930 = vadd.f32 %v503, %v1929
        %v1931 = vpop.f32.mrb[0].mxu0
        %1932 = vmatprep.mubr.bf16.mxu0 0
        %1933 = vmatmul.mubr.bf16.gmra.mrb[0].mxu0 %v1290
        %v1934 = vpop.f32.mrb[0].mxu0
        %v1935 = vadd.f32 %v503, %v1934
        %v1936 = vpop.f32.mrb[0].mxu0
        %v1937 = vpop.f32.mrb[0].mxu0
        %v1938 = vadd.f32 %v503, %v1937
        %v1939 = vpop.f32.mrb[0].mxu0
        %1940 = vmatprep.mubr.bf16.mxu0 0
        %1941 = vmatmul.mubr.bf16.gmra.mrb[0].mxu0 %v1293
        %v1942 = vpop.f32.mrb[0].mxu0
        %v1943 = vadd.f32 %v503, %v1942
        %v1944 = vpop.f32.mrb[0].mxu0
        %v1945 = vpop.f32.mrb[0].mxu0
        %v1946 = vadd.f32 %v503, %v1945
        %v1947 = vpop.f32.mrb[0].mxu0
        %1948 = vmatprep.mubr.bf16.mxu0 0
        %1949 = vmatmul.mubr.bf16.gmra.mrb[0].mxu0 %v1296
        %v1950 = vpop.f32.mrb[0].mxu0
        %v1951 = vadd.f32 %v503, %v1950
        %v1952 = vpop.f32.mrb[0].mxu0
        %v1953 = vpop.f32.mrb[0].mxu0
        %v1954 = vadd.f32 %v503, %v1953
        %v1955 = vpop.f32.mrb[0].mxu0
        %1956 = vmatprep.mubr.bf16.mxu0 0
        %1957 = vmatmul.mubr.bf16.gmra.mrb[0].mxu0 %v1299
        %v1958 = vpop.f32.mrb[0].mxu0
        %v1959 = vadd.f32 %v503, %v1958
        %v1960 = vpop.f32.mrb[0].mxu0
        %v1961 = vpop.f32.mrb[0].mxu0
        %v1962 = vadd.f32 %v503, %v1961
        %v1963 = vpop.f32.mrb[0].mxu0
        %1964 = vmatprep.mubr.bf16.mxu0 0
        %1965 = vmatmul.mubr.bf16.gmra.mrb[0].mxu0 %v1302
        %v1966 = vpop.f32.mrb[0].mxu0
        %v1967 = vadd.f32 %v503, %v1966
        %v1968 = vpop.f32.mrb[0].mxu0
        %v1969 = vpop.f32.mrb[0].mxu0
        %v1970 = vadd.f32 %v503, %v1969
        %v1971 = vpop.f32.mrb[0].mxu0
        %1972 = vmatprep.mubr.bf16.mxu0 0
        %1973 = vmatmul.mubr.bf16.gmra.mrb[0].mxu0 %v1305
        %v1974 = vpop.f32.mrb[0].mxu0
        %v1975 = vadd.f32 %v503, %v1974
        %v1976 = vpop.f32.mrb[0].mxu0
        %v1977 = vpop.f32.mrb[0].mxu0
        %v1978 = vadd.f32 %v503, %v1977
        %v1979 = vpop.f32.mrb[0].mxu0
        %1980 = vmatprep.mubr.bf16.mxu0 0
        %1981 = vmatmul.mubr.bf16.gmra.mrb[0].mxu0 %v1308
        %v1982 = vpop.f32.mrb[0].mxu0
        %v1983 = vadd.f32 %v503, %v1982
        %v1984 = vpop.f32.mrb[0].mxu0
        %v1985 = vpop.f32.mrb[0].mxu0
        %v1986 = vadd.f32 %v503, %v1985
        %v1987 = vpop.f32.mrb[0].mxu0
        %1988 = vmatprep.mubr.bf16.mxu0 0
        %1989 = vmatmul.mubr.bf16.gmra.mrb[0].mxu0 %v1311
        %v1990 = vpop.f32.mrb[0].mxu0
        %v1991 = vadd.f32 %v503, %v1990
        %v1992 = vpop.f32.mrb[0].mxu0
        %v1993 = vpop.f32.mrb[0].mxu0
        %v1994 = vadd.f32 %v503, %v1993
        %v1995 = vpop.f32.mrb[0].mxu0
        %1996 = vmatprep.mubr.bf16.mxu0 0
        %1997 = vmatmul.mubr.bf16.gmra.mrb[0].mxu0 %v1314
        %v1998 = vpop.f32.mrb[0].mxu0
        %v1999 = vadd.f32 %v503, %v1998
        %v2000 = vpop.f32.mrb[0].mxu0
        %v2001 = vpop.f32.mrb[0].mxu0
        %v2002 = vadd.f32 %v503, %v2001
        %v2003 = vpop.f32.mrb[0].mxu0
        %2004 = vmatprep.mubr.bf16.mxu0 0
        %2005 = vmatmul.mubr.bf16.gmra.mrb[0].mxu0 %v1317
        %v2006 = vpop.f32.mrb[0].mxu0
        %v2007 = vadd.f32 %v503, %v2006
        %v2008 = vpop.f32.mrb[0].mxu0
        %v2009 = vpop.f32.mrb[0].mxu0
        %v2010 = vadd.f32 %v503, %v2009
        %v2011 = vpop.f32.mrb[0].mxu0
        %2012 = vmatprep.mubr.bf16.mxu0 0
        %2013 = vmatmul.mubr.bf16.gmra.mrb[0].mxu0 %v1320
        %v2014 = vpop.f32.mrb[0].mxu0
        %v2015 = vadd.f32 %v503, %v2014
        %v2016 = vpop.f32.mrb[0].mxu0
        %v2017 = vpop.f32.mrb[0].mxu0
        %v2018 = vadd.f32 %v503, %v2017
        %v2019 = vpop.f32.mrb[0].mxu0
        %2020 = vmatprep.mubr.bf16.mxu0 0
        %2021 = vmatmul.mubr.bf16.gmra.mrb[0].mxu0 %v1323
        %v2022 = vpop.f32.mrb[0].mxu0
        %v2023 = vadd.f32 %v503, %v2022
        %v2024 = vpop.f32.mrb[0].mxu0
        %v2025 = vpop.f32.mrb[0].mxu0
        %v2026 = vadd.f32 %v503, %v2025
        %v2027 = vpop.f32.mrb[0].mxu0
        %2028 = vmatprep.mubr.bf16.mxu0 0
        %2029 = vmatmul.mubr.bf16.gmra.mrb[0].mxu0 %v1326
        %v2030 = vpop.f32.mrb[0].mxu0
        %v2031 = vadd.f32 %v503, %v2030
        %v2032 = vpop.f32.mrb[0].mxu0
        %v2033 = vpop.f32.mrb[0].mxu0
        %v2034 = vadd.f32 %v503, %v2033
        %v2035 = vpop.f32.mrb[0].mxu0
        %2036 = vmatprep.mubr.bf16.mxu0 0
        %2037 = vmatmul.mubr.bf16.gmra.mrb[0].mxu0 %v1329
        %v2038 = vpop.f32.mrb[0].mxu0
        %v2039 = vadd.f32 %v503, %v2038
        %v2040 = vpop.f32.mrb[0].mxu0
        %v2041 = vpop.f32.mrb[0].mxu0
        %v2042 = vadd.f32 %v503, %v2041
        %v2043 = vpop.f32.mrb[0].mxu0
        %2044 = vmatprep.mubr.bf16.mxu0 0
        %2045 = vmatmul.mubr.bf16.gmra.mrb[0].mxu0 %v1332
        %v2046 = vpop.f32.mrb[0].mxu0
        %v2047 = vadd.f32 %v503, %v2046
        %v2048 = vpop.f32.mrb[0].mxu0
        %v2049 = vpop.f32.mrb[0].mxu0
        %v2050 = vadd.f32 %v503, %v2049
        %v2051 = vpop.f32.mrb[0].mxu0
        %2052 = vmatprep.mubr.bf16.mxu0 0
        %2053 = vmatmul.mubr.bf16.gmra.mrb[0].mxu0 %v1335
        %v2054 = vpop.f32.mrb[0].mxu0
        %v2055 = vadd.f32 %v503, %v2054
        %v2056 = vpop.f32.mrb[0].mxu0
        %v2057 = vpop.f32.mrb[0].mxu0
        %v2058 = vadd.f32 %v503, %v2057
        %v2059 = vpop.f32.mrb[0].mxu0
        %2060 = vmatprep.mubr.bf16.mxu0 0
        %2061 = vmatmul.mubr.bf16.gmra.mrb[0].mxu0 %v1338
        %v2062 = vpop.f32.mrb[0].mxu0
        %v2063 = vadd.f32 %v503, %v2062
        %v2064 = vpop.f32.mrb[0].mxu0
        %v2065 = vpop.f32.mrb[0].mxu0
        %v2066 = vadd.f32 %v503, %v2065
        %v2067 = vpop.f32.mrb[0].mxu0
        %2068 = vmatprep.mubr.bf16.mxu0 0
        %2069 = vmatmul.mubr.bf16.gmra.mrb[0].mxu0 %v1341
        %v2070 = vpop.f32.mrb[0].mxu0
        %v2071 = vadd.f32 %v503, %v2070
        %v2072 = vpop.f32.mrb[0].mxu0
        %v2073 = vpop.f32.mrb[0].mxu0
        %v2074 = vadd.f32 %v503, %v2073
        %v2075 = vpop.f32.mrb[0].mxu0
        %2076 = vmatprep.mubr.bf16.mxu0 0
        %2077 = vmatmul.mubr.bf16.gmra.mrb[0].mxu0 %v1344
        %v2078 = vpop.f32.mrb[0].mxu0
        %v2079 = vadd.f32 %v503, %v2078
        %v2080 = vpop.f32.mrb[0].mxu0
        %v2081 = vpop.f32.mrb[0].mxu0
        %v2082 = vadd.f32 %v503, %v2081
        %v2083 = vpop.f32.mrb[0].mxu0
        %2084 = vmatprep.mubr.bf16.mxu0 0
        %2085 = vmatmul.mubr.bf16.gmra.mrb[0].mxu0 %v1347
        %v2086 = vpop.f32.mrb[0].mxu0
        %v2087 = vadd.f32 %v503, %v2086
        %v2088 = vpop.f32.mrb[0].mxu0
        %v2089 = vpop.f32.mrb[0].mxu0
        %v2090 = vadd.f32 %v503, %v2089
        %v2091 = vpop.f32.mrb[0].mxu0
        %2092 = vmatprep.mubr.bf16.mxu0 0
        %2093 = vmatmul.mubr.bf16.gmra.mrb[0].mxu0 %v1350
        %v2094 = vpop.f32.mrb[0].mxu0
        %v2095 = vadd.f32 %v503, %v2094
        %v2096 = vpop.f32.mrb[0].mxu0
        %v2097 = vpop.f32.mrb[0].mxu0
        %v2098 = vadd.f32 %v503, %v2097
        %v2099 = vpop.f32.mrb[0].mxu0
        %2100 = vmatprep.mubr.bf16.mxu0 0
        %2101 = vmatmul.mubr.bf16.gmra.mrb[0].mxu0 %v1353
        %v2102 = vpop.f32.mrb[0].mxu0
        %v2103 = vadd.f32 %v503, %v2102
        %v2104 = vpop.f32.mrb[0].mxu0
        %v2105 = vpop.f32.mrb[0].mxu0
        %v2106 = vadd.f32 %v503, %v2105
        %v2107 = vpop.f32.mrb[0].mxu0
        %2108 = vmatprep.mubr.bf16.mxu0 0
        %2109 = vmatmul.mubr.bf16.gmra.mrb[0].mxu0 %v1356
        %v2110 = vpop.f32.mrb[0].mxu0
        %v2111 = vadd.f32 %v503, %v2110
        %v2112 = vpop.f32.mrb[0].mxu0
        %v2113 = vpop.f32.mrb[0].mxu0
        %v2114 = vadd.f32 %v503, %v2113
        %v2115 = vpop.f32.mrb[0].mxu0
        %2116 = vmatprep.mubr.bf16.mxu0 0
        %2117 = vmatmul.mubr.bf16.gmra.mrb[0].mxu0 %v1359
        %v2118 = vpop.f32.mrb[0].mxu0
        %v2119 = vadd.f32 %v503, %v2118
        %v2120 = vpop.f32.mrb[0].mxu0
        %v2121 = vpop.f32.mrb[0].mxu0
        %v2122 = vadd.f32 %v503, %v2121
        %v2123 = vpop.f32.mrb[0].mxu0
        %2124 = vmatprep.mubr.bf16.mxu0 0
        %2125 = vmatmul.mubr.bf16.gmra.mrb[0].mxu0 %v1362
        %v2126 = vpop.f32.mrb[0].mxu0
        %v2127 = vadd.f32 %v503, %v2126
        %v2128 = vpop.f32.mrb[0].mxu0
        %v2129 = vpop.f32.mrb[0].mxu0
        %v2130 = vadd.f32 %v503, %v2129
        %v2131 = vpop.f32.mrb[0].mxu0
        %2132 = vmatprep.mubr.bf16.mxu0 0
        %2133 = vmatmul.mubr.bf16.gmra.mrb[0].mxu0 %v1365
        %v2134 = vpop.f32.mrb[0].mxu0
        %v2135 = vadd.f32 %v503, %v2134
        %v2136 = vpop.f32.mrb[0].mxu0
        %v2137 = vpop.f32.mrb[0].mxu0
        %v2138 = vadd.f32 %v503, %v2137
        %v2139 = vpop.f32.mrb[0].mxu0
        %2140 = vmatprep.mubr.bf16.mxu0 0
        %2141 = vmatmul.mubr.bf16.gmra.mrb[0].mxu0 %v1368
        %v2142 = vpop.f32.mrb[0].mxu0
        %v2143 = vadd.f32 %v503, %v2142
        %v2144 = vpop.f32.mrb[0].mxu0
        %v2145 = vpop.f32.mrb[0].mxu0
        %v2146 = vadd.f32 %v503, %v2145
        %v2147 = vpop.f32.mrb[0].mxu0
        %2148 = vmatprep.mubr.bf16.mxu0 0
        %2149 = vmatmul.mubr.bf16.gmra.mrb[0].mxu0 %v1371
        %v2150 = vpop.f32.mrb[0].mxu0
        %v2151 = vadd.f32 %v503, %v2150
        %v2152 = vpop.f32.mrb[0].mxu0
        %v2153 = vpop.f32.mrb[0].mxu0
        %v2154 = vadd.f32 %v503, %v2153
        %v2155 = vpop.f32.mrb[0].mxu0
        %2156 = vmatprep.mubr.bf16.mxu0 0
        %2157 = vmatmul.mubr.bf16.gmra.mrb[0].mxu0 %v1374
        %v2158 = vpop.f32.mrb[0].mxu0
        %v2159 = vadd.f32 %v503, %v2158
        %v2160 = vpop.f32.mrb[0].mxu0
        %v2161 = vpop.f32.mrb[0].mxu0
        %v2162 = vadd.f32 %v503, %v2161
        %v2163 = vpop.f32.mrb[0].mxu0
        %2164 = vmatprep.mubr.bf16.mxu0 0
        %2165 = vmatmul.mubr.bf16.gmra.mrb[0].mxu0 %v1377
        %v2166 = vpop.f32.mrb[0].mxu0
        %v2167 = vadd.f32 %v503, %v2166
        %v2168 = vpop.f32.mrb[0].mxu0
        %v2169 = vpop.f32.mrb[0].mxu0
        %v2170 = vadd.f32 %v503, %v2169
        %v2171 = vpop.f32.mrb[0].mxu0
        %2172 = vmatprep.mubr.bf16.mxu0 0
        %2173 = vmatmul.mubr.bf16.gmra.mrb[0].mxu0 %v1380
        %v2174 = vpop.f32.mrb[0].mxu0
        %v2175 = vadd.f32 %v503, %v2174
        %v2176 = vpop.f32.mrb[0].mxu0
        %v2177 = vpop.f32.mrb[0].mxu0
        %v2178 = vadd.f32 %v503, %v2177
        %v2179 = vpop.f32.mrb[0].mxu0
        %2180 = vmatprep.mubr.bf16.mxu0 0
        %2181 = vmatmul.mubr.bf16.gmra.mrb[0].mxu0 %v1383
        %v2182 = vpop.f32.mrb[0].mxu0
        %v2183 = vadd.f32 %v503, %v2182
        %v2184 = vpop.f32.mrb[0].mxu0
        %v2185 = vpop.f32.mrb[0].mxu0
        %v2186 = vadd.f32 %v503, %v2185
        %v2187 = vpop.f32.mrb[0].mxu0
        %2188 = vmatprep.mubr.bf16.mxu0 0
        %2189 = vmatmul.mubr.bf16.gmra.mrb[0].mxu0 %v1386
        %v2190 = vpop.f32.mrb[0].mxu0
        %v2191 = vadd.f32 %v503, %v2190
        %v2192 = vpop.f32.mrb[0].mxu0
        %v2193 = vpop.f32.mrb[0].mxu0
        %v2194 = vadd.f32 %v503, %v2193
        %v2195 = vpop.f32.mrb[0].mxu0
        %2196 = vmatprep.mubr.bf16.mxu0 0
        %2197 = vmatmul.mubr.bf16.gmra.mrb[0].mxu0 %v1389
        %v2198 = vpop.f32.mrb[0].mxu0
        %v2199 = vadd.f32 %v503, %v2198
        %v2200 = vpop.f32.mrb[0].mxu0
        %v2201 = vpop.f32.mrb[0].mxu0
        %v2202 = vadd.f32 %v503, %v2201
        %v2203 = vpop.f32.mrb[0].mxu0
        %2204 = vmatprep.mubr.bf16.mxu0 0
        %2205 = vmatmul.mubr.bf16.gmra.mrb[0].mxu0 %v1392
        %v2206 = vpop.f32.mrb[0].mxu0
        %v2207 = vadd.f32 %v503, %v2206
        %v2208 = vpop.f32.mrb[0].mxu0
        %v2209 = vpop.f32.mrb[0].mxu0
        %v2210 = vadd.f32 %v503, %v2209
        %v2211 = vpop.f32.mrb[0].mxu0
        %2212 = vmatprep.mubr.bf16.mxu0 0
        %2213 = vmatmul.mubr.bf16.gmra.mrb[0].mxu0 %v1395
        %v2214 = vpop.f32.mrb[0].mxu0
        %v2215 = vadd.f32 %v503, %v2214
        %v2216 = vpop.f32.mrb[0].mxu0
        %v2217 = vpop.f32.mrb[0].mxu0
        %v2218 = vadd.f32 %v503, %v2217
        %v2219 = vpop.f32.mrb[0].mxu0
        %2220 = vmatprep.mubr.bf16.mxu0 0
        %2221 = vmatmul.mubr.bf16.gmra.mrb[0].mxu0 %v1398
        %v2222 = vpop.f32.mrb[0].mxu0
        %v2223 = vadd.f32 %v503, %v2222
        %v2224 = vpop.f32.mrb[0].mxu0
        %v2225 = vpop.f32.mrb[0].mxu0
        %v2226 = vadd.f32 %v503, %v2225
        %v2227 = vpop.f32.mrb[0].mxu0
        %2228 = vmatprep.mubr.bf16.mxu0 0
        %2229 = vmatmul.mubr.bf16.gmra.mrb[0].mxu0 %v1401
        %v2230 = vpop.f32.mrb[0].mxu0
        %v2231 = vadd.f32 %v503, %v2230
        %v2232 = vpop.f32.mrb[0].mxu0
        %v2233 = vpop.f32.mrb[0].mxu0
        %v2234 = vadd.f32 %v503, %v2233
        %v2235 = vpop.f32.mrb[0].mxu0
        %2236 = vmatprep.mubr.bf16.mxu0 0
        %2237 = vmatmul.mubr.bf16.gmra.mrb[0].mxu0 %v1404
        %v2238 = vpop.f32.mrb[0].mxu0
        %v2239 = vadd.f32 %v503, %v2238
        %v2240 = vpop.f32.mrb[0].mxu0
        %v2241 = vpop.f32.mrb[0].mxu0
        %v2242 = vadd.f32 %v503, %v2241
        %v2243 = vpop.f32.mrb[0].mxu0
        %2244 = vmatprep.mubr.bf16.mxu0 0
        %2245 = vmatmul.mubr.bf16.gmra.mrb[0].mxu0 %v1407
        %v2246 = vpop.f32.mrb[0].mxu0
        %v2247 = vadd.f32 %v503, %v2246
        %v2248 = vpop.f32.mrb[0].mxu0
        %v2249 = vpop.f32.mrb[0].mxu0
        %v2250 = vadd.f32 %v503, %v2249
        %v2251 = vpop.f32.mrb[0].mxu0
        %2252 = vmatprep.mubr.bf16.mxu0 0
        %2253 = vmatmul.mubr.bf16.gmra.mrb[0].mxu0 %v1410
        %v2254 = vpop.f32.mrb[0].mxu0
        %v2255 = vadd.f32 %v503, %v2254
        %v2256 = vpop.f32.mrb[0].mxu0
        %v2257 = vpop.f32.mrb[0].mxu0
        %v2258 = vadd.f32 %v503, %v2257
        %v2259 = vpop.f32.mrb[0].mxu0
        %2260 = vmatprep.mubr.bf16.mxu0 0
        %2261 = vmatmul.mubr.bf16.gmra.mrb[0].mxu0 %v1413
        %v2262 = vpop.f32.mrb[0].mxu0
        %v2263 = vadd.f32 %v503, %v2262
        %v2264 = vpop.f32.mrb[0].mxu0
        %v2265 = vpop.f32.mrb[0].mxu0
        %v2266 = vadd.f32 %v503, %v2265
        %v2267 = vpop.f32.mrb[0].mxu0
        %2268 = vmatprep.mubr.bf16.mxu0 0
        %2269 = vmatmul.mubr.bf16.gmra.mrb[0].mxu0 %v1416
        %v2270 = vpop.f32.mrb[0].mxu0
        %v2271 = vadd.f32 %v503, %v2270
        %v2272 = vpop.f32.mrb[0].mxu0
        %v2273 = vpop.f32.mrb[0].mxu0
        %v2274 = vadd.f32 %v503, %v2273
        %v2275 = vpop.f32.mrb[0].mxu0
        %2276 = vmatprep.mubr.bf16.mxu0 0
        %2277 = vmatmul.mubr.bf16.gmra.mrb[0].mxu0 %v1419
        %v2278 = vpop.f32.mrb[0].mxu0
        %v2279 = vadd.f32 %v503, %v2278
        %v2280 = vpop.f32.mrb[0].mxu0
        %v2281 = vpop.f32.mrb[0].mxu0
        %v2282 = vadd.f32 %v503, %v2281
        %v2283 = vpop.f32.mrb[0].mxu0
        %2284 = vmatprep.mubr.bf16.mxu0 0
        %2285 = vmatmul.mubr.bf16.gmra.mrb[0].mxu0 %v1422
        %v2286 = vpop.f32.mrb[0].mxu0
        %v2287 = vadd.f32 %v503, %v2286
        %v2288 = vpop.f32.mrb[0].mxu0
        %v2289 = vpop.f32.mrb[0].mxu0
        %v2290 = vadd.f32 %v503, %v2289
        %v2291 = vpop.f32.mrb[0].mxu0
        %2292 = vmatprep.mubr.bf16.mxu0 0
        %2293 = vmatmul.mubr.bf16.gmra.mrb[0].mxu0 %v1425
        %v2294 = vpop.f32.mrb[0].mxu0
        %v2295 = vadd.f32 %v503, %v2294
        %v2296 = vpop.f32.mrb[0].mxu0
        %v2297 = vpop.f32.mrb[0].mxu0
        %v2298 = vadd.f32 %v503, %v2297
        %v2299 = vpop.f32.mrb[0].mxu0
        %2300 = vmatprep.mubr.bf16.mxu0 0
        %2301 = vmatmul.mubr.bf16.gmra.mrb[0].mxu0 %v1428
        %v2302 = vpop.f32.mrb[0].mxu0
        %v2303 = vadd.f32 %v503, %v2302
        %v2304 = vpop.f32.mrb[0].mxu0
        %v2305 = vpop.f32.mrb[0].mxu0
        %v2306 = vadd.f32 %v503, %v2305
        %v2307 = vpop.f32.mrb[0].mxu0
        %2308 = vmatprep.mubr.bf16.mxu0 0
        %2309 = vmatmul.mubr.bf16.gmra.mrb[0].mxu0 %v1431
        %v2310 = vpop.f32.mrb[0].mxu0
        %v2311 = vadd.f32 %v503, %v2310
        %v2312 = vpop.f32.mrb[0].mxu0
        %v2313 = vpop.f32.mrb[0].mxu0
        %v2314 = vadd.f32 %v503, %v2313
        %v2315 = vpop.f32.mrb[0].mxu0
        %2316 = vmatprep.mubr.bf16.mxu0 0
        %2317 = vmatmul.mubr.bf16.gmra.mrb[0].mxu0 %v1434
        %v2318 = vpop.f32.mrb[0].mxu0
        %v2319 = vadd.f32 %v503, %v2318
        %v2320 = vpop.f32.mrb[0].mxu0
        %v2321 = vpop.f32.mrb[0].mxu0
        %v2322 = vadd.f32 %v503, %v2321
        %v2323 = vpop.f32.mrb[0].mxu0
        %2324 = vmatprep.mubr.bf16.mxu0 0
        %2325 = vmatmul.mubr.bf16.gmra.mrb[0].mxu0 %v1437
        %v2326 = vpop.f32.mrb[0].mxu0
        %v2327 = vadd.f32 %v503, %v2326
        %v2328 = vpop.f32.mrb[0].mxu0
        %v2329 = vpop.f32.mrb[0].mxu0
        %v2330 = vadd.f32 %v503, %v2329
        %v2331 = vpop.f32.mrb[0].mxu0
        %2332 = vmatprep.mubr.bf16.mxu0 0
        %2333 = vmatmul.mubr.bf16.gmra.mrb[0].mxu0 %v1440
        %v2334 = vpop.f32.mrb[0].mxu0
        %v2335 = vadd.f32 %v503, %v2334
        %v2336 = vpop.f32.mrb[0].mxu0
        %v2337 = vpop.f32.mrb[0].mxu0
        %v2338 = vadd.f32 %v503, %v2337
        %v2339 = vpop.f32.mrb[0].mxu0
        %2340 = vmatprep.mubr.bf16.mxu0 0
        %2341 = vmatmul.mubr.bf16.gmra.mrb[0].mxu0 %v1443
        %v2342 = vpop.f32.mrb[0].mxu0
        %v2343 = vadd.f32 %v503, %v2342
        %v2344 = vpop.f32.mrb[0].mxu0
        %v2345 = vpop.f32.mrb[0].mxu0
        %v2346 = vadd.f32 %v503, %v2345
        %v2347 = vpop.f32.mrb[0].mxu0
        %2348 = vmatprep.mubr.bf16.mxu0 0
        %2349 = vmatmul.mubr.bf16.gmra.mrb[0].mxu0 %v1446
        %v2350 = vpop.f32.mrb[0].mxu0
        %v2351 = vadd.f32 %v503, %v2350
        %v2352 = vpop.f32.mrb[0].mxu0
        %v2353 = vpop.f32.mrb[0].mxu0
        %v2354 = vadd.f32 %v503, %v2353
        %v2355 = vpop.f32.mrb[0].mxu0
        %2356 = vmatprep.mubr.bf16.mxu0 0
        %2357 = vmatmul.mubr.bf16.gmra.mrb[0].mxu0 %v1449
        %v2358 = vpop.f32.mrb[0].mxu0
        %v2359 = vadd.f32 %v503, %v2358
        %v2360 = vpop.f32.mrb[0].mxu0
        %v2361 = vpop.f32.mrb[0].mxu0
        %v2362 = vadd.f32 %v503, %v2361
        %v2363 = vpop.f32.mrb[0].mxu0
        %2364 = vmatprep.mubr.bf16.mxu0 0
        %2365 = vmatmul.mubr.bf16.gmra.mrb[0].mxu0 %v1452
        %v2366 = vpop.f32.mrb[0].mxu0
        %v2367 = vadd.f32 %v503, %v2366
        %v2368 = vpop.f32.mrb[0].mxu0
        %v2369 = vpop.f32.mrb[0].mxu0
        %v2370 = vadd.f32 %v503, %v2369
        %v2371 = vpop.f32.mrb[0].mxu0
        %2372 = vmatprep.mubr.bf16.mxu0 0
        %2373 = vmatmul.mubr.bf16.gmra.mrb[0].mxu0 %v1455
        %v2374 = vpop.f32.mrb[0].mxu0
        %v2375 = vadd.f32 %v503, %v2374
        %v2376 = vpop.f32.mrb[0].mxu0
        %v2377 = vpop.f32.mrb[0].mxu0
        %v2378 = vadd.f32 %v503, %v2377
        %v2379 = vpop.f32.mrb[0].mxu0
        %2380 = vmatprep.mubr.bf16.mxu0 0
        %2381 = vmatmul.mubr.bf16.gmra.mrb[0].mxu0 %v1458
        %v2382 = vpop.f32.mrb[0].mxu0
        %v2383 = vadd.f32 %v503, %v2382
        %v2384 = vpop.f32.mrb[0].mxu0
        %v2385 = vpop.f32.mrb[0].mxu0
        %v2386 = vadd.f32 %v503, %v2385
        %v2387 = vpop.f32.mrb[0].mxu0
        %2388 = vmatprep.mubr.bf16.mxu0 0
        %2389 = vmatmul.mubr.bf16.gmra.mrb[0].mxu0 %v1461
        %v2390 = vpop.f32.mrb[0].mxu0
        %v2391 = vadd.f32 %v503, %v2390
        %v2392 = vpop.f32.mrb[0].mxu0
        %v2393 = vpop.f32.mrb[0].mxu0
        %v2394 = vadd.f32 %v503, %v2393
        %v2395 = vpop.f32.mrb[0].mxu0
        %2396 = vmatprep.mubr.bf16.mxu0 0
        %2397 = vmatmul.mubr.bf16.gmra.mrb[0].mxu0 %v1464
        %v2398 = vpop.f32.mrb[0].mxu0
        %v2399 = vadd.f32 %v503, %v2398
        %v2400 = vpop.f32.mrb[0].mxu0
        %v2401 = vpop.f32.mrb[0].mxu0
        %v2402 = vadd.f32 %v503, %v2401
        %v2403 = vpop.f32.mrb[0].mxu0
        %2404 = vmatprep.mubr.bf16.mxu0 0
        %2405 = vmatmul.mubr.bf16.gmra.mrb[0].mxu0 %v1467
        %v2406 = vpop.f32.mrb[0].mxu0
        %v2407 = vadd.f32 %v503, %v2406
        %v2408 = vpop.f32.mrb[0].mxu0
        %v2409 = vpop.f32.mrb[0].mxu0
        %v2410 = vadd.f32 %v503, %v2409
        %v2411 = vpop.f32.mrb[0].mxu0
        %2412 = vmatprep.mubr.bf16.mxu0 0
        %2413 = vmatmul.mubr.bf16.gmra.mrb[0].mxu0 %v1470
        %v2414 = vpop.f32.mrb[0].mxu0
        %v2415 = vadd.f32 %v503, %v2414
        %v2416 = vpop.f32.mrb[0].mxu0
        %v2417 = vpop.f32.mrb[0].mxu0
        %v2418 = vadd.f32 %v503, %v2417
        %v2419 = vpop.f32.mrb[0].mxu0
        %2420 = vmatprep.mubr.bf16.mxu0 0
        %2421 = vmatmul.mubr.bf16.gmra.mrb[0].mxu0 %v1473
        %v2422 = vpop.f32.mrb[0].mxu0
        %v2423 = vadd.f32 %v503, %v2422
        %v2424 = vpop.f32.mrb[0].mxu0
        %v2425 = vpop.f32.mrb[0].mxu0
        %v2426 = vadd.f32 %v503, %v2425
        %v2427 = vpop.f32.mrb[0].mxu0
        %2428 = vmatprep.mubr.bf16.mxu0 0
        %2429 = vmatmul.mubr.bf16.gmra.mrb[0].mxu0 %v1476
        %v2430 = vpop.f32.mrb[0].mxu0
        %v2431 = vadd.f32 %v503, %v2430
        %v2432 = vpop.f32.mrb[0].mxu0
        %v2433 = vpop.f32.mrb[0].mxu0
        %v2434 = vadd.f32 %v503, %v2433
        %v2435 = vpop.f32.mrb[0].mxu0
        %2436 = vmatprep.mubr.bf16.mxu0 0
        %2437 = vmatmul.mubr.bf16.gmra.mrb[0].mxu0 %v1479
        %v2438 = vpop.f32.mrb[0].mxu0
        %v2439 = vadd.f32 %v503, %v2438
        %v2440 = vpop.f32.mrb[0].mxu0
        %v2441 = vpop.f32.mrb[0].mxu0
        %v2442 = vadd.f32 %v503, %v2441
        %v2443 = vpop.f32.mrb[0].mxu0
        %2444 = vmatprep.mubr.bf16.mxu0 0
        %2445 = vmatmul.mubr.bf16.gmra.mrb[0].mxu0 %v1482
        %v2446 = vpop.f32.mrb[0].mxu0
        %v2447 = vadd.f32 %v503, %v2446
        %v2448 = vpop.f32.mrb[0].mxu0
        %v2449 = vpop.f32.mrb[0].mxu0
        %v2450 = vadd.f32 %v503, %v2449
        %v2451 = vpop.f32.mrb[0].mxu0
        %2452 = vmatprep.mubr.bf16.mxu0 0
        %2453 = vmatmul.mubr.bf16.gmra.mrb[0].mxu0 %v1485
        %v2454 = vpop.f32.mrb[0].mxu0
        %v2455 = vadd.f32 %v503, %v2454
        %v2456 = vpop.f32.mrb[0].mxu0
        %v2457 = vpop.f32.mrb[0].mxu0
        %v2458 = vadd.f32 %v503, %v2457
        %v2459 = vpop.f32.mrb[0].mxu0
        %2460 = vmatprep.mubr.bf16.mxu0 0
        %2461 = vmatmul.mubr.bf16.gmra.mrb[0].mxu0 %v1488
        %v2462 = vpop.f32.mrb[0].mxu0
        %v2463 = vadd.f32 %v503, %v2462
        %v2464 = vpop.f32.mrb[0].mxu0
        %v2465 = vpop.f32.mrb[0].mxu0
        %v2466 = vadd.f32 %v503, %v2465
        %v2467 = vpop.f32.mrb[0].mxu0
        %2468 = vmatprep.mubr.bf16.mxu0 0
        %2469 = vmatmul.mubr.bf16.gmra.mrb[0].mxu0 %v1491
        %v2470 = vpop.f32.mrb[0].mxu0
        %v2471 = vadd.f32 %v503, %v2470
        %v2472 = vpop.f32.mrb[0].mxu0
        %v2473 = vpop.f32.mrb[0].mxu0
        %v2474 = vadd.f32 %v503, %v2473
        %v2475 = vpop.f32.mrb[0].mxu0
        %2476 = vmatprep.mubr.bf16.mxu0 0
        %2477 = vmatmul.mubr.bf16.gmra.mrb[0].mxu0 %v1494
        %v2478 = vpop.f32.mrb[0].mxu0
        %v2479 = vadd.f32 %v503, %v2478
        %v2480 = vpop.f32.mrb[0].mxu0
        %v2481 = vpop.f32.mrb[0].mxu0
        %v2482 = vadd.f32 %v503, %v2481
        %v2483 = vpop.f32.mrb[0].mxu0
        %2484 = vmatprep.mubr.bf16.mxu0 0
        %2485 = vmatmul.mubr.bf16.gmra.mrb[0].mxu0 %v1497
        %v2486 = vpop.f32.mrb[0].mxu0
        %v2487 = vadd.f32 %v503, %v2486
        %v2488 = vpop.f32.mrb[0].mxu0
        %v2489 = vpop.f32.mrb[0].mxu0
        %v2490 = vadd.f32 %v503, %v2489
        %v2491 = vpop.f32.mrb[0].mxu0
        %2492 = vmatprep.mubr.bf16.mxu0 0
        %2493 = vmatmul.mubr.bf16.gmra.mrb[0].mxu0 %v1500
        %v2494 = vpop.f32.mrb[0].mxu0
        %v2495 = vadd.f32 %v503, %v2494
        %v2496 = vpop.f32.mrb[0].mxu0
        %v2497 = vpop.f32.mrb[0].mxu0
        %v2498 = vadd.f32 %v503, %v2497
        %v2499 = vpop.f32.mrb[0].mxu0
        %2500 = vmatprep.mubr.bf16.mxu0 0
        %2501 = vmatmul.mubr.bf16.gmra.mrb[0].mxu0 %v1503
        %v2502 = vpop.f32.mrb[0].mxu0
        %v2503 = vadd.f32 %v503, %v2502
        %v2504 = vpop.f32.mrb[0].mxu0
        %v2505 = vpop.f32.mrb[0].mxu0
        %v2506 = vadd.f32 %v503, %v2505
        %v2507 = vpop.f32.mrb[0].mxu0
        %2508 = vmatprep.mubr.bf16.mxu0 0
        %2509 = vmatmul.mubr.bf16.gmra.mrb[0].mxu0 %v1506
        %v2510 = vpop.f32.mrb[0].mxu0
        %v2511 = vadd.f32 %v503, %v2510
        %v2512 = vpop.f32.mrb[0].mxu0
        %v2513 = vpop.f32.mrb[0].mxu0
        %v2514 = vadd.f32 %v503, %v2513
        %v2515 = vpop.f32.mrb[0].mxu0
        %2516 = vmatprep.mubr.bf16.mxu0 0
        %2517 = vmatmul.mubr.bf16.gmra.mrb[0].mxu0 %v1509
        %v2518 = vpop.f32.mrb[0].mxu0
        %v2519 = vadd.f32 %v503, %v2518
        %v2520 = vpop.f32.mrb[0].mxu0
        %v2521 = vpop.f32.mrb[0].mxu0
        %v2522 = vadd.f32 %v503, %v2521
        %v2523 = vpop.f32.mrb[0].mxu0
        %2524 = vmatprep.mubr.bf16.mxu0 0
        %2525 = vmatmul.mubr.bf16.gmra.mrb[0].mxu0 %v1512
        %v2526 = vpop.f32.mrb[0].mxu0
        %v2527 = vadd.f32 %v503, %v2526
        %v2528 = vpop.f32.mrb[0].mxu0
        %v2529 = vpop.f32.mrb[0].mxu0
        %v2530 = vadd.f32 %v503, %v2529
        %v2531 = vpop.f32.mrb[0].mxu0
        %2532 = vmatprep.mubr.bf16.mxu0 0
        %2533 = vmatmul.mubr.bf16.gmra.mrb[0].mxu0 %v1515
        %v2534 = vpop.f32.mrb[0].mxu0
        %v2535 = vadd.f32 %v503, %v2534
        %v2536 = vpop.f32.mrb[0].mxu0
        %v2537 = vpop.f32.mrb[0].mxu0
        %v2538 = vadd.f32 %v503, %v2537
        %v2539 = vpop.f32.mrb[0].mxu0
        %2540 = vmatprep.mubr.bf16.mxu0 0
        %2541 = vmatmul.mubr.bf16.gmra.mrb[0].mxu0 %v1518
        %v2542 = vpop.f32.mrb[0].mxu0
        %v2543 = vadd.f32 %v503, %v2542
        %v2544 = vpop.f32.mrb[0].mxu0
        %v2545 = vpop.f32.mrb[0].mxu0
        %v2546 = vadd.f32 %v503, %v2545
        %v2547 = vpop.f32.mrb[0].mxu0
        %2548 = vmatprep.mubr.bf16.mxu0 0
        %2549 = vmatmul.mubr.bf16.gmra.mrb[0].mxu0 %v1521
        %v2550 = vpop.f32.mrb[0].mxu0
        %v2551 = vadd.f32 %v503, %v2550
        %v2552 = vpop.f32.mrb[0].mxu0
        %v2553 = vpop.f32.mrb[0].mxu0
        %v2554 = vadd.f32 %v503, %v2553
        %v2555 = vpop.f32.mrb[0].mxu0
        %2556 = vmatprep.mubr.bf16.mxu0 0
        %2557 = vmatmul.mubr.bf16.gmra.mrb[0].mxu0 %v1524
        %v2558 = vpop.f32.mrb[0].mxu0
        %v2559 = vadd.f32 %v503, %v2558
        %v2560 = vpop.f32.mrb[0].mxu0
        %v2561 = vpop.f32.mrb[0].mxu0
        %v2562 = vadd.f32 %v503, %v2561
        %v2563 = vpop.f32.mrb[0].mxu0
        %2564 = vmatprep.mubr.bf16.mxu0 0
        %2565 = vmatmul.mubr.bf16.gmra.mrb[0].mxu0 %v1527
        %v2566 = vpop.f32.mrb[0].mxu0
        %v2567 = vadd.f32 %v503, %v2566
        %v2568 = vpop.f32.mrb[0].mxu0
        %v2569 = vpop.f32.mrb[0].mxu0
        %v2570 = vadd.f32 %v503, %v2569
        %v2571 = vpop.f32.mrb[0].mxu0
        %2572 = vmatprep.mubr.bf16.mxu0 0
        %2573 = vmatmul.mubr.bf16.gmra.mrb[0].mxu0 %v1530
        %v2574 = vpop.f32.mrb[0].mxu0
        %v2575 = vadd.f32 %v503, %v2574
        %v2576 = vpop.f32.mrb[0].mxu0
        %v2577 = vpop.f32.mrb[0].mxu0
        %v2578 = vadd.f32 %v503, %v2577
        %v2579 = vpop.f32.mrb[0].mxu0
        %2580 = vmatprep.mubr.bf16.mxu0 0
        %2581 = vmatmul.mubr.bf16.gmra.mrb[0].mxu0 %v1533
        %v2582 = vpop.f32.mrb[0].mxu0
        %v2583 = vadd.f32 %v503, %v2582
        %v2584 = vpop.f32.mrb[0].mxu0
        %v2585 = vpop.f32.mrb[0].mxu0
        %v2586 = vadd.f32 %v503, %v2585
        %v2587 = vpop.f32.mrb[0].mxu0
        %2588 = vmatprep.mubr.bf16.mxu0 0
        %2589 = vmatmul.mubr.bf16.gmra.mrb[0].mxu0 %v1536
        %v2590 = vpop.f32.mrb[0].mxu0
        %v2591 = vadd.f32 %v503, %v2590
        %v2592 = vpop.f32.mrb[0].mxu0
        %v2593 = vpop.f32.mrb[0].mxu0
        %v2594 = vadd.f32 %v503, %v2593
        %v2595 = vpop.f32.mrb[0].mxu0
        %2596 = vmatprep.mubr.bf16.mxu0 0
        %2597 = vmatmul.mubr.bf16.gmra.mrb[0].mxu0 %v1539
        %v2598 = vpop.f32.mrb[0].mxu0
        %v2599 = vadd.f32 %v503, %v2598
        %v2600 = vpop.f32.mrb[0].mxu0
        %v2601 = vpop.f32.mrb[0].mxu0
        %v2602 = vadd.f32 %v503, %v2601
        %v2603 = vpop.f32.mrb[0].mxu0
        %2604 = vdwg.mxu0
        %v2605 = vmax.f32 %v1583, 0.0
        %v2606 = vmax.f32 %v1586, 0.0
        %v2607 = vmax.f32 %v1591, 0.0
        %v2608 = vmax.f32 %v1594, 0.0
        %v2609 = vmax.f32 %v1599, 0.0
        %v2610 = vmax.f32 %v1602, 0.0
        %v2611 = vmax.f32 %v1607, 0.0
        %v2612 = vmax.f32 %v1610, 0.0
        %v2613 = vmax.f32 %v1615, 0.0
        %v2614 = vmax.f32 %v1618, 0.0
        %v2615 = vmax.f32 %v1623, 0.0
        %v2616 = vmax.f32 %v1626, 0.0
        %v2617 = vmax.f32 %v1631, 0.0
        %v2618 = vmax.f32 %v1634, 0.0
        %v2619 = vmax.f32 %v1639, 0.0
        %v2620 = vmax.f32 %v1642, 0.0
        %v2621 = vmax.f32 %v1647, 0.0
        %v2622 = vmax.f32 %v1650, 0.0
        %v2623 = vmax.f32 %v1655, 0.0
        %v2624 = vmax.f32 %v1658, 0.0
        %v2625 = vmax.f32 %v1663, 0.0
        %v2626 = vmax.f32 %v1666, 0.0
        %v2627 = vmax.f32 %v1671, 0.0
        %v2628 = vmax.f32 %v1674, 0.0
        %v2629 = vmax.f32 %v1679, 0.0
        %v2630 = vmax.f32 %v1682, 0.0
        %v2631 = vmax.f32 %v1687, 0.0
        %v2632 = vmax.f32 %v1690, 0.0
        %v2633 = vmax.f32 %v1695, 0.0
        %v2634 = vmax.f32 %v1698, 0.0
        %v2635 = vmax.f32 %v1703, 0.0
        %v2636 = vmax.f32 %v1706, 0.0
        %v2637 = vmax.f32 %v1711, 0.0
        %v2638 = vmax.f32 %v1714, 0.0
        %v2639 = vmax.f32 %v1719, 0.0
        %v2640 = vmax.f32 %v1722, 0.0
        %v2641 = vmax.f32 %v1727, 0.0
        %v2642 = vmax.f32 %v1730, 0.0
        %v2643 = vmax.f32 %v1735, 0.0
        %v2644 = vmax.f32 %v1738, 0.0
        %v2645 = vmax.f32 %v1743, 0.0
        %v2646 = vmax.f32 %v1746, 0.0
        %v2647 = vmax.f32 %v1751, 0.0
        %v2648 = vmax.f32 %v1754, 0.0
        %v2649 = vmax.f32 %v1759, 0.0
        %v2650 = vmax.f32 %v1762, 0.0
        %v2651 = vmax.f32 %v1767, 0.0
        %v2652 = vmax.f32 %v1770, 0.0
        %v2653 = vmax.f32 %v1775, 0.0
        %v2654 = vmax.f32 %v1778, 0.0
        %v2655 = vmax.f32 %v1783, 0.0
        %v2656 = vmax.f32 %v1786, 0.0
        %v2657 = vmax.f32 %v1791, 0.0
        %v2658 = vmax.f32 %v1794, 0.0
        %v2659 = vmax.f32 %v1799, 0.0
        %v2660 = vmax.f32 %v1802, 0.0
        %v2661 = vmax.f32 %v1807, 0.0
        %v2662 = vmax.f32 %v1810, 0.0
        %v2663 = vmax.f32 %v1815, 0.0
        %v2664 = vmax.f32 %v1818, 0.0
        %v2665 = vmax.f32 %v1823, 0.0
        %v2666 = vmax.f32 %v1826, 0.0
        %v2667 = vmax.f32 %v1831, 0.0
        %v2668 = vmax.f32 %v1834, 0.0
        %v2669 = vmax.f32 %v1839, 0.0
        %v2670 = vmax.f32 %v1842, 0.0
        %v2671 = vmax.f32 %v1847, 0.0
        %v2672 = vmax.f32 %v1850, 0.0
        %v2673 = vmax.f32 %v1855, 0.0
        %v2674 = vmax.f32 %v1858, 0.0
        %v2675 = vmax.f32 %v1863, 0.0
        %v2676 = vmax.f32 %v1866, 0.0
        %v2677 = vmax.f32 %v1871, 0.0
        %v2678 = vmax.f32 %v1874, 0.0
        %v2679 = vmax.f32 %v1879, 0.0
        %v2680 = vmax.f32 %v1882, 0.0
        %v2681 = vmax.f32 %v1887, 0.0
        %v2682 = vmax.f32 %v1890, 0.0
        %v2683 = vmax.f32 %v1895, 0.0
        %v2684 = vmax.f32 %v1898, 0.0
        %v2685 = vmax.f32 %v1903, 0.0
        %v2686 = vmax.f32 %v1906, 0.0
        %v2687 = vmax.f32 %v1911, 0.0
        %v2688 = vmax.f32 %v1914, 0.0
        %v2689 = vmax.f32 %v1919, 0.0
        %v2690 = vmax.f32 %v1922, 0.0
        %v2691 = vmax.f32 %v1927, 0.0
        %v2692 = vmax.f32 %v1930, 0.0
        %v2693 = vmax.f32 %v1935, 0.0
        %v2694 = vmax.f32 %v1938, 0.0
        %v2695 = vmax.f32 %v1943, 0.0
        %v2696 = vmax.f32 %v1946, 0.0
        %v2697 = vmax.f32 %v1951, 0.0
        %v2698 = vmax.f32 %v1954, 0.0
        %v2699 = vmax.f32 %v1959, 0.0
        %v2700 = vmax.f32 %v1962, 0.0
        %v2701 = vmax.f32 %v1967, 0.0
        %v2702 = vmax.f32 %v1970, 0.0
        %v2703 = vmax.f32 %v1975, 0.0
        %v2704 = vmax.f32 %v1978, 0.0
        %v2705 = vmax.f32 %v1983, 0.0
        %v2706 = vmax.f32 %v1986, 0.0
        %v2707 = vmax.f32 %v1991, 0.0
        %v2708 = vmax.f32 %v1994, 0.0
        %v2709 = vmax.f32 %v1999, 0.0
        %v2710 = vmax.f32 %v2002, 0.0
        %v2711 = vmax.f32 %v2007, 0.0
        %v2712 = vmax.f32 %v2010, 0.0
        %v2713 = vmax.f32 %v2015, 0.0
        %v2714 = vmax.f32 %v2018, 0.0
        %v2715 = vmax.f32 %v2023, 0.0
        %v2716 = vmax.f32 %v2026, 0.0
        %v2717 = vmax.f32 %v2031, 0.0
        %v2718 = vmax.f32 %v2034, 0.0
        %v2719 = vmax.f32 %v2039, 0.0
        %v2720 = vmax.f32 %v2042, 0.0
        %v2721 = vmax.f32 %v2047, 0.0
        %v2722 = vmax.f32 %v2050, 0.0
        %v2723 = vmax.f32 %v2055, 0.0
        %v2724 = vmax.f32 %v2058, 0.0
        %v2725 = vmax.f32 %v2063, 0.0
        %v2726 = vmax.f32 %v2066, 0.0
        %v2727 = vmax.f32 %v2071, 0.0
        %v2728 = vmax.f32 %v2074, 0.0
        %v2729 = vmax.f32 %v2079, 0.0
        %v2730 = vmax.f32 %v2082, 0.0
        %v2731 = vmax.f32 %v2087, 0.0
        %v2732 = vmax.f32 %v2090, 0.0
        %v2733 = vmax.f32 %v2095, 0.0
        %v2734 = vmax.f32 %v2098, 0.0
        %v2735 = vmax.f32 %v2103, 0.0
        %v2736 = vmax.f32 %v2106, 0.0
        %v2737 = vmax.f32 %v2111, 0.0
        %v2738 = vmax.f32 %v2114, 0.0
        %v2739 = vmax.f32 %v2119, 0.0
        %v2740 = vmax.f32 %v2122, 0.0
        %v2741 = vmax.f32 %v2127, 0.0
        %v2742 = vmax.f32 %v2130, 0.0
        %v2743 = vmax.f32 %v2135, 0.0
        %v2744 = vmax.f32 %v2138, 0.0
        %v2745 = vmax.f32 %v2143, 0.0
        %v2746 = vmax.f32 %v2146, 0.0
        %v2747 = vmax.f32 %v2151, 0.0
        %v2748 = vmax.f32 %v2154, 0.0
        %v2749 = vmax.f32 %v2159, 0.0
        %v2750 = vmax.f32 %v2162, 0.0
        %v2751 = vmax.f32 %v2167, 0.0
        %v2752 = vmax.f32 %v2170, 0.0
        %v2753 = vmax.f32 %v2175, 0.0
        %v2754 = vmax.f32 %v2178, 0.0
        %v2755 = vmax.f32 %v2183, 0.0
        %v2756 = vmax.f32 %v2186, 0.0
        %v2757 = vmax.f32 %v2191, 0.0
        %v2758 = vmax.f32 %v2194, 0.0
        %v2759 = vmax.f32 %v2199, 0.0
        %v2760 = vmax.f32 %v2202, 0.0
        %v2761 = vmax.f32 %v2207, 0.0
        %v2762 = vmax.f32 %v2210, 0.0
        %v2763 = vmax.f32 %v2215, 0.0
        %v2764 = vmax.f32 %v2218, 0.0
        %v2765 = vmax.f32 %v2223, 0.0
        %v2766 = vmax.f32 %v2226, 0.0
        %v2767 = vmax.f32 %v2231, 0.0
        %v2768 = vmax.f32 %v2234, 0.0
        %v2769 = vmax.f32 %v2239, 0.0
        %v2770 = vmax.f32 %v2242, 0.0
        %v2771 = vmax.f32 %v2247, 0.0
        %v2772 = vmax.f32 %v2250, 0.0
        %v2773 = vmax.f32 %v2255, 0.0
        %v2774 = vmax.f32 %v2258, 0.0
        %v2775 = vmax.f32 %v2263, 0.0
        %v2776 = vmax.f32 %v2266, 0.0
        %v2777 = vmax.f32 %v2271, 0.0
        %v2778 = vmax.f32 %v2274, 0.0
        %v2779 = vmax.f32 %v2279, 0.0
        %v2780 = vmax.f32 %v2282, 0.0
        %v2781 = vmax.f32 %v2287, 0.0
        %v2782 = vmax.f32 %v2290, 0.0
        %v2783 = vmax.f32 %v2295, 0.0
        %v2784 = vmax.f32 %v2298, 0.0
        %v2785 = vmax.f32 %v2303, 0.0
        %v2786 = vmax.f32 %v2306, 0.0
        %v2787 = vmax.f32 %v2311, 0.0
        %v2788 = vmax.f32 %v2314, 0.0
        %v2789 = vmax.f32 %v2319, 0.0
        %v2790 = vmax.f32 %v2322, 0.0
        %v2791 = vmax.f32 %v2327, 0.0
        %v2792 = vmax.f32 %v2330, 0.0
        %v2793 = vmax.f32 %v2335, 0.0
        %v2794 = vmax.f32 %v2338, 0.0
        %v2795 = vmax.f32 %v2343, 0.0
        %v2796 = vmax.f32 %v2346, 0.0
        %v2797 = vmax.f32 %v2351, 0.0
        %v2798 = vmax.f32 %v2354, 0.0
        %v2799 = vmax.f32 %v2359, 0.0
        %v2800 = vmax.f32 %v2362, 0.0
        %v2801 = vmax.f32 %v2367, 0.0
        %v2802 = vmax.f32 %v2370, 0.0
        %v2803 = vmax.f32 %v2375, 0.0
        %v2804 = vmax.f32 %v2378, 0.0
        %v2805 = vmax.f32 %v2383, 0.0
        %v2806 = vmax.f32 %v2386, 0.0
        %v2807 = vmax.f32 %v2391, 0.0
        %v2808 = vmax.f32 %v2394, 0.0
        %v2809 = vmax.f32 %v2399, 0.0
        %v2810 = vmax.f32 %v2402, 0.0
        %v2811 = vmax.f32 %v2407, 0.0
        %v2812 = vmax.f32 %v2410, 0.0
        %v2813 = vmax.f32 %v2415, 0.0
        %v2814 = vmax.f32 %v2418, 0.0
        %v2815 = vmax.f32 %v2423, 0.0
        %v2816 = vmax.f32 %v2426, 0.0
        %v2817 = vmax.f32 %v2431, 0.0
        %v2818 = vmax.f32 %v2434, 0.0
        %v2819 = vmax.f32 %v2439, 0.0
        %v2820 = vmax.f32 %v2442, 0.0
        %v2821 = vmax.f32 %v2447, 0.0
        %v2822 = vmax.f32 %v2450, 0.0
        %v2823 = vmax.f32 %v2455, 0.0
        %v2824 = vmax.f32 %v2458, 0.0
        %v2825 = vmax.f32 %v2463, 0.0
        %v2826 = vmax.f32 %v2466, 0.0
        %v2827 = vmax.f32 %v2471, 0.0
        %v2828 = vmax.f32 %v2474, 0.0
        %v2829 = vmax.f32 %v2479, 0.0
        %v2830 = vmax.f32 %v2482, 0.0
        %v2831 = vmax.f32 %v2487, 0.0
        %v2832 = vmax.f32 %v2490, 0.0
        %v2833 = vmax.f32 %v2495, 0.0
        %v2834 = vmax.f32 %v2498, 0.0
        %v2835 = vmax.f32 %v2503, 0.0
        %v2836 = vmax.f32 %v2506, 0.0
        %v2837 = vmax.f32 %v2511, 0.0
        %v2838 = vmax.f32 %v2514, 0.0
        %v2839 = vmax.f32 %v2519, 0.0
        %v2840 = vmax.f32 %v2522, 0.0
        %v2841 = vmax.f32 %v2527, 0.0
        %v2842 = vmax.f32 %v2530, 0.0
        %v2843 = vmax.f32 %v2535, 0.0
        %v2844 = vmax.f32 %v2538, 0.0
        %v2845 = vmax.f32 %v2543, 0.0
        %v2846 = vmax.f32 %v2546, 0.0
        %v2847 = vmax.f32 %v2551, 0.0
        %v2848 = vmax.f32 %v2554, 0.0
        %v2849 = vmax.f32 %v2559, 0.0
        %v2850 = vmax.f32 %v2562, 0.0
        %v2851 = vmax.f32 %v2567, 0.0
        %v2852 = vmax.f32 %v2570, 0.0
        %v2853 = vmax.f32 %v2575, 0.0
        %v2854 = vmax.f32 %v2578, 0.0
        %v2855 = vmax.f32 %v2583, 0.0
        %v2856 = vmax.f32 %v2586, 0.0
        %v2857 = vmax.f32 %v2591, 0.0
        %v2858 = vmax.f32 %v2594, 0.0
        %v2859 = vmax.f32 %v2599, 0.0
        %v2860 = vmax.f32 %v2602, 0.0
        %v2861 = vpack.c.bf16 %v2606, %v2605
        %v2862 = vpack.c.bf16 %v2608, %v2607
        %v2863 = vpack.c.bf16 %v2610, %v2609
        %v2864 = vpack.c.bf16 %v2612, %v2611
        %v2865 = vpack.c.bf16 %v2614, %v2613
        %v2866 = vpack.c.bf16 %v2616, %v2615
        %v2867 = vpack.c.bf16 %v2618, %v2617
        %v2868 = vpack.c.bf16 %v2620, %v2619
        %v2869 = vpack.c.bf16 %v2622, %v2621
        %v2870 = vpack.c.bf16 %v2624, %v2623
        %v2871 = vpack.c.bf16 %v2626, %v2625
        %v2872 = vpack.c.bf16 %v2628, %v2627
        %v2873 = vpack.c.bf16 %v2630, %v2629
        %v2874 = vpack.c.bf16 %v2632, %v2631
        %v2875 = vpack.c.bf16 %v2634, %v2633
        %v2876 = vpack.c.bf16 %v2636, %v2635
        %v2877 = vpack.c.bf16 %v2638, %v2637
        %v2878 = vpack.c.bf16 %v2640, %v2639
        %v2879 = vpack.c.bf16 %v2642, %v2641
        %v2880 = vpack.c.bf16 %v2644, %v2643
        %v2881 = vpack.c.bf16 %v2646, %v2645
        %v2882 = vpack.c.bf16 %v2648, %v2647
        %v2883 = vpack.c.bf16 %v2650, %v2649
        %v2884 = vpack.c.bf16 %v2652, %v2651
        %v2885 = vpack.c.bf16 %v2654, %v2653
        %v2886 = vpack.c.bf16 %v2656, %v2655
        %v2887 = vpack.c.bf16 %v2658, %v2657
        %v2888 = vpack.c.bf16 %v2660, %v2659
        %v2889 = vpack.c.bf16 %v2662, %v2661
        %v2890 = vpack.c.bf16 %v2664, %v2663
        %v2891 = vpack.c.bf16 %v2666, %v2665
        %v2892 = vpack.c.bf16 %v2668, %v2667
        %v2893 = vpack.c.bf16 %v2670, %v2669
        %v2894 = vpack.c.bf16 %v2672, %v2671
        %v2895 = vpack.c.bf16 %v2674, %v2673
        %v2896 = vpack.c.bf16 %v2676, %v2675
        %v2897 = vpack.c.bf16 %v2678, %v2677
        %v2898 = vpack.c.bf16 %v2680, %v2679
        %v2899 = vpack.c.bf16 %v2682, %v2681
        %v2900 = vpack.c.bf16 %v2684, %v2683
        %v2901 = vpack.c.bf16 %v2686, %v2685
        %v2902 = vpack.c.bf16 %v2688, %v2687
        %v2903 = vpack.c.bf16 %v2690, %v2689
        %v2904 = vpack.c.bf16 %v2692, %v2691
        %v2905 = vpack.c.bf16 %v2694, %v2693
        %v2906 = vpack.c.bf16 %v2696, %v2695
        %v2907 = vpack.c.bf16 %v2698, %v2697
        %v2908 = vpack.c.bf16 %v2700, %v2699
        %v2909 = vpack.c.bf16 %v2702, %v2701
        %v2910 = vpack.c.bf16 %v2704, %v2703
        %v2911 = vpack.c.bf16 %v2706, %v2705
        %v2912 = vpack.c.bf16 %v2708, %v2707
        %v2913 = vpack.c.bf16 %v2710, %v2709
        %v2914 = vpack.c.bf16 %v2712, %v2711
        %v2915 = vpack.c.bf16 %v2714, %v2713
        %v2916 = vpack.c.bf16 %v2716, %v2715
        %v2917 = vpack.c.bf16 %v2718, %v2717
        %v2918 = vpack.c.bf16 %v2720, %v2719
        %v2919 = vpack.c.bf16 %v2722, %v2721
        %v2920 = vpack.c.bf16 %v2724, %v2723
        %v2921 = vpack.c.bf16 %v2726, %v2725
        %v2922 = vpack.c.bf16 %v2728, %v2727
        %v2923 = vpack.c.bf16 %v2730, %v2729
        %v2924 = vpack.c.bf16 %v2732, %v2731
        %v2925 = vpack.c.bf16 %v2734, %v2733
        %v2926 = vpack.c.bf16 %v2736, %v2735
        %v2927 = vpack.c.bf16 %v2738, %v2737
        %v2928 = vpack.c.bf16 %v2740, %v2739
        %v2929 = vpack.c.bf16 %v2742, %v2741
        %v2930 = vpack.c.bf16 %v2744, %v2743
        %v2931 = vpack.c.bf16 %v2746, %v2745
        %v2932 = vpack.c.bf16 %v2748, %v2747
        %v2933 = vpack.c.bf16 %v2750, %v2749
        %v2934 = vpack.c.bf16 %v2752, %v2751
        %v2935 = vpack.c.bf16 %v2754, %v2753
        %v2936 = vpack.c.bf16 %v2756, %v2755
        %v2937 = vpack.c.bf16 %v2758, %v2757
        %v2938 = vpack.c.bf16 %v2760, %v2759
        %v2939 = vpack.c.bf16 %v2762, %v2761
        %v2940 = vpack.c.bf16 %v2764, %v2763
        %v2941 = vpack.c.bf16 %v2766, %v2765
        %v2942 = vpack.c.bf16 %v2768, %v2767
        %v2943 = vpack.c.bf16 %v2770, %v2769
        %v2944 = vpack.c.bf16 %v2772, %v2771
        %v2945 = vpack.c.bf16 %v2774, %v2773
        %v2946 = vpack.c.bf16 %v2776, %v2775
        %v2947 = vpack.c.bf16 %v2778, %v2777
        %v2948 = vpack.c.bf16 %v2780, %v2779
        %v2949 = vpack.c.bf16 %v2782, %v2781
        %v2950 = vpack.c.bf16 %v2784, %v2783
        %v2951 = vpack.c.bf16 %v2786, %v2785
        %v2952 = vpack.c.bf16 %v2788, %v2787
        %v2953 = vpack.c.bf16 %v2790, %v2789
        %v2954 = vpack.c.bf16 %v2792, %v2791
        %v2955 = vpack.c.bf16 %v2794, %v2793
        %v2956 = vpack.c.bf16 %v2796, %v2795
        %v2957 = vpack.c.bf16 %v2798, %v2797
        %v2958 = vpack.c.bf16 %v2800, %v2799
        %v2959 = vpack.c.bf16 %v2802, %v2801
        %v2960 = vpack.c.bf16 %v2804, %v2803
        %v2961 = vpack.c.bf16 %v2806, %v2805
        %v2962 = vpack.c.bf16 %v2808, %v2807
        %v2963 = vpack.c.bf16 %v2810, %v2809
        %v2964 = vpack.c.bf16 %v2812, %v2811
        %v2965 = vpack.c.bf16 %v2814, %v2813
        %v2966 = vpack.c.bf16 %v2816, %v2815
        %v2967 = vpack.c.bf16 %v2818, %v2817
        %v2968 = vpack.c.bf16 %v2820, %v2819
        %v2969 = vpack.c.bf16 %v2822, %v2821
        %v2970 = vpack.c.bf16 %v2824, %v2823
        %v2971 = vpack.c.bf16 %v2826, %v2825
        %v2972 = vpack.c.bf16 %v2828, %v2827
        %v2973 = vpack.c.bf16 %v2830, %v2829
        %v2974 = vpack.c.bf16 %v2832, %v2831
        %v2975 = vpack.c.bf16 %v2834, %v2833
        %v2976 = vpack.c.bf16 %v2836, %v2835
        %v2977 = vpack.c.bf16 %v2838, %v2837
        %v2978 = vpack.c.bf16 %v2840, %v2839
        %v2979 = vpack.c.bf16 %v2842, %v2841
        %v2980 = vpack.c.bf16 %v2844, %v2843
        %v2981 = vpack.c.bf16 %v2846, %v2845
        %v2982 = vpack.c.bf16 %v2848, %v2847
        %v2983 = vpack.c.bf16 %v2850, %v2849
        %v2984 = vpack.c.bf16 %v2852, %v2851
        %v2985 = vpack.c.bf16 %v2854, %v2853
        %v2986 = vpack.c.bf16 %v2856, %v2855
        %v2987 = vpack.c.bf16 %v2858, %v2857
        %v2988 = vpack.c.bf16 %v2860, %v2859
        %v3117 = vunpack.c.l.b16 %v2861
        %v3118 = vunpack.c.h.b16 %v2861
        %v3119 = vunpack.c.l.b16 %v2862
        %v3120 = vunpack.c.h.b16 %v2862
        %v3121 = vunpack.c.l.b16 %v2863
        %v3122 = vunpack.c.h.b16 %v2863
        %v3123 = vunpack.c.l.b16 %v2864
        %v3124 = vunpack.c.h.b16 %v2864
        %v3125 = vunpack.c.l.b16 %v2865
        %v3126 = vunpack.c.h.b16 %v2865
        %v3127 = vunpack.c.l.b16 %v2866
        %v3128 = vunpack.c.h.b16 %v2866
        %v3129 = vunpack.c.l.b16 %v2867
        %v3130 = vunpack.c.h.b16 %v2867
        %v3131 = vunpack.c.l.b16 %v2868
        %v3132 = vunpack.c.h.b16 %v2868
        %v3133 = vunpack.c.l.b16 %v2869
        %v3134 = vunpack.c.h.b16 %v2869
        %v3135 = vunpack.c.l.b16 %v2870
        %v3136 = vunpack.c.h.b16 %v2870
        %v3137 = vunpack.c.l.b16 %v2871
        %v3138 = vunpack.c.h.b16 %v2871
        %v3139 = vunpack.c.l.b16 %v2872
        %v3140 = vunpack.c.h.b16 %v2872
        %v3141 = vunpack.c.l.b16 %v2873
        %v3142 = vunpack.c.h.b16 %v2873
        %v3143 = vunpack.c.l.b16 %v2874
        %v3144 = vunpack.c.h.b16 %v2874
        %v3145 = vunpack.c.l.b16 %v2875
        %v3146 = vunpack.c.h.b16 %v2875
        %v3147 = vunpack.c.l.b16 %v2876
        %v3148 = vunpack.c.h.b16 %v2876
        %v3149 = vunpack.c.l.b16 %v2877
        %v3150 = vunpack.c.h.b16 %v2877
        %v3151 = vunpack.c.l.b16 %v2878
        %v3152 = vunpack.c.h.b16 %v2878
        %v3153 = vunpack.c.l.b16 %v2879
        %v3154 = vunpack.c.h.b16 %v2879
        %v3155 = vunpack.c.l.b16 %v2880
        %v3156 = vunpack.c.h.b16 %v2880
        %v3157 = vunpack.c.l.b16 %v2881
        %v3158 = vunpack.c.h.b16 %v2881
        %v3159 = vunpack.c.l.b16 %v2882
        %v3160 = vunpack.c.h.b16 %v2882
        %v3161 = vunpack.c.l.b16 %v2883
        %v3162 = vunpack.c.h.b16 %v2883
        %v3163 = vunpack.c.l.b16 %v2884
        %v3164 = vunpack.c.h.b16 %v2884
        %v3165 = vunpack.c.l.b16 %v2885
        %v3166 = vunpack.c.h.b16 %v2885
        %v3167 = vunpack.c.l.b16 %v2886
        %v3168 = vunpack.c.h.b16 %v2886
        %v3169 = vunpack.c.l.b16 %v2887
        %v3170 = vunpack.c.h.b16 %v2887
        %v3171 = vunpack.c.l.b16 %v2888
        %v3172 = vunpack.c.h.b16 %v2888
        %v3173 = vunpack.c.l.b16 %v2889
        %v3174 = vunpack.c.h.b16 %v2889
        %v3175 = vunpack.c.l.b16 %v2890
        %v3176 = vunpack.c.h.b16 %v2890
        %v3177 = vunpack.c.l.b16 %v2891
        %v3178 = vunpack.c.h.b16 %v2891
        %v3179 = vunpack.c.l.b16 %v2892
        %v3180 = vunpack.c.h.b16 %v2892
        %v3181 = vunpack.c.l.b16 %v2893
        %v3182 = vunpack.c.h.b16 %v2893
        %v3183 = vunpack.c.l.b16 %v2894
        %v3184 = vunpack.c.h.b16 %v2894
        %v3185 = vunpack.c.l.b16 %v2895
        %v3186 = vunpack.c.h.b16 %v2895
        %v3187 = vunpack.c.l.b16 %v2896
        %v3188 = vunpack.c.h.b16 %v2896
        %v3189 = vunpack.c.l.b16 %v2897
        %v3190 = vunpack.c.h.b16 %v2897
        %v3191 = vunpack.c.l.b16 %v2898
        %v3192 = vunpack.c.h.b16 %v2898
        %v3193 = vunpack.c.l.b16 %v2899
        %v3194 = vunpack.c.h.b16 %v2899
        %v3195 = vunpack.c.l.b16 %v2900
        %v3196 = vunpack.c.h.b16 %v2900
        %v3197 = vunpack.c.l.b16 %v2901
        %v3198 = vunpack.c.h.b16 %v2901
        %v3199 = vunpack.c.l.b16 %v2902
        %v3200 = vunpack.c.h.b16 %v2902
        %v3201 = vunpack.c.l.b16 %v2903
        %v3202 = vunpack.c.h.b16 %v2903
        %v3203 = vunpack.c.l.b16 %v2904
        %v3204 = vunpack.c.h.b16 %v2904
        %v3205 = vunpack.c.l.b16 %v2905
        %v3206 = vunpack.c.h.b16 %v2905
        %v3207 = vunpack.c.l.b16 %v2906
        %v3208 = vunpack.c.h.b16 %v2906
        %v3209 = vunpack.c.l.b16 %v2907
        %v3210 = vunpack.c.h.b16 %v2907
        %v3211 = vunpack.c.l.b16 %v2908
        %v3212 = vunpack.c.h.b16 %v2908
        %v3213 = vunpack.c.l.b16 %v2909
        %v3214 = vunpack.c.h.b16 %v2909
        %v3215 = vunpack.c.l.b16 %v2910
        %v3216 = vunpack.c.h.b16 %v2910
        %v3217 = vunpack.c.l.b16 %v2911
        %v3218 = vunpack.c.h.b16 %v2911
        %v3219 = vunpack.c.l.b16 %v2912
        %v3220 = vunpack.c.h.b16 %v2912
        %v3221 = vunpack.c.l.b16 %v2913
        %v3222 = vunpack.c.h.b16 %v2913
        %v3223 = vunpack.c.l.b16 %v2914
        %v3224 = vunpack.c.h.b16 %v2914
        %v3225 = vunpack.c.l.b16 %v2915
        %v3226 = vunpack.c.h.b16 %v2915
        %v3227 = vunpack.c.l.b16 %v2916
        %v3228 = vunpack.c.h.b16 %v2916
        %v3229 = vunpack.c.l.b16 %v2917
        %v3230 = vunpack.c.h.b16 %v2917
        %v3231 = vunpack.c.l.b16 %v2918
        %v3232 = vunpack.c.h.b16 %v2918
        %v3233 = vunpack.c.l.b16 %v2919
        %v3234 = vunpack.c.h.b16 %v2919
        %v3235 = vunpack.c.l.b16 %v2920
        %v3236 = vunpack.c.h.b16 %v2920
        %v3237 = vunpack.c.l.b16 %v2921
        %v3238 = vunpack.c.h.b16 %v2921
        %v3239 = vunpack.c.l.b16 %v2922
        %v3240 = vunpack.c.h.b16 %v2922
        %v3241 = vunpack.c.l.b16 %v2923
        %v3242 = vunpack.c.h.b16 %v2923
        %v3243 = vunpack.c.l.b16 %v2924
        %v3244 = vunpack.c.h.b16 %v2924
        %v3245 = vunpack.c.l.b16 %v2925
        %v3246 = vunpack.c.h.b16 %v2925
        %v3247 = vunpack.c.l.b16 %v2926
        %v3248 = vunpack.c.h.b16 %v2926
        %v3249 = vunpack.c.l.b16 %v2927
        %v3250 = vunpack.c.h.b16 %v2927
        %v3251 = vunpack.c.l.b16 %v2928
        %v3252 = vunpack.c.h.b16 %v2928
        %v3253 = vunpack.c.l.b16 %v2929
        %v3254 = vunpack.c.h.b16 %v2929
        %v3255 = vunpack.c.l.b16 %v2930
        %v3256 = vunpack.c.h.b16 %v2930
        %v3257 = vunpack.c.l.b16 %v2931
        %v3258 = vunpack.c.h.b16 %v2931
        %v3259 = vunpack.c.l.b16 %v2932
        %v3260 = vunpack.c.h.b16 %v2932
        %v3261 = vunpack.c.l.b16 %v2933
        %v3262 = vunpack.c.h.b16 %v2933
        %v3263 = vunpack.c.l.b16 %v2934
        %v3264 = vunpack.c.h.b16 %v2934
        %v3265 = vunpack.c.l.b16 %v2935
        %v3266 = vunpack.c.h.b16 %v2935
        %v3267 = vunpack.c.l.b16 %v2936
        %v3268 = vunpack.c.h.b16 %v2936
        %v3269 = vunpack.c.l.b16 %v2937
        %v3270 = vunpack.c.h.b16 %v2937
        %v3271 = vunpack.c.l.b16 %v2938
        %v3272 = vunpack.c.h.b16 %v2938
        %v3273 = vunpack.c.l.b16 %v2939
        %v3274 = vunpack.c.h.b16 %v2939
        %v3275 = vunpack.c.l.b16 %v2940
        %v3276 = vunpack.c.h.b16 %v2940
        %v3277 = vunpack.c.l.b16 %v2941
        %v3278 = vunpack.c.h.b16 %v2941
        %v3279 = vunpack.c.l.b16 %v2942
        %v3280 = vunpack.c.h.b16 %v2942
        %v3281 = vunpack.c.l.b16 %v2943
        %v3282 = vunpack.c.h.b16 %v2943
        %v3283 = vunpack.c.l.b16 %v2944
        %v3284 = vunpack.c.h.b16 %v2944
        %v3285 = vunpack.c.l.b16 %v2945
        %v3286 = vunpack.c.h.b16 %v2945
        %v3287 = vunpack.c.l.b16 %v2946
        %v3288 = vunpack.c.h.b16 %v2946
        %v3289 = vunpack.c.l.b16 %v2947
        %v3290 = vunpack.c.h.b16 %v2947
        %v3291 = vunpack.c.l.b16 %v2948
        %v3292 = vunpack.c.h.b16 %v2948
        %v3293 = vunpack.c.l.b16 %v2949
        %v3294 = vunpack.c.h.b16 %v2949
        %v3295 = vunpack.c.l.b16 %v2950
        %v3296 = vunpack.c.h.b16 %v2950
        %v3297 = vunpack.c.l.b16 %v2951
        %v3298 = vunpack.c.h.b16 %v2951
        %v3299 = vunpack.c.l.b16 %v2952
        %v3300 = vunpack.c.h.b16 %v2952
        %v3301 = vunpack.c.l.b16 %v2953
        %v3302 = vunpack.c.h.b16 %v2953
        %v3303 = vunpack.c.l.b16 %v2954
        %v3304 = vunpack.c.h.b16 %v2954
        %v3305 = vunpack.c.l.b16 %v2955
        %v3306 = vunpack.c.h.b16 %v2955
        %v3307 = vunpack.c.l.b16 %v2956
        %v3308 = vunpack.c.h.b16 %v2956
        %v3309 = vunpack.c.l.b16 %v2957
        %v3310 = vunpack.c.h.b16 %v2957
        %v3311 = vunpack.c.l.b16 %v2958
        %v3312 = vunpack.c.h.b16 %v2958
        %v3313 = vunpack.c.l.b16 %v2959
        %v3314 = vunpack.c.h.b16 %v2959
        %v3315 = vunpack.c.l.b16 %v2960
        %v3316 = vunpack.c.h.b16 %v2960
        %v3317 = vunpack.c.l.b16 %v2961
        %v3318 = vunpack.c.h.b16 %v2961
        %v3319 = vunpack.c.l.b16 %v2962
        %v3320 = vunpack.c.h.b16 %v2962
        %v3321 = vunpack.c.l.b16 %v2963
        %v3322 = vunpack.c.h.b16 %v2963
        %v3323 = vunpack.c.l.b16 %v2964
        %v3324 = vunpack.c.h.b16 %v2964
        %v3325 = vunpack.c.l.b16 %v2965
        %v3326 = vunpack.c.h.b16 %v2965
        %v3327 = vunpack.c.l.b16 %v2966
        %v3328 = vunpack.c.h.b16 %v2966
        %v3329 = vunpack.c.l.b16 %v2967
        %v3330 = vunpack.c.h.b16 %v2967
        %v3331 = vunpack.c.l.b16 %v2968
        %v3332 = vunpack.c.h.b16 %v2968
        %v3333 = vunpack.c.l.b16 %v2969
        %v3334 = vunpack.c.h.b16 %v2969
        %v3335 = vunpack.c.l.b16 %v2970
        %v3336 = vunpack.c.h.b16 %v2970
        %v3337 = vunpack.c.l.b16 %v2971
        %v3338 = vunpack.c.h.b16 %v2971
        %v3339 = vunpack.c.l.b16 %v2972
        %v3340 = vunpack.c.h.b16 %v2972
        %v3341 = vunpack.c.l.b16 %v2973
        %v3342 = vunpack.c.h.b16 %v2973
        %v3343 = vunpack.c.l.b16 %v2974
        %v3344 = vunpack.c.h.b16 %v2974
        %v3345 = vunpack.c.l.b16 %v2975
        %v3346 = vunpack.c.h.b16 %v2975
        %v3347 = vunpack.c.l.b16 %v2976
        %v3348 = vunpack.c.h.b16 %v2976
        %v3349 = vunpack.c.l.b16 %v2977
        %v3350 = vunpack.c.h.b16 %v2977
        %v3351 = vunpack.c.l.b16 %v2978
        %v3352 = vunpack.c.h.b16 %v2978
        %v3353 = vunpack.c.l.b16 %v2979
        %v3354 = vunpack.c.h.b16 %v2979
        %v3355 = vunpack.c.l.b16 %v2980
        %v3356 = vunpack.c.h.b16 %v2980
        %v3357 = vunpack.c.l.b16 %v2981
        %v3358 = vunpack.c.h.b16 %v2981
        %v3359 = vunpack.c.l.b16 %v2982
        %v3360 = vunpack.c.h.b16 %v2982
        %v3361 = vunpack.c.l.b16 %v2983
        %v3362 = vunpack.c.h.b16 %v2983
        %v3363 = vunpack.c.l.b16 %v2984
        %v3364 = vunpack.c.h.b16 %v2984
        %v3365 = vunpack.c.l.b16 %v2985
        %v3366 = vunpack.c.h.b16 %v2985
        %v3367 = vunpack.c.l.b16 %v2986
        %v3368 = vunpack.c.h.b16 %v2986
        %v3369 = vunpack.c.l.b16 %v2987
        %v3370 = vunpack.c.h.b16 %v2987
        %v3371 = vunpack.c.l.b16 %v2988
        %v3372 = vunpack.c.h.b16 %v2988
        %v3373 = vpack.c.b16 %v3117, %v3117
        %v3374 = vpack.c.b16 %v3118, %v3118
        %v3375 = vpack.c.b16 %v3119, %v3119
        %v3376 = vpack.c.b16 %v3120, %v3120
        %v3377 = vpack.c.b16 %v3121, %v3121
        %v3378 = vpack.c.b16 %v3122, %v3122
        %v3379 = vpack.c.b16 %v3123, %v3123
        %v3380 = vpack.c.b16 %v3124, %v3124
        %v3381 = vpack.c.b16 %v3125, %v3125
        %v3382 = vpack.c.b16 %v3126, %v3126
        %v3383 = vpack.c.b16 %v3127, %v3127
        %v3384 = vpack.c.b16 %v3128, %v3128
        %v3385 = vpack.c.b16 %v3129, %v3129
        %v3386 = vpack.c.b16 %v3130, %v3130
        %v3387 = vpack.c.b16 %v3131, %v3131
        %v3388 = vpack.c.b16 %v3132, %v3132
        %v3389 = vpack.c.b16 %v3133, %v3133
        %v3390 = vpack.c.b16 %v3134, %v3134
        %v3391 = vpack.c.b16 %v3135, %v3135
        %v3392 = vpack.c.b16 %v3136, %v3136
        %v3393 = vpack.c.b16 %v3137, %v3137
        %v3394 = vpack.c.b16 %v3138, %v3138
        %v3395 = vpack.c.b16 %v3139, %v3139
        %v3396 = vpack.c.b16 %v3140, %v3140
        %v3397 = vpack.c.b16 %v3141, %v3141
        %v3398 = vpack.c.b16 %v3142, %v3142
        %v3399 = vpack.c.b16 %v3143, %v3143
        %v3400 = vpack.c.b16 %v3144, %v3144
        %v3401 = vpack.c.b16 %v3145, %v3145
        %v3402 = vpack.c.b16 %v3146, %v3146
        %v3403 = vpack.c.b16 %v3147, %v3147
        %v3404 = vpack.c.b16 %v3148, %v3148
        %v3405 = vpack.c.b16 %v3149, %v3149
        %v3406 = vpack.c.b16 %v3150, %v3150
        %v3407 = vpack.c.b16 %v3151, %v3151
        %v3408 = vpack.c.b16 %v3152, %v3152
        %v3409 = vpack.c.b16 %v3153, %v3153
        %v3410 = vpack.c.b16 %v3154, %v3154
        %v3411 = vpack.c.b16 %v3155, %v3155
        %v3412 = vpack.c.b16 %v3156, %v3156
        %v3413 = vpack.c.b16 %v3157, %v3157
        %v3414 = vpack.c.b16 %v3158, %v3158
        %v3415 = vpack.c.b16 %v3159, %v3159
        %v3416 = vpack.c.b16 %v3160, %v3160
        %v3417 = vpack.c.b16 %v3161, %v3161
        %v3418 = vpack.c.b16 %v3162, %v3162
        %v3419 = vpack.c.b16 %v3163, %v3163
        %v3420 = vpack.c.b16 %v3164, %v3164
        %v3421 = vpack.c.b16 %v3165, %v3165
        %v3422 = vpack.c.b16 %v3166, %v3166
        %v3423 = vpack.c.b16 %v3167, %v3167
        %v3424 = vpack.c.b16 %v3168, %v3168
        %v3425 = vpack.c.b16 %v3169, %v3169
        %v3426 = vpack.c.b16 %v3170, %v3170
        %v3427 = vpack.c.b16 %v3171, %v3171
        %v3428 = vpack.c.b16 %v3172, %v3172
        %v3429 = vpack.c.b16 %v3173, %v3173
        %v3430 = vpack.c.b16 %v3174, %v3174
        %v3431 = vpack.c.b16 %v3175, %v3175
        %v3432 = vpack.c.b16 %v3176, %v3176
        %v3433 = vpack.c.b16 %v3177, %v3177
        %v3434 = vpack.c.b16 %v3178, %v3178
        %v3435 = vpack.c.b16 %v3179, %v3179
        %v3436 = vpack.c.b16 %v3180, %v3180
        %v3437 = vpack.c.b16 %v3181, %v3181
        %v3438 = vpack.c.b16 %v3182, %v3182
        %v3439 = vpack.c.b16 %v3183, %v3183
        %v3440 = vpack.c.b16 %v3184, %v3184
        %v3441 = vpack.c.b16 %v3185, %v3185
        %v3442 = vpack.c.b16 %v3186, %v3186
        %v3443 = vpack.c.b16 %v3187, %v3187
        %v3444 = vpack.c.b16 %v3188, %v3188
        %v3445 = vpack.c.b16 %v3189, %v3189
        %v3446 = vpack.c.b16 %v3190, %v3190
        %v3447 = vpack.c.b16 %v3191, %v3191
        %v3448 = vpack.c.b16 %v3192, %v3192
        %v3449 = vpack.c.b16 %v3193, %v3193
        %v3450 = vpack.c.b16 %v3194, %v3194
        %v3451 = vpack.c.b16 %v3195, %v3195
        %v3452 = vpack.c.b16 %v3196, %v3196
        %v3453 = vpack.c.b16 %v3197, %v3197
        %v3454 = vpack.c.b16 %v3198, %v3198
        %v3455 = vpack.c.b16 %v3199, %v3199
        %v3456 = vpack.c.b16 %v3200, %v3200
        %v3457 = vpack.c.b16 %v3201, %v3201
        %v3458 = vpack.c.b16 %v3202, %v3202
        %v3459 = vpack.c.b16 %v3203, %v3203
        %v3460 = vpack.c.b16 %v3204, %v3204
        %v3461 = vpack.c.b16 %v3205, %v3205
        %v3462 = vpack.c.b16 %v3206, %v3206
        %v3463 = vpack.c.b16 %v3207, %v3207
        %v3464 = vpack.c.b16 %v3208, %v3208
        %v3465 = vpack.c.b16 %v3209, %v3209
        %v3466 = vpack.c.b16 %v3210, %v3210
        %v3467 = vpack.c.b16 %v3211, %v3211
        %v3468 = vpack.c.b16 %v3212, %v3212
        %v3469 = vpack.c.b16 %v3213, %v3213
        %v3470 = vpack.c.b16 %v3214, %v3214
        %v3471 = vpack.c.b16 %v3215, %v3215
        %v3472 = vpack.c.b16 %v3216, %v3216
        %v3473 = vpack.c.b16 %v3217, %v3217
        %v3474 = vpack.c.b16 %v3218, %v3218
        %v3475 = vpack.c.b16 %v3219, %v3219
        %v3476 = vpack.c.b16 %v3220, %v3220
        %v3477 = vpack.c.b16 %v3221, %v3221
        %v3478 = vpack.c.b16 %v3222, %v3222
        %v3479 = vpack.c.b16 %v3223, %v3223
        %v3480 = vpack.c.b16 %v3224, %v3224
        %v3481 = vpack.c.b16 %v3225, %v3225
        %v3482 = vpack.c.b16 %v3226, %v3226
        %v3483 = vpack.c.b16 %v3227, %v3227
        %v3484 = vpack.c.b16 %v3228, %v3228
        %v3485 = vpack.c.b16 %v3229, %v3229
        %v3486 = vpack.c.b16 %v3230, %v3230
        %v3487 = vpack.c.b16 %v3231, %v3231
        %v3488 = vpack.c.b16 %v3232, %v3232
        %v3489 = vpack.c.b16 %v3233, %v3233
        %v3490 = vpack.c.b16 %v3234, %v3234
        %v3491 = vpack.c.b16 %v3235, %v3235
        %v3492 = vpack.c.b16 %v3236, %v3236
        %v3493 = vpack.c.b16 %v3237, %v3237
        %v3494 = vpack.c.b16 %v3238, %v3238
        %v3495 = vpack.c.b16 %v3239, %v3239
        %v3496 = vpack.c.b16 %v3240, %v3240
        %v3497 = vpack.c.b16 %v3241, %v3241
        %v3498 = vpack.c.b16 %v3242, %v3242
        %v3499 = vpack.c.b16 %v3243, %v3243
        %v3500 = vpack.c.b16 %v3244, %v3244
        %v3501 = vpack.c.b16 %v3245, %v3245
        %v3502 = vpack.c.b16 %v3246, %v3246
        %v3503 = vpack.c.b16 %v3247, %v3247
        %v3504 = vpack.c.b16 %v3248, %v3248
        %v3505 = vpack.c.b16 %v3249, %v3249
        %v3506 = vpack.c.b16 %v3250, %v3250
        %v3507 = vpack.c.b16 %v3251, %v3251
        %v3508 = vpack.c.b16 %v3252, %v3252
        %v3509 = vpack.c.b16 %v3253, %v3253
        %v3510 = vpack.c.b16 %v3254, %v3254
        %v3511 = vpack.c.b16 %v3255, %v3255
        %v3512 = vpack.c.b16 %v3256, %v3256
        %v3513 = vpack.c.b16 %v3257, %v3257
        %v3514 = vpack.c.b16 %v3258, %v3258
        %v3515 = vpack.c.b16 %v3259, %v3259
        %v3516 = vpack.c.b16 %v3260, %v3260
        %v3517 = vpack.c.b16 %v3261, %v3261
        %v3518 = vpack.c.b16 %v3262, %v3262
        %v3519 = vpack.c.b16 %v3263, %v3263
        %v3520 = vpack.c.b16 %v3264, %v3264
        %v3521 = vpack.c.b16 %v3265, %v3265
        %v3522 = vpack.c.b16 %v3266, %v3266
        %v3523 = vpack.c.b16 %v3267, %v3267
        %v3524 = vpack.c.b16 %v3268, %v3268
        %v3525 = vpack.c.b16 %v3269, %v3269
        %v3526 = vpack.c.b16 %v3270, %v3270
        %v3527 = vpack.c.b16 %v3271, %v3271
        %v3528 = vpack.c.b16 %v3272, %v3272
        %v3529 = vpack.c.b16 %v3273, %v3273
        %v3530 = vpack.c.b16 %v3274, %v3274
        %v3531 = vpack.c.b16 %v3275, %v3275
        %v3532 = vpack.c.b16 %v3276, %v3276
        %v3533 = vpack.c.b16 %v3277, %v3277
        %v3534 = vpack.c.b16 %v3278, %v3278
        %v3535 = vpack.c.b16 %v3279, %v3279
        %v3536 = vpack.c.b16 %v3280, %v3280
        %v3537 = vpack.c.b16 %v3281, %v3281
        %v3538 = vpack.c.b16 %v3282, %v3282
        %v3539 = vpack.c.b16 %v3283, %v3283
        %v3540 = vpack.c.b16 %v3284, %v3284
        %v3541 = vpack.c.b16 %v3285, %v3285
        %v3542 = vpack.c.b16 %v3286, %v3286
        %v3543 = vpack.c.b16 %v3287, %v3287
        %v3544 = vpack.c.b16 %v3288, %v3288
        %v3545 = vpack.c.b16 %v3289, %v3289
        %v3546 = vpack.c.b16 %v3290, %v3290
        %v3547 = vpack.c.b16 %v3291, %v3291
        %v3548 = vpack.c.b16 %v3292, %v3292
        %v3549 = vpack.c.b16 %v3293, %v3293
        %v3550 = vpack.c.b16 %v3294, %v3294
        %v3551 = vpack.c.b16 %v3295, %v3295
        %v3552 = vpack.c.b16 %v3296, %v3296
        %v3553 = vpack.c.b16 %v3297, %v3297
        %v3554 = vpack.c.b16 %v3298, %v3298
        %v3555 = vpack.c.b16 %v3299, %v3299
        %v3556 = vpack.c.b16 %v3300, %v3300
        %v3557 = vpack.c.b16 %v3301, %v3301
        %v3558 = vpack.c.b16 %v3302, %v3302
        %v3559 = vpack.c.b16 %v3303, %v3303
        %v3560 = vpack.c.b16 %v3304, %v3304
        %v3561 = vpack.c.b16 %v3305, %v3305
        %v3562 = vpack.c.b16 %v3306, %v3306
        %v3563 = vpack.c.b16 %v3307, %v3307
        %v3564 = vpack.c.b16 %v3308, %v3308
        %v3565 = vpack.c.b16 %v3309, %v3309
        %v3566 = vpack.c.b16 %v3310, %v3310
        %v3567 = vpack.c.b16 %v3311, %v3311
        %v3568 = vpack.c.b16 %v3312, %v3312
        %v3569 = vpack.c.b16 %v3313, %v3313
        %v3570 = vpack.c.b16 %v3314, %v3314
        %v3571 = vpack.c.b16 %v3315, %v3315
        %v3572 = vpack.c.b16 %v3316, %v3316
        %v3573 = vpack.c.b16 %v3317, %v3317
        %v3574 = vpack.c.b16 %v3318, %v3318
        %v3575 = vpack.c.b16 %v3319, %v3319
        %v3576 = vpack.c.b16 %v3320, %v3320
        %v3577 = vpack.c.b16 %v3321, %v3321
        %v3578 = vpack.c.b16 %v3322, %v3322
        %v3579 = vpack.c.b16 %v3323, %v3323
        %v3580 = vpack.c.b16 %v3324, %v3324
        %v3581 = vpack.c.b16 %v3325, %v3325
        %v3582 = vpack.c.b16 %v3326, %v3326
        %v3583 = vpack.c.b16 %v3327, %v3327
        %v3584 = vpack.c.b16 %v3328, %v3328
        %v3585 = vpack.c.b16 %v3329, %v3329
        %v3586 = vpack.c.b16 %v3330, %v3330
        %v3587 = vpack.c.b16 %v3331, %v3331
        %v3588 = vpack.c.b16 %v3332, %v3332
        %v3589 = vpack.c.b16 %v3333, %v3333
        %v3590 = vpack.c.b16 %v3334, %v3334
        %v3591 = vpack.c.b16 %v3335, %v3335
        %v3592 = vpack.c.b16 %v3336, %v3336
        %v3593 = vpack.c.b16 %v3337, %v3337
        %v3594 = vpack.c.b16 %v3338, %v3338
        %v3595 = vpack.c.b16 %v3339, %v3339
        %v3596 = vpack.c.b16 %v3340, %v3340
        %v3597 = vpack.c.b16 %v3341, %v3341
        %v3598 = vpack.c.b16 %v3342, %v3342
        %v3599 = vpack.c.b16 %v3343, %v3343
        %v3600 = vpack.c.b16 %v3344, %v3344
        %v3601 = vpack.c.b16 %v3345, %v3345
        %v3602 = vpack.c.b16 %v3346, %v3346
        %v3603 = vpack.c.b16 %v3347, %v3347
        %v3604 = vpack.c.b16 %v3348, %v3348
        %v3605 = vpack.c.b16 %v3349, %v3349
        %v3606 = vpack.c.b16 %v3350, %v3350
        %v3607 = vpack.c.b16 %v3351, %v3351
        %v3608 = vpack.c.b16 %v3352, %v3352
        %v3609 = vpack.c.b16 %v3353, %v3353
        %v3610 = vpack.c.b16 %v3354, %v3354
        %v3611 = vpack.c.b16 %v3355, %v3355
        %v3612 = vpack.c.b16 %v3356, %v3356
        %v3613 = vpack.c.b16 %v3357, %v3357
        %v3614 = vpack.c.b16 %v3358, %v3358
        %v3615 = vpack.c.b16 %v3359, %v3359
        %v3616 = vpack.c.b16 %v3360, %v3360
        %v3617 = vpack.c.b16 %v3361, %v3361
        %v3618 = vpack.c.b16 %v3362, %v3362
        %v3619 = vpack.c.b16 %v3363, %v3363
        %v3620 = vpack.c.b16 %v3364, %v3364
        %v3621 = vpack.c.b16 %v3365, %v3365
        %v3622 = vpack.c.b16 %v3366, %v3366
        %v3623 = vpack.c.b16 %v3367, %v3367
        %v3624 = vpack.c.b16 %v3368, %v3368
        %v3625 = vpack.c.b16 %v3369, %v3369
        %v3626 = vpack.c.b16 %v3370, %v3370
        %v3627 = vpack.c.b16 %v3371, %v3371
        %v3628 = vpack.c.b16 %v3372, %v3372
        %vm3885 = vcmask 257024
        %3886 = vst.msk [vmem:[%s210] sm:$0xf] %vm3885, %v3373
        %3887 = vst.msk [vmem:[%s210 + $0x4] sm:$0xf] %vm3885, %v3374
        %3888 = vst.msk [vmem:[%s210 + $0x8] sm:$0xf] %vm3885, %v3375
        %3889 = vst.msk [vmem:[%s210 + $0xc] sm:$0xf] %vm3885, %v3376
        %3890 = vst.msk [vmem:[%s210 + $0x10] sm:$0xf] %vm3885, %v3377
        %3891 = vst.msk [vmem:[%s210 + $0x14] sm:$0xf] %vm3885, %v3378
        %3892 = vst.msk [vmem:[%s210 + $0x18] sm:$0xf] %vm3885, %v3379
        %3893 = vst.msk [vmem:[%s210 + $0x1c] sm:$0xf] %vm3885, %v3380
        %3894 = vst.msk [vmem:[%s210 + $0x20] sm:$0xf] %vm3885, %v3381
        %3895 = vst.msk [vmem:[%s210 + $0x24] sm:$0xf] %vm3885, %v3382
        %3896 = vst.msk [vmem:[%s210 + $0x28] sm:$0xf] %vm3885, %v3383
        %3897 = vst.msk [vmem:[%s210 + $0x2c] sm:$0xf] %vm3885, %v3384
        %3898 = vst.msk [vmem:[%s210 + $0x30] sm:$0xf] %vm3885, %v3385
        %3899 = vst.msk [vmem:[%s210 + $0x34] sm:$0xf] %vm3885, %v3386
        %3900 = vst.msk [vmem:[%s210 + $0x38] sm:$0xf] %vm3885, %v3387
        %3901 = vst.msk [vmem:[%s210 + $0x3c] sm:$0xf] %vm3885, %v3388
        %3902 = vst.msk [vmem:[%s210 + $0x40] sm:$0xf] %vm3885, %v3389
        %3903 = vst.msk [vmem:[%s210 + $0x44] sm:$0xf] %vm3885, %v3390
        %3904 = vst.msk [vmem:[%s210 + $0x48] sm:$0xf] %vm3885, %v3391
        %3905 = vst.msk [vmem:[%s210 + $0x4c] sm:$0xf] %vm3885, %v3392
        %3906 = vst.msk [vmem:[%s210 + $0x50] sm:$0xf] %vm3885, %v3393
        %3907 = vst.msk [vmem:[%s210 + $0x54] sm:$0xf] %vm3885, %v3394
        %3908 = vst.msk [vmem:[%s210 + $0x58] sm:$0xf] %vm3885, %v3395
        %3909 = vst.msk [vmem:[%s210 + $0x5c] sm:$0xf] %vm3885, %v3396
        %3910 = vst.msk [vmem:[%s210 + $0x60] sm:$0xf] %vm3885, %v3397
        %3911 = vst.msk [vmem:[%s210 + $0x64] sm:$0xf] %vm3885, %v3398
        %3912 = vst.msk [vmem:[%s210 + $0x68] sm:$0xf] %vm3885, %v3399
        %3913 = vst.msk [vmem:[%s210 + $0x6c] sm:$0xf] %vm3885, %v3400
        %3914 = vst.msk [vmem:[%s210 + $0x70] sm:$0xf] %vm3885, %v3401
        %3915 = vst.msk [vmem:[%s210 + $0x74] sm:$0xf] %vm3885, %v3402
        %3916 = vst.msk [vmem:[%s210 + $0x78] sm:$0xf] %vm3885, %v3403
        %3917 = vst.msk [vmem:[%s210 + $0x7c] sm:$0xf] %vm3885, %v3404
        %3918 = vst.msk [vmem:[%s210 + $0x80] sm:$0xf] %vm3885, %v3405
        %3919 = vst.msk [vmem:[%s210 + $0x84] sm:$0xf] %vm3885, %v3406
        %3920 = vst.msk [vmem:[%s210 + $0x88] sm:$0xf] %vm3885, %v3407
        %3921 = vst.msk [vmem:[%s210 + $0x8c] sm:$0xf] %vm3885, %v3408
        %3922 = vst.msk [vmem:[%s210 + $0x90] sm:$0xf] %vm3885, %v3409
        %3923 = vst.msk [vmem:[%s210 + $0x94] sm:$0xf] %vm3885, %v3410
        %3924 = vst.msk [vmem:[%s210 + $0x98] sm:$0xf] %vm3885, %v3411
        %3925 = vst.msk [vmem:[%s210 + $0x9c] sm:$0xf] %vm3885, %v3412
        %3926 = vst.msk [vmem:[%s210 + $0xa0] sm:$0xf] %vm3885, %v3413
        %3927 = vst.msk [vmem:[%s210 + $0xa4] sm:$0xf] %vm3885, %v3414
        %3928 = vst.msk [vmem:[%s210 + $0xa8] sm:$0xf] %vm3885, %v3415
        %3929 = vst.msk [vmem:[%s210 + $0xac] sm:$0xf] %vm3885, %v3416
        %3930 = vst.msk [vmem:[%s210 + $0xb0] sm:$0xf] %vm3885, %v3417
        %3931 = vst.msk [vmem:[%s210 + $0xb4] sm:$0xf] %vm3885, %v3418
        %3932 = vst.msk [vmem:[%s210 + $0xb8] sm:$0xf] %vm3885, %v3419
        %3933 = vst.msk [vmem:[%s210 + $0xbc] sm:$0xf] %vm3885, %v3420
        %3934 = vst.msk [vmem:[%s210 + $0xc0] sm:$0xf] %vm3885, %v3421
        %3935 = vst.msk [vmem:[%s210 + $0xc4] sm:$0xf] %vm3885, %v3422
        %3936 = vst.msk [vmem:[%s210 + $0xc8] sm:$0xf] %vm3885, %v3423
        %3937 = vst.msk [vmem:[%s210 + $0xcc] sm:$0xf] %vm3885, %v3424
        %3938 = vst.msk [vmem:[%s210 + $0xd0] sm:$0xf] %vm3885, %v3425
        %3939 = vst.msk [vmem:[%s210 + $0xd4] sm:$0xf] %vm3885, %v3426
        %3940 = vst.msk [vmem:[%s210 + $0xd8] sm:$0xf] %vm3885, %v3427
        %3941 = vst.msk [vmem:[%s210 + $0xdc] sm:$0xf] %vm3885, %v3428
        %3942 = vst.msk [vmem:[%s210 + $0xe0] sm:$0xf] %vm3885, %v3429
        %3943 = vst.msk [vmem:[%s210 + $0xe4] sm:$0xf] %vm3885, %v3430
        %3944 = vst.msk [vmem:[%s210 + $0xe8] sm:$0xf] %vm3885, %v3431
        %3945 = vst.msk [vmem:[%s210 + $0xec] sm:$0xf] %vm3885, %v3432
        %3946 = vst.msk [vmem:[%s210 + $0xf0] sm:$0xf] %vm3885, %v3433
        %3947 = vst.msk [vmem:[%s210 + $0xf4] sm:$0xf] %vm3885, %v3434
        %3948 = vst.msk [vmem:[%s210 + $0xf8] sm:$0xf] %vm3885, %v3435
        %3949 = vst.msk [vmem:[%s210 + $0xfc] sm:$0xf] %vm3885, %v3436
        %3950 = vst.msk [vmem:[%s210 + $0x100] sm:$0xf] %vm3885, %v3437
        %3951 = vst.msk [vmem:[%s210 + $0x104] sm:$0xf] %vm3885, %v3438
        %3952 = vst.msk [vmem:[%s210 + $0x108] sm:$0xf] %vm3885, %v3439
        %3953 = vst.msk [vmem:[%s210 + $0x10c] sm:$0xf] %vm3885, %v3440
        %3954 = vst.msk [vmem:[%s210 + $0x110] sm:$0xf] %vm3885, %v3441
        %3955 = vst.msk [vmem:[%s210 + $0x114] sm:$0xf] %vm3885, %v3442
        %3956 = vst.msk [vmem:[%s210 + $0x118] sm:$0xf] %vm3885, %v3443
        %3957 = vst.msk [vmem:[%s210 + $0x11c] sm:$0xf] %vm3885, %v3444
        %3958 = vst.msk [vmem:[%s210 + $0x120] sm:$0xf] %vm3885, %v3445
        %3959 = vst.msk [vmem:[%s210 + $0x124] sm:$0xf] %vm3885, %v3446
        %3960 = vst.msk [vmem:[%s210 + $0x128] sm:$0xf] %vm3885, %v3447
        %3961 = vst.msk [vmem:[%s210 + $0x12c] sm:$0xf] %vm3885, %v3448
        %3962 = vst.msk [vmem:[%s210 + $0x130] sm:$0xf] %vm3885, %v3449
        %3963 = vst.msk [vmem:[%s210 + $0x134] sm:$0xf] %vm3885, %v3450
        %3964 = vst.msk [vmem:[%s210 + $0x138] sm:$0xf] %vm3885, %v3451
        %3965 = vst.msk [vmem:[%s210 + $0x13c] sm:$0xf] %vm3885, %v3452
        %3966 = vst.msk [vmem:[%s210 + $0x140] sm:$0xf] %vm3885, %v3453
        %3967 = vst.msk [vmem:[%s210 + $0x144] sm:$0xf] %vm3885, %v3454
        %3968 = vst.msk [vmem:[%s210 + $0x148] sm:$0xf] %vm3885, %v3455
        %3969 = vst.msk [vmem:[%s210 + $0x14c] sm:$0xf] %vm3885, %v3456
        %3970 = vst.msk [vmem:[%s210 + $0x150] sm:$0xf] %vm3885, %v3457
        %3971 = vst.msk [vmem:[%s210 + $0x154] sm:$0xf] %vm3885, %v3458
        %3972 = vst.msk [vmem:[%s210 + $0x158] sm:$0xf] %vm3885, %v3459
        %3973 = vst.msk [vmem:[%s210 + $0x15c] sm:$0xf] %vm3885, %v3460
        %3974 = vst.msk [vmem:[%s210 + $0x160] sm:$0xf] %vm3885, %v3461
        %3975 = vst.msk [vmem:[%s210 + $0x164] sm:$0xf] %vm3885, %v3462
        %3976 = vst.msk [vmem:[%s210 + $0x168] sm:$0xf] %vm3885, %v3463
        %3977 = vst.msk [vmem:[%s210 + $0x16c] sm:$0xf] %vm3885, %v3464
        %3978 = vst.msk [vmem:[%s210 + $0x170] sm:$0xf] %vm3885, %v3465
        %3979 = vst.msk [vmem:[%s210 + $0x174] sm:$0xf] %vm3885, %v3466
        %3980 = vst.msk [vmem:[%s210 + $0x178] sm:$0xf] %vm3885, %v3467
        %3981 = vst.msk [vmem:[%s210 + $0x17c] sm:$0xf] %vm3885, %v3468
        %3982 = vst.msk [vmem:[%s210 + $0x180] sm:$0xf] %vm3885, %v3469
        %3983 = vst.msk [vmem:[%s210 + $0x184] sm:$0xf] %vm3885, %v3470
        %3984 = vst.msk [vmem:[%s210 + $0x188] sm:$0xf] %vm3885, %v3471
        %3985 = vst.msk [vmem:[%s210 + $0x18c] sm:$0xf] %vm3885, %v3472
        %3986 = vst.msk [vmem:[%s210 + $0x190] sm:$0xf] %vm3885, %v3473
        %3987 = vst.msk [vmem:[%s210 + $0x194] sm:$0xf] %vm3885, %v3474
        %3988 = vst.msk [vmem:[%s210 + $0x198] sm:$0xf] %vm3885, %v3475
        %3989 = vst.msk [vmem:[%s210 + $0x19c] sm:$0xf] %vm3885, %v3476
        %3990 = vst.msk [vmem:[%s210 + $0x1a0] sm:$0xf] %vm3885, %v3477
        %3991 = vst.msk [vmem:[%s210 + $0x1a4] sm:$0xf] %vm3885, %v3478
        %3992 = vst.msk [vmem:[%s210 + $0x1a8] sm:$0xf] %vm3885, %v3479
        %3993 = vst.msk [vmem:[%s210 + $0x1ac] sm:$0xf] %vm3885, %v3480
        %3994 = vst.msk [vmem:[%s210 + $0x1b0] sm:$0xf] %vm3885, %v3481
        %3995 = vst.msk [vmem:[%s210 + $0x1b4] sm:$0xf] %vm3885, %v3482
        %3996 = vst.msk [vmem:[%s210 + $0x1b8] sm:$0xf] %vm3885, %v3483
        %3997 = vst.msk [vmem:[%s210 + $0x1bc] sm:$0xf] %vm3885, %v3484
        %3998 = vst.msk [vmem:[%s210 + $0x1c0] sm:$0xf] %vm3885, %v3485
        %3999 = vst.msk [vmem:[%s210 + $0x1c4] sm:$0xf] %vm3885, %v3486
        %4000 = vst.msk [vmem:[%s210 + $0x1c8] sm:$0xf] %vm3885, %v3487
        %4001 = vst.msk [vmem:[%s210 + $0x1cc] sm:$0xf] %vm3885, %v3488
        %4002 = vst.msk [vmem:[%s210 + $0x1d0] sm:$0xf] %vm3885, %v3489
        %4003 = vst.msk [vmem:[%s210 + $0x1d4] sm:$0xf] %vm3885, %v3490
        %4004 = vst.msk [vmem:[%s210 + $0x1d8] sm:$0xf] %vm3885, %v3491
        %4005 = vst.msk [vmem:[%s210 + $0x1dc] sm:$0xf] %vm3885, %v3492
        %4006 = vst.msk [vmem:[%s210 + $0x1e0] sm:$0xf] %vm3885, %v3493
        %4007 = vst.msk [vmem:[%s210 + $0x1e4] sm:$0xf] %vm3885, %v3494
        %4008 = vst.msk [vmem:[%s210 + $0x1e8] sm:$0xf] %vm3885, %v3495
        %4009 = vst.msk [vmem:[%s210 + $0x1ec] sm:$0xf] %vm3885, %v3496
        %4010 = vst.msk [vmem:[%s210 + $0x1f0] sm:$0xf] %vm3885, %v3497
        %4011 = vst.msk [vmem:[%s210 + $0x1f4] sm:$0xf] %vm3885, %v3498
        %4012 = vst.msk [vmem:[%s210 + $0x1f8] sm:$0xf] %vm3885, %v3499
        %4013 = vst.msk [vmem:[%s210 + $0x1fc] sm:$0xf] %vm3885, %v3500
        %4014 = vst.msk [vmem:[%s210 + $0x200] sm:$0xf] %vm3885, %v3501
        %4015 = vst.msk [vmem:[%s210 + $0x204] sm:$0xf] %vm3885, %v3502
        %4016 = vst.msk [vmem:[%s210 + $0x208] sm:$0xf] %vm3885, %v3503
        %4017 = vst.msk [vmem:[%s210 + $0x20c] sm:$0xf] %vm3885, %v3504
        %4018 = vst.msk [vmem:[%s210 + $0x210] sm:$0xf] %vm3885, %v3505
        %4019 = vst.msk [vmem:[%s210 + $0x214] sm:$0xf] %vm3885, %v3506
        %4020 = vst.msk [vmem:[%s210 + $0x218] sm:$0xf] %vm3885, %v3507
        %4021 = vst.msk [vmem:[%s210 + $0x21c] sm:$0xf] %vm3885, %v3508
        %4022 = vst.msk [vmem:[%s210 + $0x220] sm:$0xf] %vm3885, %v3509
        %4023 = vst.msk [vmem:[%s210 + $0x224] sm:$0xf] %vm3885, %v3510
        %4024 = vst.msk [vmem:[%s210 + $0x228] sm:$0xf] %vm3885, %v3511
        %4025 = vst.msk [vmem:[%s210 + $0x22c] sm:$0xf] %vm3885, %v3512
        %4026 = vst.msk [vmem:[%s210 + $0x230] sm:$0xf] %vm3885, %v3513
        %4027 = vst.msk [vmem:[%s210 + $0x234] sm:$0xf] %vm3885, %v3514
        %4028 = vst.msk [vmem:[%s210 + $0x238] sm:$0xf] %vm3885, %v3515
        %4029 = vst.msk [vmem:[%s210 + $0x23c] sm:$0xf] %vm3885, %v3516
        %4030 = vst.msk [vmem:[%s210 + $0x240] sm:$0xf] %vm3885, %v3517
        %4031 = vst.msk [vmem:[%s210 + $0x244] sm:$0xf] %vm3885, %v3518
        %4032 = vst.msk [vmem:[%s210 + $0x248] sm:$0xf] %vm3885, %v3519
        %4033 = vst.msk [vmem:[%s210 + $0x24c] sm:$0xf] %vm3885, %v3520
        %4034 = vst.msk [vmem:[%s210 + $0x250] sm:$0xf] %vm3885, %v3521
        %4035 = vst.msk [vmem:[%s210 + $0x254] sm:$0xf] %vm3885, %v3522
        %4036 = vst.msk [vmem:[%s210 + $0x258] sm:$0xf] %vm3885, %v3523
        %4037 = vst.msk [vmem:[%s210 + $0x25c] sm:$0xf] %vm3885, %v3524
        %4038 = vst.msk [vmem:[%s210 + $0x260] sm:$0xf] %vm3885, %v3525
        %4039 = vst.msk [vmem:[%s210 + $0x264] sm:$0xf] %vm3885, %v3526
        %4040 = vst.msk [vmem:[%s210 + $0x268] sm:$0xf] %vm3885, %v3527
        %4041 = vst.msk [vmem:[%s210 + $0x26c] sm:$0xf] %vm3885, %v3528
        %4042 = vst.msk [vmem:[%s210 + $0x270] sm:$0xf] %vm3885, %v3529
        %4043 = vst.msk [vmem:[%s210 + $0x274] sm:$0xf] %vm3885, %v3530
        %4044 = vst.msk [vmem:[%s210 + $0x278] sm:$0xf] %vm3885, %v3531
        %4045 = vst.msk [vmem:[%s210 + $0x27c] sm:$0xf] %vm3885, %v3532
        %4046 = vst.msk [vmem:[%s210 + $0x280] sm:$0xf] %vm3885, %v3533
        %4047 = vst.msk [vmem:[%s210 + $0x284] sm:$0xf] %vm3885, %v3534
        %4048 = vst.msk [vmem:[%s210 + $0x288] sm:$0xf] %vm3885, %v3535
        %4049 = vst.msk [vmem:[%s210 + $0x28c] sm:$0xf] %vm3885, %v3536
        %4050 = vst.msk [vmem:[%s210 + $0x290] sm:$0xf] %vm3885, %v3537
        %4051 = vst.msk [vmem:[%s210 + $0x294] sm:$0xf] %vm3885, %v3538
        %4052 = vst.msk [vmem:[%s210 + $0x298] sm:$0xf] %vm3885, %v3539
        %4053 = vst.msk [vmem:[%s210 + $0x29c] sm:$0xf] %vm3885, %v3540
        %4054 = vst.msk [vmem:[%s210 + $0x2a0] sm:$0xf] %vm3885, %v3541
        %4055 = vst.msk [vmem:[%s210 + $0x2a4] sm:$0xf] %vm3885, %v3542
        %4056 = vst.msk [vmem:[%s210 + $0x2a8] sm:$0xf] %vm3885, %v3543
        %4057 = vst.msk [vmem:[%s210 + $0x2ac] sm:$0xf] %vm3885, %v3544
        %4058 = vst.msk [vmem:[%s210 + $0x2b0] sm:$0xf] %vm3885, %v3545
        %4059 = vst.msk [vmem:[%s210 + $0x2b4] sm:$0xf] %vm3885, %v3546
        %4060 = vst.msk [vmem:[%s210 + $0x2b8] sm:$0xf] %vm3885, %v3547
        %4061 = vst.msk [vmem:[%s210 + $0x2bc] sm:$0xf] %vm3885, %v3548
        %4062 = vst.msk [vmem:[%s210 + $0x2c0] sm:$0xf] %vm3885, %v3549
        %4063 = vst.msk [vmem:[%s210 + $0x2c4] sm:$0xf] %vm3885, %v3550
        %4064 = vst.msk [vmem:[%s210 + $0x2c8] sm:$0xf] %vm3885, %v3551
        %4065 = vst.msk [vmem:[%s210 + $0x2cc] sm:$0xf] %vm3885, %v3552
        %4066 = vst.msk [vmem:[%s210 + $0x2d0] sm:$0xf] %vm3885, %v3553
        %4067 = vst.msk [vmem:[%s210 + $0x2d4] sm:$0xf] %vm3885, %v3554
        %4068 = vst.msk [vmem:[%s210 + $0x2d8] sm:$0xf] %vm3885, %v3555
        %4069 = vst.msk [vmem:[%s210 + $0x2dc] sm:$0xf] %vm3885, %v3556
        %4070 = vst.msk [vmem:[%s210 + $0x2e0] sm:$0xf] %vm3885, %v3557
        %4071 = vst.msk [vmem:[%s210 + $0x2e4] sm:$0xf] %vm3885, %v3558
        %4072 = vst.msk [vmem:[%s210 + $0x2e8] sm:$0xf] %vm3885, %v3559
        %4073 = vst.msk [vmem:[%s210 + $0x2ec] sm:$0xf] %vm3885, %v3560
        %4074 = vst.msk [vmem:[%s210 + $0x2f0] sm:$0xf] %vm3885, %v3561
        %4075 = vst.msk [vmem:[%s210 + $0x2f4] sm:$0xf] %vm3885, %v3562
        %4076 = vst.msk [vmem:[%s210 + $0x2f8] sm:$0xf] %vm3885, %v3563
        %4077 = vst.msk [vmem:[%s210 + $0x2fc] sm:$0xf] %vm3885, %v3564
        %4078 = vst.msk [vmem:[%s210 + $0x300] sm:$0xf] %vm3885, %v3565
        %4079 = vst.msk [vmem:[%s210 + $0x304] sm:$0xf] %vm3885, %v3566
        %4080 = vst.msk [vmem:[%s210 + $0x308] sm:$0xf] %vm3885, %v3567
        %4081 = vst.msk [vmem:[%s210 + $0x30c] sm:$0xf] %vm3885, %v3568
        %4082 = vst.msk [vmem:[%s210 + $0x310] sm:$0xf] %vm3885, %v3569
        %4083 = vst.msk [vmem:[%s210 + $0x314] sm:$0xf] %vm3885, %v3570
        %4084 = vst.msk [vmem:[%s210 + $0x318] sm:$0xf] %vm3885, %v3571
        %4085 = vst.msk [vmem:[%s210 + $0x31c] sm:$0xf] %vm3885, %v3572
        %4086 = vst.msk [vmem:[%s210 + $0x320] sm:$0xf] %vm3885, %v3573
        %4087 = vst.msk [vmem:[%s210 + $0x324] sm:$0xf] %vm3885, %v3574
        %4088 = vst.msk [vmem:[%s210 + $0x328] sm:$0xf] %vm3885, %v3575
        %4089 = vst.msk [vmem:[%s210 + $0x32c] sm:$0xf] %vm3885, %v3576
        %4090 = vst.msk [vmem:[%s210 + $0x330] sm:$0xf] %vm3885, %v3577
        %4091 = vst.msk [vmem:[%s210 + $0x334] sm:$0xf] %vm3885, %v3578
        %4092 = vst.msk [vmem:[%s210 + $0x338] sm:$0xf] %vm3885, %v3579
        %4093 = vst.msk [vmem:[%s210 + $0x33c] sm:$0xf] %vm3885, %v3580
        %4094 = vst.msk [vmem:[%s210 + $0x340] sm:$0xf] %vm3885, %v3581
        %4095 = vst.msk [vmem:[%s210 + $0x344] sm:$0xf] %vm3885, %v3582
        %4096 = vst.msk [vmem:[%s210 + $0x348] sm:$0xf] %vm3885, %v3583
        %4097 = vst.msk [vmem:[%s210 + $0x34c] sm:$0xf] %vm3885, %v3584
        %4098 = vst.msk [vmem:[%s210 + $0x350] sm:$0xf] %vm3885, %v3585
        %4099 = vst.msk [vmem:[%s210 + $0x354] sm:$0xf] %vm3885, %v3586
        %4100 = vst.msk [vmem:[%s210 + $0x358] sm:$0xf] %vm3885, %v3587
        %4101 = vst.msk [vmem:[%s210 + $0x35c] sm:$0xf] %vm3885, %v3588
        %4102 = vst.msk [vmem:[%s210 + $0x360] sm:$0xf] %vm3885, %v3589
        %4103 = vst.msk [vmem:[%s210 + $0x364] sm:$0xf] %vm3885, %v3590
        %4104 = vst.msk [vmem:[%s210 + $0x368] sm:$0xf] %vm3885, %v3591
        %4105 = vst.msk [vmem:[%s210 + $0x36c] sm:$0xf] %vm3885, %v3592
        %4106 = vst.msk [vmem:[%s210 + $0x370] sm:$0xf] %vm3885, %v3593
        %4107 = vst.msk [vmem:[%s210 + $0x374] sm:$0xf] %vm3885, %v3594
        %4108 = vst.msk [vmem:[%s210 + $0x378] sm:$0xf] %vm3885, %v3595
        %4109 = vst.msk [vmem:[%s210 + $0x37c] sm:$0xf] %vm3885, %v3596
        %4110 = vst.msk [vmem:[%s210 + $0x380] sm:$0xf] %vm3885, %v3597
        %4111 = vst.msk [vmem:[%s210 + $0x384] sm:$0xf] %vm3885, %v3598
        %4112 = vst.msk [vmem:[%s210 + $0x388] sm:$0xf] %vm3885, %v3599
        %4113 = vst.msk [vmem:[%s210 + $0x38c] sm:$0xf] %vm3885, %v3600
        %4114 = vst.msk [vmem:[%s210 + $0x390] sm:$0xf] %vm3885, %v3601
        %4115 = vst.msk [vmem:[%s210 + $0x394] sm:$0xf] %vm3885, %v3602
        %4116 = vst.msk [vmem:[%s210 + $0x398] sm:$0xf] %vm3885, %v3603
        %4117 = vst.msk [vmem:[%s210 + $0x39c] sm:$0xf] %vm3885, %v3604
        %4118 = vst.msk [vmem:[%s210 + $0x3a0] sm:$0xf] %vm3885, %v3605
        %4119 = vst.msk [vmem:[%s210 + $0x3a4] sm:$0xf] %vm3885, %v3606
        %4120 = vst.msk [vmem:[%s210 + $0x3a8] sm:$0xf] %vm3885, %v3607
        %4121 = vst.msk [vmem:[%s210 + $0x3ac] sm:$0xf] %vm3885, %v3608
        %4122 = vst.msk [vmem:[%s210 + $0x3b0] sm:$0xf] %vm3885, %v3609
        %4123 = vst.msk [vmem:[%s210 + $0x3b4] sm:$0xf] %vm3885, %v3610
        %4124 = vst.msk [vmem:[%s210 + $0x3b8] sm:$0xf] %vm3885, %v3611
        %4125 = vst.msk [vmem:[%s210 + $0x3bc] sm:$0xf] %vm3885, %v3612
        %4126 = vst.msk [vmem:[%s210 + $0x3c0] sm:$0xf] %vm3885, %v3613
        %4127 = vst.msk [vmem:[%s210 + $0x3c4] sm:$0xf] %vm3885, %v3614
        %4128 = vst.msk [vmem:[%s210 + $0x3c8] sm:$0xf] %vm3885, %v3615
        %4129 = vst.msk [vmem:[%s210 + $0x3cc] sm:$0xf] %vm3885, %v3616
        %4130 = vst.msk [vmem:[%s210 + $0x3d0] sm:$0xf] %vm3885, %v3617
        %4131 = vst.msk [vmem:[%s210 + $0x3d4] sm:$0xf] %vm3885, %v3618
        %4132 = vst.msk [vmem:[%s210 + $0x3d8] sm:$0xf] %vm3885, %v3619
        %4133 = vst.msk [vmem:[%s210 + $0x3dc] sm:$0xf] %vm3885, %v3620
        %4134 = vst.msk [vmem:[%s210 + $0x3e0] sm:$0xf] %vm3885, %v3621
        %4135 = vst.msk [vmem:[%s210 + $0x3e4] sm:$0xf] %vm3885, %v3622
        %4136 = vst.msk [vmem:[%s210 + $0x3e8] sm:$0xf] %vm3885, %v3623
        %4137 = vst.msk [vmem:[%s210 + $0x3ec] sm:$0xf] %vm3885, %v3624
        %4138 = vst.msk [vmem:[%s210 + $0x3f0] sm:$0xf] %vm3885, %v3625
        %4139 = vst.msk [vmem:[%s210 + $0x3f4] sm:$0xf] %vm3885, %v3626
        %4140 = vst.msk [vmem:[%s210 + $0x3f8] sm:$0xf] %vm3885, %v3627
        %4141 = vst.msk [vmem:[%s210 + $0x3fc] sm:$0xf] %vm3885, %v3628
        %s4142 = sand.u32 %s114, 1
        %s4143 = sand.u32 %s114, 1
        %s4144 = smul.addr %s4143, 1024
        %s4145 = scalar_lea.vmem [#allocation2], %s4144
        // Predicated region
        $region33: #{fused_matmul.1} parent=31 // pred_check
          %p4146 = pneg %p124
        $region34: #{fused_matmul.1} parent=31 // pred_check_branch
          %4148 = sbr.rel (%p4146) target = $region36
        $region35: #{fused_matmul.1} parent=31 // pred_region
          %s4149 = smul.u32 256, %s18
          %s4150 = ssub.s32 5551, %s4149
          %p4151 = scmp.lt.s32.totalorder %s4150, 256
          %s4152 = scalar_select %p4151, %s4150, 256
          %s4153 = smul.u32 64, %s4152
          %p4154 = scmp.ne.s32.totalorder 0, %s4153
          %s4155 = sadd.s32 %s19, %s4149
          %s4156 = smul.addr %s4155, 4
          %s4157 = scalar_lea.vmem %s3, %s4156
          // Predicated region
          $region37: #{fused_matmul.1} parent=35 // pred_check
            %p4158 = pneg %p4154
          $region38: #{fused_matmul.1} parent=35 // pred_check_branch
            %4160 = sbr.rel (%p4158) target = $region40
          $region39: #{fused_matmul.1} parent=35 // pred_region
            // Predicated region
            $region41: #{fused_matmul.1} parent=39 // pred_check
              _
            $region42: #{fused_matmul.1} parent=39 // pred_check_branch
              %4162 = sbr.rel target = $region44
            $region43: #{fused_matmul.1} parent=39 // pred_region
              // Predicated region
              $region63: #{fused_matmul.1} parent=43 // pred_check
                _
              $region64: #{fused_matmul.1} parent=43 // pred_check_branch
                %4337 = sbr.rel (0) target = $region66
              $region65: #{fused_matmul.1} parent=43 // pred_region
                %s4339 = sshrl.u32 %s4152, 6
                // While loop
                $region67: #{fused_matmul.1} parent=65 // loop_pre_header
                  _
                $region68: #{fused_matmul.1} parent=65 // loop_header
                  %s4341 = sphi 0, %s4343
                  %p4342 = scmp.ge.s32.totalorder %s4341, %s4339
                  %s4346 = sphi 0, %s4479
                  %s4347 = sphi %s4145, %s4482
                  %s4348 = sphi %s4157, %s4483
                $region69: #{fused_matmul.1} parent=65 // loop_header_branch
                  %4345 = sbr.rel (%p4342) target = $region73
                $region70: #{fused_matmul.1} parent=65 // loop_body
                  %v4349 = vld [vmem:[%s4347] sm:$0xf]
                  %4350 = vst [vmem:[%s4348] sm:$0xf] %v4349
                  %v4351 = vld [vmem:[%s4347 + $0x4] sm:$0xf]
                  %4352 = vst [vmem:[%s4348 + $0x4] sm:$0xf] %v4351
                  %v4353 = vld [vmem:[%s4347 + $0x8] sm:$0xf]
                  %4354 = vst [vmem:[%s4348 + $0x8] sm:$0xf] %v4353
                  %v4355 = vld [vmem:[%s4347 + $0xc] sm:$0xf]
                  %4356 = vst [vmem:[%s4348 + $0xc] sm:$0xf] %v4355
                  %v4357 = vld [vmem:[%s4347 + $0x10] sm:$0xf]
                  %4358 = vst [vmem:[%s4348 + $0x10] sm:$0xf] %v4357
                  %v4359 = vld [vmem:[%s4347 + $0x14] sm:$0xf]
                  %4360 = vst [vmem:[%s4348 + $0x14] sm:$0xf] %v4359
                  %v4361 = vld [vmem:[%s4347 + $0x18] sm:$0xf]
                  %4362 = vst [vmem:[%s4348 + $0x18] sm:$0xf] %v4361
                  %v4363 = vld [vmem:[%s4347 + $0x1c] sm:$0xf]
                  %4364 = vst [vmem:[%s4348 + $0x1c] sm:$0xf] %v4363
                  %v4365 = vld [vmem:[%s4347 + $0x20] sm:$0xf]
                  %4366 = vst [vmem:[%s4348 + $0x20] sm:$0xf] %v4365
                  %v4367 = vld [vmem:[%s4347 + $0x24] sm:$0xf]
                  %4368 = vst [vmem:[%s4348 + $0x24] sm:$0xf] %v4367
                  %v4369 = vld [vmem:[%s4347 + $0x28] sm:$0xf]
                  %4370 = vst [vmem:[%s4348 + $0x28] sm:$0xf] %v4369
                  %v4371 = vld [vmem:[%s4347 + $0x2c] sm:$0xf]
                  %4372 = vst [vmem:[%s4348 + $0x2c] sm:$0xf] %v4371
                  %v4373 = vld [vmem:[%s4347 + $0x30] sm:$0xf]
                  %4374 = vst [vmem:[%s4348 + $0x30] sm:$0xf] %v4373
                  %v4375 = vld [vmem:[%s4347 + $0x34] sm:$0xf]
                  %4376 = vst [vmem:[%s4348 + $0x34] sm:$0xf] %v4375
                  %v4377 = vld [vmem:[%s4347 + $0x38] sm:$0xf]
                  %4378 = vst [vmem:[%s4348 + $0x38] sm:$0xf] %v4377
                  %v4379 = vld [vmem:[%s4347 + $0x3c] sm:$0xf]
                  %4380 = vst [vmem:[%s4348 + $0x3c] sm:$0xf] %v4379
                  %v4381 = vld [vmem:[%s4347 + $0x40] sm:$0xf]
                  %4382 = vst [vmem:[%s4348 + $0x40] sm:$0xf] %v4381
                  %v4383 = vld [vmem:[%s4347 + $0x44] sm:$0xf]
                  %4384 = vst [vmem:[%s4348 + $0x44] sm:$0xf] %v4383
                  %v4385 = vld [vmem:[%s4347 + $0x48] sm:$0xf]
                  %4386 = vst [vmem:[%s4348 + $0x48] sm:$0xf] %v4385
                  %v4387 = vld [vmem:[%s4347 + $0x4c] sm:$0xf]
                  %4388 = vst [vmem:[%s4348 + $0x4c] sm:$0xf] %v4387
                  %v4389 = vld [vmem:[%s4347 + $0x50] sm:$0xf]
                  %4390 = vst [vmem:[%s4348 + $0x50] sm:$0xf] %v4389
                  %v4391 = vld [vmem:[%s4347 + $0x54] sm:$0xf]
                  %4392 = vst [vmem:[%s4348 + $0x54] sm:$0xf] %v4391
                  %v4393 = vld [vmem:[%s4347 + $0x58] sm:$0xf]
                  %4394 = vst [vmem:[%s4348 + $0x58] sm:$0xf] %v4393
                  %v4395 = vld [vmem:[%s4347 + $0x5c] sm:$0xf]
                  %4396 = vst [vmem:[%s4348 + $0x5c] sm:$0xf] %v4395
                  %v4397 = vld [vmem:[%s4347 + $0x60] sm:$0xf]
                  %4398 = vst [vmem:[%s4348 + $0x60] sm:$0xf] %v4397
                  %v4399 = vld [vmem:[%s4347 + $0x64] sm:$0xf]
                  %4400 = vst [vmem:[%s4348 + $0x64] sm:$0xf] %v4399
                  %v4401 = vld [vmem:[%s4347 + $0x68] sm:$0xf]
                  %4402 = vst [vmem:[%s4348 + $0x68] sm:$0xf] %v4401
                  %v4403 = vld [vmem:[%s4347 + $0x6c] sm:$0xf]
                  %4404 = vst [vmem:[%s4348 + $0x6c] sm:$0xf] %v4403
                  %v4405 = vld [vmem:[%s4347 + $0x70] sm:$0xf]
                  %4406 = vst [vmem:[%s4348 + $0x70] sm:$0xf] %v4405
                  %v4407 = vld [vmem:[%s4347 + $0x74] sm:$0xf]
                  %4408 = vst [vmem:[%s4348 + $0x74] sm:$0xf] %v4407
                  %v4409 = vld [vmem:[%s4347 + $0x78] sm:$0xf]
                  %4410 = vst [vmem:[%s4348 + $0x78] sm:$0xf] %v4409
                  %v4411 = vld [vmem:[%s4347 + $0x7c] sm:$0xf]
                  %4412 = vst [vmem:[%s4348 + $0x7c] sm:$0xf] %v4411
                  %v4413 = vld [vmem:[%s4347 + $0x80] sm:$0xf]
                  %4414 = vst [vmem:[%s4348 + $0x80] sm:$0xf] %v4413
                  %v4415 = vld [vmem:[%s4347 + $0x84] sm:$0xf]
                  %4416 = vst [vmem:[%s4348 + $0x84] sm:$0xf] %v4415
                  %v4417 = vld [vmem:[%s4347 + $0x88] sm:$0xf]
                  %4418 = vst [vmem:[%s4348 + $0x88] sm:$0xf] %v4417
                  %v4419 = vld [vmem:[%s4347 + $0x8c] sm:$0xf]
                  %4420 = vst [vmem:[%s4348 + $0x8c] sm:$0xf] %v4419
                  %v4421 = vld [vmem:[%s4347 + $0x90] sm:$0xf]
                  %4422 = vst [vmem:[%s4348 + $0x90] sm:$0xf] %v4421
                  %v4423 = vld [vmem:[%s4347 + $0x94] sm:$0xf]
                  %4424 = vst [vmem:[%s4348 + $0x94] sm:$0xf] %v4423
                  %v4425 = vld [vmem:[%s4347 + $0x98] sm:$0xf]
                  %4426 = vst [vmem:[%s4348 + $0x98] sm:$0xf] %v4425
                  %v4427 = vld [vmem:[%s4347 + $0x9c] sm:$0xf]
                  %4428 = vst [vmem:[%s4348 + $0x9c] sm:$0xf] %v4427
                  %v4429 = vld [vmem:[%s4347 + $0xa0] sm:$0xf]
                  %4430 = vst [vmem:[%s4348 + $0xa0] sm:$0xf] %v4429
                  %v4431 = vld [vmem:[%s4347 + $0xa4] sm:$0xf]
                  %4432 = vst [vmem:[%s4348 + $0xa4] sm:$0xf] %v4431
                  %v4433 = vld [vmem:[%s4347 + $0xa8] sm:$0xf]
                  %4434 = vst [vmem:[%s4348 + $0xa8] sm:$0xf] %v4433
                  %v4435 = vld [vmem:[%s4347 + $0xac] sm:$0xf]
                  %4436 = vst [vmem:[%s4348 + $0xac] sm:$0xf] %v4435
                  %v4437 = vld [vmem:[%s4347 + $0xb0] sm:$0xf]
                  %4438 = vst [vmem:[%s4348 + $0xb0] sm:$0xf] %v4437
                  %v4439 = vld [vmem:[%s4347 + $0xb4] sm:$0xf]
                  %4440 = vst [vmem:[%s4348 + $0xb4] sm:$0xf] %v4439
                  %v4441 = vld [vmem:[%s4347 + $0xb8] sm:$0xf]
                  %4442 = vst [vmem:[%s4348 + $0xb8] sm:$0xf] %v4441
                  %v4443 = vld [vmem:[%s4347 + $0xbc] sm:$0xf]
                  %4444 = vst [vmem:[%s4348 + $0xbc] sm:$0xf] %v4443
                  %v4445 = vld [vmem:[%s4347 + $0xc0] sm:$0xf]
                  %4446 = vst [vmem:[%s4348 + $0xc0] sm:$0xf] %v4445
                  %v4447 = vld [vmem:[%s4347 + $0xc4] sm:$0xf]
                  %4448 = vst [vmem:[%s4348 + $0xc4] sm:$0xf] %v4447
                  %v4449 = vld [vmem:[%s4347 + $0xc8] sm:$0xf]
                  %4450 = vst [vmem:[%s4348 + $0xc8] sm:$0xf] %v4449
                  %v4451 = vld [vmem:[%s4347 + $0xcc] sm:$0xf]
                  %4452 = vst [vmem:[%s4348 + $0xcc] sm:$0xf] %v4451
                  %v4453 = vld [vmem:[%s4347 + $0xd0] sm:$0xf]
                  %4454 = vst [vmem:[%s4348 + $0xd0] sm:$0xf] %v4453
                  %v4455 = vld [vmem:[%s4347 + $0xd4] sm:$0xf]
                  %4456 = vst [vmem:[%s4348 + $0xd4] sm:$0xf] %v4455
                  %v4457 = vld [vmem:[%s4347 + $0xd8] sm:$0xf]
                  %4458 = vst [vmem:[%s4348 + $0xd8] sm:$0xf] %v4457
                  %v4459 = vld [vmem:[%s4347 + $0xdc] sm:$0xf]
                  %4460 = vst [vmem:[%s4348 + $0xdc] sm:$0xf] %v4459
                  %v4461 = vld [vmem:[%s4347 + $0xe0] sm:$0xf]
                  %4462 = vst [vmem:[%s4348 + $0xe0] sm:$0xf] %v4461
                  %v4463 = vld [vmem:[%s4347 + $0xe4] sm:$0xf]
                  %4464 = vst [vmem:[%s4348 + $0xe4] sm:$0xf] %v4463
                  %v4465 = vld [vmem:[%s4347 + $0xe8] sm:$0xf]
                  %4466 = vst [vmem:[%s4348 + $0xe8] sm:$0xf] %v4465
                  %v4467 = vld [vmem:[%s4347 + $0xec] sm:$0xf]
                  %4468 = vst [vmem:[%s4348 + $0xec] sm:$0xf] %v4467
                  %v4469 = vld [vmem:[%s4347 + $0xf0] sm:$0xf]
                  %4470 = vst [vmem:[%s4348 + $0xf0] sm:$0xf] %v4469
                  %v4471 = vld [vmem:[%s4347 + $0xf4] sm:$0xf]
                  %4472 = vst [vmem:[%s4348 + $0xf4] sm:$0xf] %v4471
                  %v4473 = vld [vmem:[%s4347 + $0xf8] sm:$0xf]
                  %4474 = vst [vmem:[%s4348 + $0xf8] sm:$0xf] %v4473
                  %v4475 = vld [vmem:[%s4347 + $0xfc] sm:$0xf]
                  %4476 = vst [vmem:[%s4348 + $0xfc] sm:$0xf] %v4475
                  %s4477 = sadd.s32 1, %s4346
                  %p4478 = scmp.ge.s32.totalorder %s4477, %s4339
                  %s4479 = scalar_select %p4478, 0, %s4477
                  %s4480 = smul.u32 %s4479, 256
                  %s4481 = smul.u32 %s4479, 256
                  %s4482 = scalar_lea.vmem %s4145, %s4480 [#allocation2]
                  %s4483 = scalar_lea.vmem %s4157, %s4481
                $region71: #{fused_matmul.1} parent=65 // loop_footer
                  %s4343 = sadd.s32 %s4341, 1
                $region72: #{fused_matmul.1} parent=65 // loop_footer_branch
                  %4340 = sbr.rel target = $region68
                $region73: #{fused_matmul.1} parent=65 // loop_exit
                  _
                %s4484 = sshrl.u32 %s4152, 6
                %s4485 = sand.u32 %s4152, 63
                %s4486 = smul.u32 %s4484, 64
                %s4487 = smul.u32 4, %s4486
                %s4488 = scalar_lea.vmem %s4145, %s4487 [#allocation2]
                %s4489 = smul.u32 4, %s4486
                %s4490 = scalar_lea.vmem %s4157, %s4489
                // While loop
                $region74: #{fused_matmul.1} parent=65 // loop_pre_header
                  _
                $region75: #{fused_matmul.1} parent=65 // loop_header
                  %s4492 = sphi 0, %s4494
                  %p4493 = scmp.ge.s32.totalorder %s4492, %s4485
                  %s4497 = sphi 0, %s4504
                  %s4498 = sphi %s4488, %s4507
                  %s4499 = sphi %s4490, %s4508
                $region76: #{fused_matmul.1} parent=65 // loop_header_branch
                  %4496 = sbr.rel (%p4493) target = $region80
                $region77: #{fused_matmul.1} parent=65 // loop_body
                  %v4500 = vld [vmem:[%s4498] sm:$0xf]
                  %4501 = vst [vmem:[%s4499] sm:$0xf] %v4500
                  %s4502 = sadd.s32 1, %s4497
                  %p4503 = scmp.ge.s32.totalorder %s4502, %s4485
                  %s4504 = scalar_select %p4503, 0, %s4502
                  %s4505 = smul.u32 %s4504, 4
                  %s4506 = smul.u32 %s4504, 4
                  %s4507 = scalar_lea.vmem %s4488, %s4505 [#allocation2]
                  %s4508 = scalar_lea.vmem %s4490, %s4506
                $region78: #{fused_matmul.1} parent=65 // loop_footer
                  %s4494 = sadd.s32 %s4492, 1
                $region79: #{fused_matmul.1} parent=65 // loop_footer_branch
                  %4491 = sbr.rel target = $region75
                $region80: #{fused_matmul.1} parent=65 // loop_exit
                  _
              $region66: #{fused_matmul.1} parent=43 // pred_fallthru
                _
            $region44: #{fused_matmul.1} parent=39 // pred_fallthru
              _
            // Predicated region
            $region45: #{fused_matmul.1} parent=39 // pred_check
              _
            $region46: #{fused_matmul.1} parent=39 // pred_check_branch
              %4164 = sbr.rel (0) target = $region48
            $region47: #{fused_matmul.1} parent=39 // pred_region
              %s4166 = sshrl.u32 %s4152, 6
              // While loop
              $region49: #{fused_matmul.1} parent=47 // loop_pre_header
                _
              $region50: #{fused_matmul.1} parent=47 // loop_header
                %s4168 = sphi 0, %s4170
                %p4169 = scmp.ge.s32.totalorder %s4168, %s4166
                %s4173 = sphi 0, %s4306
                %s4174 = sphi %s4145, %s4309
                %s4175 = sphi %s4157, %s4310
              $region51: #{fused_matmul.1} parent=47 // loop_header_branch
                %4172 = sbr.rel (%p4169) target = $region55
              $region52: #{fused_matmul.1} parent=47 // loop_body
                %v4176 = vld [vmem:[%s4174] sm:$0xf]
                %4177 = vst [vmem:[%s4175] sm:$0xf] %v4176
                %v4178 = vld [vmem:[%s4174 + $0x4] sm:$0xf]
                %4179 = vst [vmem:[%s4175 + $0x4] sm:$0xf] %v4178
                %v4180 = vld [vmem:[%s4174 + $0x8] sm:$0xf]
                %4181 = vst [vmem:[%s4175 + $0x8] sm:$0xf] %v4180
                %v4182 = vld [vmem:[%s4174 + $0xc] sm:$0xf]
                %4183 = vst [vmem:[%s4175 + $0xc] sm:$0xf] %v4182
                %v4184 = vld [vmem:[%s4174 + $0x10] sm:$0xf]
                %4185 = vst [vmem:[%s4175 + $0x10] sm:$0xf] %v4184
                %v4186 = vld [vmem:[%s4174 + $0x14] sm:$0xf]
                %4187 = vst [vmem:[%s4175 + $0x14] sm:$0xf] %v4186
                %v4188 = vld [vmem:[%s4174 + $0x18] sm:$0xf]
                %4189 = vst [vmem:[%s4175 + $0x18] sm:$0xf] %v4188
                %v4190 = vld [vmem:[%s4174 + $0x1c] sm:$0xf]
                %4191 = vst [vmem:[%s4175 + $0x1c] sm:$0xf] %v4190
                %v4192 = vld [vmem:[%s4174 + $0x20] sm:$0xf]
                %4193 = vst [vmem:[%s4175 + $0x20] sm:$0xf] %v4192
                %v4194 = vld [vmem:[%s4174 + $0x24] sm:$0xf]
                %4195 = vst [vmem:[%s4175 + $0x24] sm:$0xf] %v4194
                %v4196 = vld [vmem:[%s4174 + $0x28] sm:$0xf]
                %4197 = vst [vmem:[%s4175 + $0x28] sm:$0xf] %v4196
                %v4198 = vld [vmem:[%s4174 + $0x2c] sm:$0xf]
                %4199 = vst [vmem:[%s4175 + $0x2c] sm:$0xf] %v4198
                %v4200 = vld [vmem:[%s4174 + $0x30] sm:$0xf]
                %4201 = vst [vmem:[%s4175 + $0x30] sm:$0xf] %v4200
                %v4202 = vld [vmem:[%s4174 + $0x34] sm:$0xf]
                %4203 = vst [vmem:[%s4175 + $0x34] sm:$0xf] %v4202
                %v4204 = vld [vmem:[%s4174 + $0x38] sm:$0xf]
                %4205 = vst [vmem:[%s4175 + $0x38] sm:$0xf] %v4204
                %v4206 = vld [vmem:[%s4174 + $0x3c] sm:$0xf]
                %4207 = vst [vmem:[%s4175 + $0x3c] sm:$0xf] %v4206
                %v4208 = vld [vmem:[%s4174 + $0x40] sm:$0xf]
                %4209 = vst [vmem:[%s4175 + $0x40] sm:$0xf] %v4208
                %v4210 = vld [vmem:[%s4174 + $0x44] sm:$0xf]
                %4211 = vst [vmem:[%s4175 + $0x44] sm:$0xf] %v4210
                %v4212 = vld [vmem:[%s4174 + $0x48] sm:$0xf]
                %4213 = vst [vmem:[%s4175 + $0x48] sm:$0xf] %v4212
                %v4214 = vld [vmem:[%s4174 + $0x4c] sm:$0xf]
                %4215 = vst [vmem:[%s4175 + $0x4c] sm:$0xf] %v4214
                %v4216 = vld [vmem:[%s4174 + $0x50] sm:$0xf]
                %4217 = vst [vmem:[%s4175 + $0x50] sm:$0xf] %v4216
                %v4218 = vld [vmem:[%s4174 + $0x54] sm:$0xf]
                %4219 = vst [vmem:[%s4175 + $0x54] sm:$0xf] %v4218
                %v4220 = vld [vmem:[%s4174 + $0x58] sm:$0xf]
                %4221 = vst [vmem:[%s4175 + $0x58] sm:$0xf] %v4220
                %v4222 = vld [vmem:[%s4174 + $0x5c] sm:$0xf]
                %4223 = vst [vmem:[%s4175 + $0x5c] sm:$0xf] %v4222
                %v4224 = vld [vmem:[%s4174 + $0x60] sm:$0xf]
                %4225 = vst [vmem:[%s4175 + $0x60] sm:$0xf] %v4224
                %v4226 = vld [vmem:[%s4174 + $0x64] sm:$0xf]
                %4227 = vst [vmem:[%s4175 + $0x64] sm:$0xf] %v4226
                %v4228 = vld [vmem:[%s4174 + $0x68] sm:$0xf]
                %4229 = vst [vmem:[%s4175 + $0x68] sm:$0xf] %v4228
                %v4230 = vld [vmem:[%s4174 + $0x6c] sm:$0xf]
                %4231 = vst [vmem:[%s4175 + $0x6c] sm:$0xf] %v4230
                %v4232 = vld [vmem:[%s4174 + $0x70] sm:$0xf]
                %4233 = vst [vmem:[%s4175 + $0x70] sm:$0xf] %v4232
                %v4234 = vld [vmem:[%s4174 + $0x74] sm:$0xf]
                %4235 = vst [vmem:[%s4175 + $0x74] sm:$0xf] %v4234
                %v4236 = vld [vmem:[%s4174 + $0x78] sm:$0xf]
                %4237 = vst [vmem:[%s4175 + $0x78] sm:$0xf] %v4236
                %v4238 = vld [vmem:[%s4174 + $0x7c] sm:$0xf]
                %4239 = vst [vmem:[%s4175 + $0x7c] sm:$0xf] %v4238
                %v4240 = vld [vmem:[%s4174 + $0x80] sm:$0xf]
                %4241 = vst [vmem:[%s4175 + $0x80] sm:$0xf] %v4240
                %v4242 = vld [vmem:[%s4174 + $0x84] sm:$0xf]
                %4243 = vst [vmem:[%s4175 + $0x84] sm:$0xf] %v4242
                %v4244 = vld [vmem:[%s4174 + $0x88] sm:$0xf]
                %4245 = vst [vmem:[%s4175 + $0x88] sm:$0xf] %v4244
                %v4246 = vld [vmem:[%s4174 + $0x8c] sm:$0xf]
                %4247 = vst [vmem:[%s4175 + $0x8c] sm:$0xf] %v4246
                %v4248 = vld [vmem:[%s4174 + $0x90] sm:$0xf]
                %4249 = vst [vmem:[%s4175 + $0x90] sm:$0xf] %v4248
                %v4250 = vld [vmem:[%s4174 + $0x94] sm:$0xf]
                %4251 = vst [vmem:[%s4175 + $0x94] sm:$0xf] %v4250
                %v4252 = vld [vmem:[%s4174 + $0x98] sm:$0xf]
                %4253 = vst [vmem:[%s4175 + $0x98] sm:$0xf] %v4252
                %v4254 = vld [vmem:[%s4174 + $0x9c] sm:$0xf]
                %4255 = vst [vmem:[%s4175 + $0x9c] sm:$0xf] %v4254
                %v4256 = vld [vmem:[%s4174 + $0xa0] sm:$0xf]
                %4257 = vst [vmem:[%s4175 + $0xa0] sm:$0xf] %v4256
                %v4258 = vld [vmem:[%s4174 + $0xa4] sm:$0xf]
                %4259 = vst [vmem:[%s4175 + $0xa4] sm:$0xf] %v4258
                %v4260 = vld [vmem:[%s4174 + $0xa8] sm:$0xf]
                %4261 = vst [vmem:[%s4175 + $0xa8] sm:$0xf] %v4260
                %v4262 = vld [vmem:[%s4174 + $0xac] sm:$0xf]
                %4263 = vst [vmem:[%s4175 + $0xac] sm:$0xf] %v4262
                %v4264 = vld [vmem:[%s4174 + $0xb0] sm:$0xf]
                %4265 = vst [vmem:[%s4175 + $0xb0] sm:$0xf] %v4264
                %v4266 = vld [vmem:[%s4174 + $0xb4] sm:$0xf]
                %4267 = vst [vmem:[%s4175 + $0xb4] sm:$0xf] %v4266
                %v4268 = vld [vmem:[%s4174 + $0xb8] sm:$0xf]
                %4269 = vst [vmem:[%s4175 + $0xb8] sm:$0xf] %v4268
                %v4270 = vld [vmem:[%s4174 + $0xbc] sm:$0xf]
                %4271 = vst [vmem:[%s4175 + $0xbc] sm:$0xf] %v4270
                %v4272 = vld [vmem:[%s4174 + $0xc0] sm:$0xf]
                %4273 = vst [vmem:[%s4175 + $0xc0] sm:$0xf] %v4272
                %v4274 = vld [vmem:[%s4174 + $0xc4] sm:$0xf]
                %4275 = vst [vmem:[%s4175 + $0xc4] sm:$0xf] %v4274
                %v4276 = vld [vmem:[%s4174 + $0xc8] sm:$0xf]
                %4277 = vst [vmem:[%s4175 + $0xc8] sm:$0xf] %v4276
                %v4278 = vld [vmem:[%s4174 + $0xcc] sm:$0xf]
                %4279 = vst [vmem:[%s4175 + $0xcc] sm:$0xf] %v4278
                %v4280 = vld [vmem:[%s4174 + $0xd0] sm:$0xf]
                %4281 = vst [vmem:[%s4175 + $0xd0] sm:$0xf] %v4280
                %v4282 = vld [vmem:[%s4174 + $0xd4] sm:$0xf]
                %4283 = vst [vmem:[%s4175 + $0xd4] sm:$0xf] %v4282
                %v4284 = vld [vmem:[%s4174 + $0xd8] sm:$0xf]
                %4285 = vst [vmem:[%s4175 + $0xd8] sm:$0xf] %v4284
                %v4286 = vld [vmem:[%s4174 + $0xdc] sm:$0xf]
                %4287 = vst [vmem:[%s4175 + $0xdc] sm:$0xf] %v4286
                %v4288 = vld [vmem:[%s4174 + $0xe0] sm:$0xf]
                %4289 = vst [vmem:[%s4175 + $0xe0] sm:$0xf] %v4288
                %v4290 = vld [vmem:[%s4174 + $0xe4] sm:$0xf]
                %4291 = vst [vmem:[%s4175 + $0xe4] sm:$0xf] %v4290
                %v4292 = vld [vmem:[%s4174 + $0xe8] sm:$0xf]
                %4293 = vst [vmem:[%s4175 + $0xe8] sm:$0xf] %v4292
                %v4294 = vld [vmem:[%s4174 + $0xec] sm:$0xf]
                %4295 = vst [vmem:[%s4175 + $0xec] sm:$0xf] %v4294
                %v4296 = vld [vmem:[%s4174 + $0xf0] sm:$0xf]
                %4297 = vst [vmem:[%s4175 + $0xf0] sm:$0xf] %v4296
                %v4298 = vld [vmem:[%s4174 + $0xf4] sm:$0xf]
                %4299 = vst [vmem:[%s4175 + $0xf4] sm:$0xf] %v4298
                %v4300 = vld [vmem:[%s4174 + $0xf8] sm:$0xf]
                %4301 = vst [vmem:[%s4175 + $0xf8] sm:$0xf] %v4300
                %v4302 = vld [vmem:[%s4174 + $0xfc] sm:$0xf]
                %4303 = vst [vmem:[%s4175 + $0xfc] sm:$0xf] %v4302
                %s4304 = sadd.s32 1, %s4173
                %p4305 = scmp.ge.s32.totalorder %s4304, %s4166
                %s4306 = scalar_select %p4305, 0, %s4304
                %s4307 = smul.u32 %s4306, 256
                %s4308 = smul.u32 %s4306, 256
                %s4309 = scalar_lea.vmem %s4145, %s4307 [#allocation2]
                %s4310 = scalar_lea.vmem %s4157, %s4308
              $region53: #{fused_matmul.1} parent=47 // loop_footer
                %s4170 = sadd.s32 %s4168, 1
              $region54: #{fused_matmul.1} parent=47 // loop_footer_branch
                %4167 = sbr.rel target = $region50
              $region55: #{fused_matmul.1} parent=47 // loop_exit
                _
              %s4311 = sshrl.u32 %s4152, 6
              %s4312 = sand.u32 %s4152, 63
              %s4313 = smul.u32 %s4311, 64
              %s4314 = smul.u32 4, %s4313
              %s4315 = scalar_lea.vmem %s4145, %s4314 [#allocation2]
              %s4316 = smul.u32 4, %s4313
              %s4317 = scalar_lea.vmem %s4157, %s4316
              // While loop
              $region56: #{fused_matmul.1} parent=47 // loop_pre_header
                _
              $region57: #{fused_matmul.1} parent=47 // loop_header
                %s4319 = sphi 0, %s4321
                %p4320 = scmp.ge.s32.totalorder %s4319, %s4312
                %s4324 = sphi 0, %s4331
                %s4325 = sphi %s4315, %s4334
                %s4326 = sphi %s4317, %s4335
              $region58: #{fused_matmul.1} parent=47 // loop_header_branch
                %4323 = sbr.rel (%p4320) target = $region62
              $region59: #{fused_matmul.1} parent=47 // loop_body
                %v4327 = vld [vmem:[%s4325] sm:$0xf]
                %4328 = vst [vmem:[%s4326] sm:$0xf] %v4327
                %s4329 = sadd.s32 1, %s4324
                %p4330 = scmp.ge.s32.totalorder %s4329, %s4312
                %s4331 = scalar_select %p4330, 0, %s4329
                %s4332 = smul.u32 %s4331, 4
                %s4333 = smul.u32 %s4331, 4
                %s4334 = scalar_lea.vmem %s4315, %s4332 [#allocation2]
                %s4335 = scalar_lea.vmem %s4317, %s4333
              $region60: #{fused_matmul.1} parent=47 // loop_footer
                %s4321 = sadd.s32 %s4319, 1
              $region61: #{fused_matmul.1} parent=47 // loop_footer_branch
                %4318 = sbr.rel target = $region57
              $region62: #{fused_matmul.1} parent=47 // loop_exit
                _
            $region48: #{fused_matmul.1} parent=39 // pred_fallthru
              _
          $region40: #{fused_matmul.1} parent=35 // pred_fallthru
            _
          %4509 = vnop
        $region36: #{fused_matmul.1} parent=31 // pred_fallthru
          _
      $region32: #{fused_matmul.1} parent=5 // pred_fallthru
        _
      %p4510 = scmp.le.s32.totalorder 2, %s9
      // Predicated region
      $region81: #{fused_matmul.1} parent=5 // pred_check
        %p4511 = pneg %p4510
      $region82: #{fused_matmul.1} parent=5 // pred_check_branch
        %4513 = sbr.rel (%p4511) target = $region84
      $region83: #{fused_matmul.1} parent=5 // pred_region
        %s4514 = ssub.s32 %s9, 2
        // Predicated region
        $region85: #{fused_matmul.1} parent=83 // pred_check
          %p4515 = pneg %p130
        $region86: #{fused_matmul.1} parent=83 // pred_check_branch
          %4517 = sbr.rel (%p4515) target = $region88
        $region87: #{fused_matmul.1} parent=83 // pred_region
          %s4518 = sand.u32 %s115, 1
          %s4519 = sand.u32 %s115, 1
          %s4520 = smul.addr %s4519, 1024
          %s4521 = scalar_lea.vmem [#allocation2], %s4520
        $region88: #{fused_matmul.1} parent=83 // pred_fallthru
          _
      $region84: #{fused_matmul.1} parent=5 // pred_fallthru
        _
    $region6: #{fused_matmul.1} parent=1 // loop_footer
      %s13 = sadd.s32 1, %s9
    $region7: #{fused_matmul.1} parent=1 // loop_footer_branch
      %8 = sbr.rel target = $region3
    $region8: #{fused_matmul.1} parent=1 // loop_exit
      _

</llo_original>
